<compile_context>
chip_gen: v6e
topology: v6e:2x2x1
jax: 0.10.0
libtpu: 0.0.40
codegen_flags: <defaults>
</compile_context>

<pallas_src>
import functools
import math

import jax
import jax.numpy as jnp
from jax import lax
from jax.experimental import pallas as pl
from jax.experimental.pallas import tpu as pltpu


_SQRT_HALF = 0.7071067811865476  # 1/sqrt(2), hoisted constant


def _gelu(x):
    # exact GELU (erf form) == torch.nn.functional.gelu default
    return x * 0.5 * (1.0 + lax.erf(x * _SQRT_HALF))


def _block_kernel(x_ref, w1_ref, b1_ref, w2_ref, b2_ref, w3_ref, b3_ref,
                  w4_ref, b4_ref, o_ref, *, H, W, down_rate, residual):
    HW = H * W
    Cout = w4_ref.shape[-1]

    x = x_ref[0].astype(jnp.float32)                      # (HW, Cin), channels on lanes

    def shift_rows(v, s):
        """result[r] = v[r + s] along the flattened spatial axis, zero-filled OOB."""
        if s == 0:
            return v
        z = jnp.zeros((abs(s), v.shape[1]), jnp.float32)
        if s > 0:
            return jnp.concatenate([v[s:, :], z], axis=0)
        return jnp.concatenate([z, v[:s, :]], axis=0)

    # Column-validity masks for the 3x3 taps (row OOB is handled by zero fill).
    col = lax.broadcasted_iota(jnp.int32, (HW, 1), 0) % W
    ok_left = col >= 1           # may read column j-1
    ok_right = col <= W - 2      # may read column j+1

    def conv3x3(h, w_ref, b_ref):
        # h: (HW, Cm), already gelu'ed.  w_ref: (9*Cm, Cm), rows ordered (tap, cin).
        # Build the im2col patch matrix and do a single K=9*Cm MXU matmul.
        cols = []
        for k in range(9):
            dy, dx = k // 3, k % 3
            win = shift_rows(h, (dy - 1) * W + (dx - 1))
            if dx == 0:
                win = jnp.where(ok_left, win, 0.0)
            elif dx == 2:
                win = jnp.where(ok_right, win, 0.0)
            cols.append(win)
        patches = jnp.concatenate(cols, axis=1)           # (HW, 9*Cm)
        return jnp.dot(patches, w_ref[...],
                       preferred_element_type=jnp.float32) + b_ref[...]

    # c1 -> c2 -> c3 -> c4
    h = jnp.dot(_gelu(x), w1_ref[...],
                preferred_element_type=jnp.float32) + b1_ref[...]
    h = conv3x3(_gelu(h), w2_ref, b2_ref)
    h = conv3x3(_gelu(h), w3_ref, b3_ref)
    h = jnp.dot(_gelu(h), w4_ref[...],
                preferred_element_type=jnp.float32) + b4_ref[...]

    if residual:
        h = h + x                                          # Cin == Cout asserted in wrapper

    if down_rate is None:
        o_ref[0] = h.astype(o_ref.dtype)
    else:
        # avg_pool(d, d) on the VPU: horizontal shift-adds, then regroup rows.
        d = down_rate
        Ho, Wo = H // d, W // d
        hh = h
        for b in range(1, d):
            hh = hh + shift_rows(h, b)                     # horizontal d-tap sums (valid at j % d == 0)
        h4 = hh.reshape(Ho, d, W, Cout)                    # (io, a, j, c) == hh[(io*d + a)*W + j, c]
        vs = h4[:, 0]
        for a in range(1, d):
            vs = vs + h4[:, a]                             # (Ho, W, Cout): full dxd sums at j % d == 0
        v4 = vs.reshape(Ho, Wo, d, Cout)                   # (io, jo, b, c) == vs[io, jo*d + b, c]
        pooled = v4[:, :, 0, :] * (1.0 / (d * d))          # (Ho, Wo, Cout)
        o_ref[0] = pooled.reshape(Ho * Wo, Cout).astype(o_ref.dtype)


def block_forward(x, params, *, down_rate=None, residual=False):
    """x: (B, H, W, Cin) float32, NHWC."""
    B, H, W, Cin = x.shape
    w1, b1, w2, b2, w3, b3, w4, b4 = params
    Cm, Cout = w1.shape[1], w4.shape[1]
    if residual and Cin != Cout:
        raise ValueError("residual connection requires in_width == out_width")
    d = 1 if down_rate is None else down_rate
    assert H % d == 0 and W % d == 0, (H, W, d)
    Ho, Wo = H // d, W // d

    # Flatten spatial dims (channels stay on lanes); pre-reshape 3x3 weights so
    # each 3x3 conv is a single (HW, 9*Cm) @ (9*Cm, Cm) matmul in the kernel.
    xf = x.reshape(B, H * W, Cin)
    w2r = w2.reshape(9 * Cm, Cm)
    w3r = w3.reshape(9 * Cm, Cm)

    kernel = functools.partial(_block_kernel, H=H, W=W,
                               down_rate=down_rate, residual=residual)

    def rep_spec(a):
        nd = a.ndim
        return pl.BlockSpec(a.shape, lambda b, _nd=nd: (0,) * _nd)

    out = pl.pallas_call(
        kernel,
        out_shape=jax.ShapeDtypeStruct((B, Ho * Wo, Cout), x.dtype),
        grid_spec=pltpu.PrefetchScalarGridSpec(
            num_scalar_prefetch=0,
            grid=(B,),
            in_specs=[
                pl.BlockSpec((1, H * W, Cin), lambda b: (b, 0, 0)),
                rep_spec(w1), rep_spec(b1),
                rep_spec(w2r), rep_spec(b2),
                rep_spec(w3r), rep_spec(b3),
                rep_spec(w4), rep_spec(b4),
            ],
            out_specs=pl.BlockSpec((1, Ho * Wo, Cout), lambda b: (b, 0, 0)),
        ),
        compiler_params=pltpu.CompilerParams(
            # batch images are independent -> shard across v7x's 2 TensorCores
            dimension_semantics=("parallel",)),
    )(xf, w1, b1, w2r, b2, w3r, b3, w4, b4)
    return out.reshape(B, Ho, Wo, Cout)


# ------------------------- pure-JAX reference ---------------------------------
def block_reference(x, params, *, down_rate=None, residual=False):
    w1, b1, w2, b2, w3, b3, w4, b4 = params

    def conv1x1(h, w, b):
        return jnp.einsum("bhwc,cd->bhwd", h, w) + b

    def conv3x3(h, w9, b):
        w = w9.reshape(3, 3, w9.shape[1], w9.shape[2])     # HWIO
        return lax.conv_general_dilated(
            h, w, (1, 1), ((1, 1), (1, 1)),
            dimension_numbers=("NHWC", "HWIO", "NHWC")) + b

    xh = conv1x1(_gelu(x), w1, b1)
    xh = conv3x3(_gelu(xh), w2, b2)
    xh = conv3x3(_gelu(xh), w3, b3)
    xh = conv1x1(_gelu(xh), w4, b4)
    out = x + xh if residual else xh
    if down_rate is not None:
        B, H, W, C = out.shape
        dd = down_rate
        out = out.reshape(B, H // dd, dd, W // dd, dd, C).mean(axis=(2, 4))
    return out


def init_params(key, in_width, middle_width, out_width, zero_last=False):
    ks = jax.random.split(key, 8)
    s1 = 1.0 / math.sqrt(in_width)
    s3 = 1.0 / math.sqrt(9 * middle_width)
    s4 = 1.0 / math.sqrt(middle_width)
    w1 = jax.random.normal(ks[0], (in_width, middle_width), jnp.float32) * s1
    b1 = jax.random.normal(ks[1], (1, middle_width), jnp.float32) * 0.01
    w2 = jax.random.normal(ks[2], (9, middle_width, middle_width), jnp.float32) * s3
    b2 = jax.random.normal(ks[3], (1, middle_width), jnp.float32) * 0.01
    w3 = jax.random.normal(ks[4], (9, middle_width, middle_width), jnp.float32) * s3
    b3 = jax.random.normal(ks[5], (1, middle_width), jnp.float32) * 0.01
    if zero_last:
        w4 = jnp.zeros((middle_width, out_width), jnp.float32)
        b4 = jnp.zeros((1, out_width), jnp.float32)
    else:
        w4 = jax.random.normal(ks[6], (middle_width, out_width), jnp.float32) * s4
        b4 = jax.random.normal(ks[7], (1, out_width), jnp.float32) * 0.01
    return (w1, b1, w2, b2, w3, b3, w4, b4)


if __name__ == "__main__":
    # Block(in_width=32, middle_width=16, out_width=32, down_rate=2,
    #       residual=True, use_3x3=True, zero_last=False)
    B, H, W = 2, 16, 16
    in_width, middle_width, out_width = 32, 16, 32

    key = jax.random.PRNGKey(0)
    kx, kp = jax.random.split(key)
    x = jax.random.normal(kx, (B, H, W, in_width), jnp.float32)   # NHWC
    params = init_params(kp, in_width, middle_width, out_width, zero_last=False)

    # Main config: residual bottleneck block with 2x2 average-pool downsampling.
    out = jax.block_until_ready(
        block_forward(x, params, down_rate=2, residual=True))
    ref = jax.block_until_ready(
        block_reference(x, params, down_rate=2, residual=True))
    assert out.shape == (B, H // 2, W // 2, out_width), out.shape
    assert jnp.allclose(out, ref, atol=2e-4, rtol=2e-4), float(
        jnp.max(jnp.abs(out - ref)))

    # Also exercise the no-downsampling path.
    out2 = jax.block_until_ready(
        block_forward(x, params, down_rate=None, residual=True))
    ref2 = jax.block_until_ready(
        block_reference(x, params, down_rate=None, residual=True))
    assert out2.shape == (B, H, W, out_width), out2.shape
    assert jnp.allclose(out2, ref2, atol=2e-4, rtol=2e-4), float(
        jnp.max(jnp.abs(out2 - ref2)))

    print("KERNEL_OK")
</pallas_src>

<mosaic_0001>
module attributes {stable_mosaic.version = 11 : i64} {
  func.func @_block_kernel(%arg0: i32, %arg1: memref<1x256x32xf32, #tpu.memory_space<vmem>>, %arg2: memref<32x16xf32, #tpu.memory_space<vmem>>, %arg3: memref<1x16xf32, #tpu.memory_space<vmem>>, %arg4: memref<144x16xf32, #tpu.memory_space<vmem>>, %arg5: memref<1x16xf32, #tpu.memory_space<vmem>>, %arg6: memref<144x16xf32, #tpu.memory_space<vmem>>, %arg7: memref<1x16xf32, #tpu.memory_space<vmem>>, %arg8: memref<16x32xf32, #tpu.memory_space<vmem>>, %arg9: memref<1x32xf32, #tpu.memory_space<vmem>>, %arg10: memref<1x64x32xf32, #tpu.memory_space<vmem>>) attributes {dimension_semantics = [#tpu.dimension_semantics<parallel>], iteration_bounds = array<i64: 2>, scalar_prefetch = 0 : i64, scratch_operands = 0 : i64, tpu.core_type = #tpu.core_type<tc>, window_params = [{transform_indices = @transform_0, window_bounds = array<i64: 1, 256, 32>}, {pipeline_mode = #tpu.pipeline_mode<synchronous>, transform_indices = @transform_1, window_bounds = array<i64: 32, 16>}, {pipeline_mode = #tpu.pipeline_mode<synchronous>, transform_indices = @transform_2, window_bounds = array<i64: 1, 16>}, {pipeline_mode = #tpu.pipeline_mode<synchronous>, transform_indices = @transform_3, window_bounds = array<i64: 144, 16>}, {pipeline_mode = #tpu.pipeline_mode<synchronous>, transform_indices = @transform_4, window_bounds = array<i64: 1, 16>}, {pipeline_mode = #tpu.pipeline_mode<synchronous>, transform_indices = @transform_5, window_bounds = array<i64: 144, 16>}, {pipeline_mode = #tpu.pipeline_mode<synchronous>, transform_indices = @transform_6, window_bounds = array<i64: 1, 16>}, {pipeline_mode = #tpu.pipeline_mode<synchronous>, transform_indices = @transform_7, window_bounds = array<i64: 16, 32>}, {pipeline_mode = #tpu.pipeline_mode<synchronous>, transform_indices = @transform_8, window_bounds = array<i64: 1, 32>}, {transform_indices = @transform_9, window_bounds = array<i64: 1, 64, 32>}]} {
    %c0 = arith.constant 0 : index
    %c0_0 = arith.constant 0 : index
    %c0_1 = arith.constant 0 : index
    %0 = vector.load %arg1[%c0, %c0_0, %c0_1] : memref<1x256x32xf32, #tpu.memory_space<vmem>>, vector<1x256x32xf32>
    %1 = vector.shape_cast %0 : vector<1x256x32xf32> to vector<256x32xf32>
    %2 = tpu.iota {dimensions = array<i32: 0>} : vector<256x1xi32>
    %c16_i32 = arith.constant 16 : i32
    %c0_i32 = arith.constant 0 : i32
    %3 = arith.cmpi eq, %c16_i32, %c0_i32 : i32
    %c1_i32 = arith.constant 1 : i32
    %4 = arith.select %3, %c1_i32, %c16_i32 : i32
    %5 = vector.broadcast %4 : i32 to vector<256x1xi32>
    %6 = arith.remsi %2, %5 : vector<256x1xi32>
    %c0_i32_2 = arith.constant 0 : i32
    %7 = vector.broadcast %c0_i32_2 : i32 to vector<256x1xi32>
    %8 = arith.cmpi ne, %6, %7 : vector<256x1xi32>
    %c0_i32_3 = arith.constant 0 : i32
    %9 = vector.broadcast %c0_i32_3 : i32 to vector<256x1xi32>
    %10 = arith.cmpi slt, %6, %9 : vector<256x1xi32>
    %c0_i32_4 = arith.constant 0 : i32
    %11 = arith.cmpi slt, %4, %c0_i32_4 : i32
    %12 = vector.broadcast %11 : i1 to vector<256x1xi1>
    %13 = vector.broadcast %12 : vector<256x1xi1> to vector<256x1xi1>
    %14 = arith.xori %10, %13 : vector<256x1xi1>
    %15 = arith.andi %14, %8 : vector<256x1xi1>
    %16 = vector.broadcast %4 : i32 to vector<256x1xi32>
    %17 = arith.addi %6, %16 : vector<256x1xi32>
    %18 = arith.select %15, %17, %6 : vector<256x1xi1>, vector<256x1xi32>
    %c1_i32_5 = arith.constant 1 : i32
    %19 = vector.broadcast %c1_i32_5 : i32 to vector<256x1xi32>
    %20 = arith.cmpi sge, %18, %19 : vector<256x1xi32>
    %c14_i32 = arith.constant 14 : i32
    %21 = vector.broadcast %c14_i32 : i32 to vector<256x1xi32>
    %22 = arith.cmpi sle, %18, %21 : vector<256x1xi32>
    %cst = arith.constant 5.000000e-01 : f32
    %23 = vector.broadcast %cst : f32 to vector<256x32xf32>
    %24 = arith.mulf %1, %23 : vector<256x32xf32>
    %cst_6 = arith.constant 0.707106769 : f32
    %25 = vector.broadcast %cst_6 : f32 to vector<256x32xf32>
    %26 = arith.mulf %1, %25 : vector<256x32xf32>
    %27 = math.erf %26 : vector<256x32xf32>
    %cst_7 = arith.constant 1.000000e+00 : f32
    %28 = vector.broadcast %cst_7 : f32 to vector<256x32xf32>
    %29 = arith.addf %28, %27 : vector<256x32xf32>
    %30 = arith.mulf %24, %29 : vector<256x32xf32>
    %c0_8 = arith.constant 0 : index
    %c0_9 = arith.constant 0 : index
    %31 = vector.load %arg2[%c0_8, %c0_9] : memref<32x16xf32, #tpu.memory_space<vmem>>, vector<32x16xf32>
    %cst_10 = arith.constant dense<0.000000e+00> : vector<256x16xf32>
    %32 = tpu.matmul %30, %31, %cst_10 {dimension_numbers = #tpu.dot_dimension_numbers<[1], [0], [0], [1], [0, 0, 1, 1], [], []>} : vector<256x32xf32>, vector<32x16xf32>, vector<256x16xf32> -> vector<256x16xf32>
    %c0_11 = arith.constant 0 : index
    %c0_12 = arith.constant 0 : index
    %33 = vector.load %arg3[%c0_11, %c0_12] : memref<1x16xf32, #tpu.memory_space<vmem>>, vector<1x16xf32>
    %34 = vector.broadcast %33 : vector<1x16xf32> to vector<256x16xf32>
    %35 = arith.addf %32, %34 : vector<256x16xf32>
    %cst_13 = arith.constant 5.000000e-01 : f32
    %36 = vector.broadcast %cst_13 : f32 to vector<256x16xf32>
    %37 = arith.mulf %35, %36 : vector<256x16xf32>
    %cst_14 = arith.constant 0.707106769 : f32
    %38 = vector.broadcast %cst_14 : f32 to vector<256x16xf32>
    %39 = arith.mulf %35, %38 : vector<256x16xf32>
    %40 = math.erf %39 : vector<256x16xf32>
    %cst_15 = arith.constant 1.000000e+00 : f32
    %41 = vector.broadcast %cst_15 : f32 to vector<256x16xf32>
    %42 = arith.addf %41, %40 : vector<256x16xf32>
    %43 = arith.mulf %37, %42 : vector<256x16xf32>
    %cst_16 = arith.constant 0.000000e+00 : f32
    %44 = vector.broadcast %cst_16 : f32 to vector<17x16xf32>
    %45 = vector.extract_strided_slice %43 {offsets = [0, 0], sizes = [239, 16], strides = [1, 1]} : vector<256x16xf32> to vector<239x16xf32>
    %46 = tpu.concatenate %44, %45 in 0 : vector<17x16xf32>, vector<239x16xf32> -> vector<256x16xf32>
    %cst_17 = arith.constant 0.000000e+00 : f32
    %47 = vector.shape_cast %20 : vector<256x1xi1> to vector<256x1xi1>
    %48 = vector.broadcast %47 : vector<256x1xi1> to vector<256x16xi1>
    %49 = vector.broadcast %cst_17 : f32 to vector<256x16xf32>
    %50 = arith.select %48, %46, %49 : vector<256x16xi1>, vector<256x16xf32>
    %cst_18 = arith.constant 0.000000e+00 : f32
    %51 = vector.broadcast %cst_18 : f32 to vector<16x16xf32>
    %52 = vector.extract_strided_slice %43 {offsets = [0, 0], sizes = [240, 16], strides = [1, 1]} : vector<256x16xf32> to vector<240x16xf32>
    %53 = tpu.concatenate %51, %52 in 0 : vector<16x16xf32>, vector<240x16xf32> -> vector<256x16xf32>
    %cst_19 = arith.constant 0.000000e+00 : f32
    %54 = vector.broadcast %cst_19 : f32 to vector<15x16xf32>
    %55 = vector.extract_strided_slice %43 {offsets = [0, 0], sizes = [241, 16], strides = [1, 1]} : vector<256x16xf32> to vector<241x16xf32>
    %56 = tpu.concatenate %54, %55 in 0 : vector<15x16xf32>, vector<241x16xf32> -> vector<256x16xf32>
    %cst_20 = arith.constant 0.000000e+00 : f32
    %57 = vector.shape_cast %22 : vector<256x1xi1> to vector<256x1xi1>
    %58 = vector.broadcast %57 : vector<256x1xi1> to vector<256x16xi1>
    %59 = vector.broadcast %cst_20 : f32 to vector<256x16xf32>
    %60 = arith.select %58, %56, %59 : vector<256x16xi1>, vector<256x16xf32>
    %cst_21 = arith.constant 0.000000e+00 : f32
    %61 = vector.broadcast %cst_21 : f32 to vector<1x16xf32>
    %62 = vector.extract_strided_slice %43 {offsets = [0, 0], sizes = [255, 16], strides = [1, 1]} : vector<256x16xf32> to vector<255x16xf32>
    %63 = tpu.concatenate %61, %62 in 0 : vector<1x16xf32>, vector<255x16xf32> -> vector<256x16xf32>
    %cst_22 = arith.constant 0.000000e+00 : f32
    %64 = vector.shape_cast %20 : vector<256x1xi1> to vector<256x1xi1>
    %65 = vector.broadcast %64 : vector<256x1xi1> to vector<256x16xi1>
    %66 = vector.broadcast %cst_22 : f32 to vector<256x16xf32>
    %67 = arith.select %65, %63, %66 : vector<256x16xi1>, vector<256x16xf32>
    %cst_23 = arith.constant 0.000000e+00 : f32
    %68 = vector.broadcast %cst_23 : f32 to vector<1x16xf32>
    %69 = vector.extract_strided_slice %43 {offsets = [1, 0], sizes = [255, 16], strides = [1, 1]} : vector<256x16xf32> to vector<255x16xf32>
    %70 = tpu.concatenate %69, %68 in 0 : vector<255x16xf32>, vector<1x16xf32> -> vector<256x16xf32>
    %cst_24 = arith.constant 0.000000e+00 : f32
    %71 = vector.shape_cast %22 : vector<256x1xi1> to vector<256x1xi1>
    %72 = vector.broadcast %71 : vector<256x1xi1> to vector<256x16xi1>
    %73 = vector.broadcast %cst_24 : f32 to vector<256x16xf32>
    %74 = arith.select %72, %70, %73 : vector<256x16xi1>, vector<256x16xf32>
    %cst_25 = arith.constant 0.000000e+00 : f32
    %75 = vector.broadcast %cst_25 : f32 to vector<15x16xf32>
    %76 = vector.extract_strided_slice %43 {offsets = [15, 0], sizes = [241, 16], strides = [1, 1]} : vector<256x16xf32> to vector<241x16xf32>
    %77 = tpu.concatenate %76, %75 in 0 : vector<241x16xf32>, vector<15x16xf32> -> vector<256x16xf32>
    %cst_26 = arith.constant 0.000000e+00 : f32
    %78 = vector.shape_cast %20 : vector<256x1xi1> to vector<256x1xi1>
    %79 = vector.broadcast %78 : vector<256x1xi1> to vector<256x16xi1>
    %80 = vector.broadcast %cst_26 : f32 to vector<256x16xf32>
    %81 = arith.select %79, %77, %80 : vector<256x16xi1>, vector<256x16xf32>
    %cst_27 = arith.constant 0.000000e+00 : f32
    %82 = vector.broadcast %cst_27 : f32 to vector<16x16xf32>
    %83 = vector.extract_strided_slice %43 {offsets = [16, 0], sizes = [240, 16], strides = [1, 1]} : vector<256x16xf32> to vector<240x16xf32>
    %84 = tpu.concatenate %83, %82 in 0 : vector<240x16xf32>, vector<16x16xf32> -> vector<256x16xf32>
    %cst_28 = arith.constant 0.000000e+00 : f32
    %85 = vector.broadcast %cst_28 : f32 to vector<17x16xf32>
    %86 = vector.extract_strided_slice %43 {offsets = [17, 0], sizes = [239, 16], strides = [1, 1]} : vector<256x16xf32> to vector<239x16xf32>
    %87 = tpu.concatenate %86, %85 in 0 : vector<239x16xf32>, vector<17x16xf32> -> vector<256x16xf32>
    %cst_29 = arith.constant 0.000000e+00 : f32
    %88 = vector.shape_cast %22 : vector<256x1xi1> to vector<256x1xi1>
    %89 = vector.broadcast %88 : vector<256x1xi1> to vector<256x16xi1>
    %90 = vector.broadcast %cst_29 : f32 to vector<256x16xf32>
    %91 = arith.select %89, %87, %90 : vector<256x16xi1>, vector<256x16xf32>
    %92 = tpu.concatenate %50, %53, %60, %67, %43, %74, %81, %84, %91 in 1 : vector<256x16xf32>, vector<256x16xf32>, vector<256x16xf32>, vector<256x16xf32>, vector<256x16xf32>, vector<256x16xf32>, vector<256x16xf32>, vector<256x16xf32>, vector<256x16xf32> -> vector<256x144xf32>
    %c0_30 = arith.constant 0 : index
    %c0_31 = arith.constant 0 : index
    %93 = vector.load %arg4[%c0_30, %c0_31] : memref<144x16xf32, #tpu.memory_space<vmem>>, vector<144x16xf32>
    %cst_32 = arith.constant dense<0.000000e+00> : vector<256x16xf32>
    %94 = tpu.matmul %92, %93, %cst_32 {dimension_numbers = #tpu.dot_dimension_numbers<[1], [0], [0], [1], [0, 0, 1, 1], [], []>} : vector<256x144xf32>, vector<144x16xf32>, vector<256x16xf32> -> vector<256x16xf32>
    %c0_33 = arith.constant 0 : index
    %c0_34 = arith.constant 0 : index
    %95 = vector.load %arg5[%c0_33, %c0_34] : memref<1x16xf32, #tpu.memory_space<vmem>>, vector<1x16xf32>
    %96 = vector.broadcast %95 : vector<1x16xf32> to vector<256x16xf32>
    %97 = arith.addf %94, %96 : vector<256x16xf32>
    %cst_35 = arith.constant 5.000000e-01 : f32
    %98 = vector.broadcast %cst_35 : f32 to vector<256x16xf32>
    %99 = arith.mulf %97, %98 : vector<256x16xf32>
    %cst_36 = arith.constant 0.707106769 : f32
    %100 = vector.broadcast %cst_36 : f32 to vector<256x16xf32>
    %101 = arith.mulf %97, %100 : vector<256x16xf32>
    %102 = math.erf %101 : vector<256x16xf32>
    %cst_37 = arith.constant 1.000000e+00 : f32
    %103 = vector.broadcast %cst_37 : f32 to vector<256x16xf32>
    %104 = arith.addf %103, %102 : vector<256x16xf32>
    %105 = arith.mulf %99, %104 : vector<256x16xf32>
    %cst_38 = arith.constant 0.000000e+00 : f32
    %106 = vector.broadcast %cst_38 : f32 to vector<17x16xf32>
    %107 = vector.extract_strided_slice %105 {offsets = [0, 0], sizes = [239, 16], strides = [1, 1]} : vector<256x16xf32> to vector<239x16xf32>
    %108 = tpu.concatenate %106, %107 in 0 : vector<17x16xf32>, vector<239x16xf32> -> vector<256x16xf32>
    %cst_39 = arith.constant 0.000000e+00 : f32
    %109 = vector.shape_cast %20 : vector<256x1xi1> to vector<256x1xi1>
    %110 = vector.broadcast %109 : vector<256x1xi1> to vector<256x16xi1>
    %111 = vector.broadcast %cst_39 : f32 to vector<256x16xf32>
    %112 = arith.select %110, %108, %111 : vector<256x16xi1>, vector<256x16xf32>
    %cst_40 = arith.constant 0.000000e+00 : f32
    %113 = vector.broadcast %cst_40 : f32 to vector<16x16xf32>
    %114 = vector.extract_strided_slice %105 {offsets = [0, 0], sizes = [240, 16], strides = [1, 1]} : vector<256x16xf32> to vector<240x16xf32>
    %115 = tpu.concatenate %113, %114 in 0 : vector<16x16xf32>, vector<240x16xf32> -> vector<256x16xf32>
    %cst_41 = arith.constant 0.000000e+00 : f32
    %116 = vector.broadcast %cst_41 : f32 to vector<15x16xf32>
    %117 = vector.extract_strided_slice %105 {offsets = [0, 0], sizes = [241, 16], strides = [1, 1]} : vector<256x16xf32> to vector<241x16xf32>
    %118 = tpu.concatenate %116, %117 in 0 : vector<15x16xf32>, vector<241x16xf32> -> vector<256x16xf32>
    %cst_42 = arith.constant 0.000000e+00 : f32
    %119 = vector.shape_cast %22 : vector<256x1xi1> to vector<256x1xi1>
    %120 = vector.broadcast %119 : vector<256x1xi1> to vector<256x16xi1>
    %121 = vector.broadcast %cst_42 : f32 to vector<256x16xf32>
    %122 = arith.select %120, %118, %121 : vector<256x16xi1>, vector<256x16xf32>
    %cst_43 = arith.constant 0.000000e+00 : f32
    %123 = vector.broadcast %cst_43 : f32 to vector<1x16xf32>
    %124 = vector.extract_strided_slice %105 {offsets = [0, 0], sizes = [255, 16], strides = [1, 1]} : vector<256x16xf32> to vector<255x16xf32>
    %125 = tpu.concatenate %123, %124 in 0 : vector<1x16xf32>, vector<255x16xf32> -> vector<256x16xf32>
    %cst_44 = arith.constant 0.000000e+00 : f32
    %126 = vector.shape_cast %20 : vector<256x1xi1> to vector<256x1xi1>
    %127 = vector.broadcast %126 : vector<256x1xi1> to vector<256x16xi1>
    %128 = vector.broadcast %cst_44 : f32 to vector<256x16xf32>
    %129 = arith.select %127, %125, %128 : vector<256x16xi1>, vector<256x16xf32>
    %cst_45 = arith.constant 0.000000e+00 : f32
    %130 = vector.broadcast %cst_45 : f32 to vector<1x16xf32>
    %131 = vector.extract_strided_slice %105 {offsets = [1, 0], sizes = [255, 16], strides = [1, 1]} : vector<256x16xf32> to vector<255x16xf32>
    %132 = tpu.concatenate %131, %130 in 0 : vector<255x16xf32>, vector<1x16xf32> -> vector<256x16xf32>
    %cst_46 = arith.constant 0.000000e+00 : f32
    %133 = vector.shape_cast %22 : vector<256x1xi1> to vector<256x1xi1>
    %134 = vector.broadcast %133 : vector<256x1xi1> to vector<256x16xi1>
    %135 = vector.broadcast %cst_46 : f32 to vector<256x16xf32>
    %136 = arith.select %134, %132, %135 : vector<256x16xi1>, vector<256x16xf32>
    %cst_47 = arith.constant 0.000000e+00 : f32
    %137 = vector.broadcast %cst_47 : f32 to vector<15x16xf32>
    %138 = vector.extract_strided_slice %105 {offsets = [15, 0], sizes = [241, 16], strides = [1, 1]} : vector<256x16xf32> to vector<241x16xf32>
    %139 = tpu.concatenate %138, %137 in 0 : vector<241x16xf32>, vector<15x16xf32> -> vector<256x16xf32>
    %cst_48 = arith.constant 0.000000e+00 : f32
    %140 = vector.shape_cast %20 : vector<256x1xi1> to vector<256x1xi1>
    %141 = vector.broadcast %140 : vector<256x1xi1> to vector<256x16xi1>
    %142 = vector.broadcast %cst_48 : f32 to vector<256x16xf32>
    %143 = arith.select %141, %139, %142 : vector<256x16xi1>, vector<256x16xf32>
    %cst_49 = arith.constant 0.000000e+00 : f32
    %144 = vector.broadcast %cst_49 : f32 to vector<16x16xf32>
    %145 = vector.extract_strided_slice %105 {offsets = [16, 0], sizes = [240, 16], strides = [1, 1]} : vector<256x16xf32> to vector<240x16xf32>
    %146 = tpu.concatenate %145, %144 in 0 : vector<240x16xf32>, vector<16x16xf32> -> vector<256x16xf32>
    %cst_50 = arith.constant 0.000000e+00 : f32
    %147 = vector.broadcast %cst_50 : f32 to vector<17x16xf32>
    %148 = vector.extract_strided_slice %105 {offsets = [17, 0], sizes = [239, 16], strides = [1, 1]} : vector<256x16xf32> to vector<239x16xf32>
    %149 = tpu.concatenate %148, %147 in 0 : vector<239x16xf32>, vector<17x16xf32> -> vector<256x16xf32>
    %cst_51 = arith.constant 0.000000e+00 : f32
    %150 = vector.shape_cast %22 : vector<256x1xi1> to vector<256x1xi1>
    %151 = vector.broadcast %150 : vector<256x1xi1> to vector<256x16xi1>
    %152 = vector.broadcast %cst_51 : f32 to vector<256x16xf32>
    %153 = arith.select %151, %149, %152 : vector<256x16xi1>, vector<256x16xf32>
    %154 = tpu.concatenate %112, %115, %122, %129, %105, %136, %143, %146, %153 in 1 : vector<256x16xf32>, vector<256x16xf32>, vector<256x16xf32>, vector<256x16xf32>, vector<256x16xf32>, vector<256x16xf32>, vector<256x16xf32>, vector<256x16xf32>, vector<256x16xf32> -> vector<256x144xf32>
    %c0_52 = arith.constant 0 : index
    %c0_53 = arith.constant 0 : index
    %155 = vector.load %arg6[%c0_52, %c0_53] : memref<144x16xf32, #tpu.memory_space<vmem>>, vector<144x16xf32>
    %cst_54 = arith.constant dense<0.000000e+00> : vector<256x16xf32>
    %156 = tpu.matmul %154, %155, %cst_54 {dimension_numbers = #tpu.dot_dimension_numbers<[1], [0], [0], [1], [0, 0, 1, 1], [], []>} : vector<256x144xf32>, vector<144x16xf32>, vector<256x16xf32> -> vector<256x16xf32>
    %c0_55 = arith.constant 0 : index
    %c0_56 = arith.constant 0 : index
    %157 = vector.load %arg7[%c0_55, %c0_56] : memref<1x16xf32, #tpu.memory_space<vmem>>, vector<1x16xf32>
    %158 = vector.broadcast %157 : vector<1x16xf32> to vector<256x16xf32>
    %159 = arith.addf %156, %158 : vector<256x16xf32>
    %cst_57 = arith.constant 5.000000e-01 : f32
    %160 = vector.broadcast %cst_57 : f32 to vector<256x16xf32>
    %161 = arith.mulf %159, %160 : vector<256x16xf32>
    %cst_58 = arith.constant 0.707106769 : f32
    %162 = vector.broadcast %cst_58 : f32 to vector<256x16xf32>
    %163 = arith.mulf %159, %162 : vector<256x16xf32>
    %164 = math.erf %163 : vector<256x16xf32>
    %cst_59 = arith.constant 1.000000e+00 : f32
    %165 = vector.broadcast %cst_59 : f32 to vector<256x16xf32>
    %166 = arith.addf %165, %164 : vector<256x16xf32>
    %167 = arith.mulf %161, %166 : vector<256x16xf32>
    %c0_60 = arith.constant 0 : index
    %c0_61 = arith.constant 0 : index
    %168 = vector.load %arg8[%c0_60, %c0_61] : memref<16x32xf32, #tpu.memory_space<vmem>>, vector<16x32xf32>
    %cst_62 = arith.constant dense<0.000000e+00> : vector<256x32xf32>
    %169 = tpu.matmul %167, %168, %cst_62 {dimension_numbers = #tpu.dot_dimension_numbers<[1], [0], [0], [1], [0, 0, 1, 1], [], []>} : vector<256x16xf32>, vector<16x32xf32>, vector<256x32xf32> -> vector<256x32xf32>
    %c0_63 = arith.constant 0 : index
    %c0_64 = arith.constant 0 : index
    %170 = vector.load %arg9[%c0_63, %c0_64] : memref<1x32xf32, #tpu.memory_space<vmem>>, vector<1x32xf32>
    %171 = vector.broadcast %170 : vector<1x32xf32> to vector<256x32xf32>
    %172 = arith.addf %169, %171 : vector<256x32xf32>
    %173 = arith.addf %172, %1 : vector<256x32xf32>
    %cst_65 = arith.constant 0.000000e+00 : f32
    %174 = vector.broadcast %cst_65 : f32 to vector<1x32xf32>
    %175 = vector.extract_strided_slice %173 {offsets = [1, 0], sizes = [255, 32], strides = [1, 1]} : vector<256x32xf32> to vector<255x32xf32>
    %176 = tpu.concatenate %175, %174 in 0 : vector<255x32xf32>, vector<1x32xf32> -> vector<256x32xf32>
    %177 = arith.addf %173, %176 : vector<256x32xf32>
    %178 = vector.shape_cast %177 : vector<256x32xf32> to vector<8x2x16x32xf32>
    %179 = vector.extract_strided_slice %178 {offsets = [0, 0, 0, 0], sizes = [8, 1, 16, 32], strides = [1, 1, 1, 1]} : vector<8x2x16x32xf32> to vector<8x1x16x32xf32>
    %180 = vector.shape_cast %179 : vector<8x1x16x32xf32> to vector<8x16x32xf32>
    %181 = vector.extract_strided_slice %178 {offsets = [0, 1, 0, 0], sizes = [8, 1, 16, 32], strides = [1, 1, 1, 1]} : vector<8x2x16x32xf32> to vector<8x1x16x32xf32>
    %182 = vector.shape_cast %181 : vector<8x1x16x32xf32> to vector<8x16x32xf32>
    %183 = arith.addf %180, %182 : vector<8x16x32xf32>
    %184 = vector.shape_cast %183 : vector<8x16x32xf32> to vector<8x8x2x32xf32>
    %185 = vector.extract_strided_slice %184 {offsets = [0, 0, 0, 0], sizes = [8, 8, 1, 32], strides = [1, 1, 1, 1]} : vector<8x8x2x32xf32> to vector<8x8x1x32xf32>
    %186 = vector.shape_cast %185 : vector<8x8x1x32xf32> to vector<8x8x32xf32>
    %cst_66 = arith.constant 2.500000e-01 : f32
    %187 = vector.broadcast %cst_66 : f32 to vector<8x8x32xf32>
    %188 = arith.mulf %186, %187 : vector<8x8x32xf32>
    %189 = vector.shape_cast %188 : vector<8x8x32xf32> to vector<64x32xf32>
    %c0_67 = arith.constant 0 : index
    %c0_68 = arith.constant 0 : index
    %c0_69 = arith.constant 0 : index
    %190 = vector.load %arg10[%c0_67, %c0_68, %c0_69] : memref<1x64x32xf32, #tpu.memory_space<vmem>>, vector<1x64x32xf32>
    %191 = vector.shape_cast %190 : vector<1x64x32xf32> to vector<64x32xf32>
    %192 = vector.shape_cast %189 : vector<64x32xf32> to vector<1x64x32xf32>
    tpu.vector_store %arg10[%c0_67, %c0_68, %c0_69], %192 {strides = array<i32>} : memref<1x64x32xf32, #tpu.memory_space<vmem>>, vector<1x64x32xf32>,
    return
  }
  func.func @transform_0(%arg0: i32) -> (i32, i32, i32) {
    %c0_i32 = arith.constant 0 : i32
    %c0_i32_0 = arith.constant 0 : i32
    %c0_i32_1 = arith.constant 0 : i32
    return %arg0, %c0_i32, %c0_i32_0 : i32, i32, i32
  }
  func.func @transform_1(%arg0: i32) -> (i32, i32) {
    %c0_i32 = arith.constant 0 : i32
    %c0_i32_0 = arith.constant 0 : i32
    %c0_i32_1 = arith.constant 0 : i32
    return %c0_i32, %c0_i32_0 : i32, i32
  }
  func.func @transform_2(%arg0: i32) -> (i32, i32) {
    %c0_i32 = arith.constant 0 : i32
    %c0_i32_0 = arith.constant 0 : i32
    %c0_i32_1 = arith.constant 0 : i32
    return %c0_i32, %c0_i32_0 : i32, i32
  }
  func.func @transform_3(%arg0: i32) -> (i32, i32) {
    %c0_i32 = arith.constant 0 : i32
    %c0_i32_0 = arith.constant 0 : i32
    %c0_i32_1 = arith.constant 0 : i32
    return %c0_i32, %c0_i32_0 : i32, i32
  }
  func.func @transform_4(%arg0: i32) -> (i32, i32) {
    %c0_i32 = arith.constant 0 : i32
    %c0_i32_0 = arith.constant 0 : i32
    %c0_i32_1 = arith.constant 0 : i32
    return %c0_i32, %c0_i32_0 : i32, i32
  }
  func.func @transform_5(%arg0: i32) -> (i32, i32) {
    %c0_i32 = arith.constant 0 : i32
    %c0_i32_0 = arith.constant 0 : i32
    %c0_i32_1 = arith.constant 0 : i32
    return %c0_i32, %c0_i32_0 : i32, i32
  }
  func.func @transform_6(%arg0: i32) -> (i32, i32) {
    %c0_i32 = arith.constant 0 : i32
    %c0_i32_0 = arith.constant 0 : i32
    %c0_i32_1 = arith.constant 0 : i32
    return %c0_i32, %c0_i32_0 : i32, i32
  }
  func.func @transform_7(%arg0: i32) -> (i32, i32) {
    %c0_i32 = arith.constant 0 : i32
    %c0_i32_0 = arith.constant 0 : i32
    %c0_i32_1 = arith.constant 0 : i32
    return %c0_i32, %c0_i32_0 : i32, i32
  }
  func.func @transform_8(%arg0: i32) -> (i32, i32) {
    %c0_i32 = arith.constant 0 : i32
    %c0_i32_0 = arith.constant 0 : i32
    %c0_i32_1 = arith.constant 0 : i32
    return %c0_i32, %c0_i32_0 : i32, i32
  }
  func.func @transform_9(%arg0: i32) -> (i32, i32, i32) {
    %c0_i32 = arith.constant 0 : i32
    %c0_i32_0 = arith.constant 0 : i32
    %c0_i32_1 = arith.constant 0 : i32
    return %arg0, %c0_i32, %c0_i32_0 : i32, i32, i32
  }
}

</mosaic_0001>

<llo_original>
// kernel: tpu_custom_call.1
$region0: #{tpu_custom_call.1}
  #allocation0 [shape = 'u32[]', space=smem, size = 0x4, offset = 0x4, fixed_abs, tag = 'smem constant byte address 0x4 - core index']
  #allocation1 [shape = 'u32[144,128]{1,0:T(1,128)}', space=vmem, size = 0x12000, scoped, tag = 'internal scratch']
  %s0 = inlined_call_operand.vmem [shape: f32[2,256,32], index: 0, kind: input, shape index: {}]
  %s1 = inlined_call_operand.vmem [shape: f32[32,16], index: 1, kind: input, shape index: {}]
  %s2 = inlined_call_operand.vmem [shape: f32[1,16], index: 2, kind: input, shape index: {}]
  %s3 = inlined_call_operand.vmem [shape: f32[144,16], index: 3, kind: input, shape index: {}]
  %s4 = inlined_call_operand.vmem [shape: f32[1,16], index: 4, kind: input, shape index: {}]
  %s5 = inlined_call_operand.vmem [shape: f32[144,16], index: 5, kind: input, shape index: {}]
  %s6 = inlined_call_operand.vmem [shape: f32[1,16], index: 6, kind: input, shape index: {}]
  %s7 = inlined_call_operand.vmem [shape: f32[16,32], index: 7, kind: input, shape index: {}]
  %s8 = inlined_call_operand.vmem [shape: f32[1,32], index: 8, kind: input, shape index: {}]
  %s9 = inlined_call_operand.vmem [shape: f32[2,64,32], index: 9, kind: output, shape index: {}]
  %s10 = sld [smem:[#allocation0]]
  $region69: #{tpu_custom_call.1} parent=0
    _
  %s12 = ssub.s32 1, %s10
  %s13 = scalar_select 0, %s12, %s10
  loop: start=0, step=1, limit=4
  $region2: #{tpu_custom_call.1} parent=0 // loop_pre_header
    _
  $region3: #{tpu_custom_call.1} parent=0 // loop_header
    %s15 = sphi 0, %s19
    %p16 = scmp.ge.s32.totalorder %s15, 4
    %s25 = sphi 0, %s27
    %s28 = sphi 0, %s25
    %s29 = sphi 0, %s28
    %s45 = sphi 0, %s29
    %s49 = sphi 0, %s49
    %s51 = sphi 0, %s49
    %s52 = sphi 0, %s51
    %s66 = sphi 0, %s52
    %s70 = sphi 0, %s70
    %s72 = sphi 0, %s70
    %s73 = sphi 0, %s72
    %s87 = sphi 0, %s73
    %s91 = sphi 0, %s91
    %s93 = sphi 0, %s91
    %s94 = sphi 0, %s93
    %s108 = sphi 0, %s94
    %s112 = sphi 0, %s112
    %s114 = sphi 0, %s112
    %s115 = sphi 0, %s114
    %s129 = sphi 0, %s115
    %s133 = sphi 0, %s133
    %s135 = sphi 0, %s133
    %s136 = sphi 0, %s135
    %s150 = sphi 0, %s136
    %s154 = sphi 0, %s154
    %s156 = sphi 0, %s154
    %s157 = sphi 0, %s156
    %s171 = sphi 0, %s157
    %s175 = sphi 0, %s175
    %s177 = sphi 0, %s175
    %s178 = sphi 0, %s177
    %s192 = sphi 0, %s178
    %s196 = sphi 0, %s196
    %s198 = sphi 0, %s196
    %s199 = sphi 0, %s198
    %s213 = sphi 0, %s199
    %s219 = sphi 0, %s221
    %s222 = sphi 0, %s219
    %s223 = sphi 0, %s222
    %s239 = sphi 0, %s223
  $region4: #{tpu_custom_call.1} parent=0 // loop_header_branch
    %18 = sbr.rel (%p16) target = $region8
  $region5: #{tpu_custom_call.1} parent=0 // loop_body
    %s20 = ssub.s32 %s15, 1
    %s21 = ssub.s32 %s15, 2
    %s22 = sadd.s32 %s15, 1
    %s23 = ssub.s32 %s15, %s22
    %p24 = scmp.eq.s32.totalorder %s23, 0
    %s26 = sadd.s32 %s25, 1
    %s27 = scalar_select %p24, %s25, %s26
    %p30 = pneg %p24
    %p31 = scmp.eq.s32.totalorder %s15, 1
    %p32 = por %p30, %p31
    %p33 = scmp.ne.s32.totalorder %s25, %s28
    %p34 = scmp.eq.s32.totalorder %s15, 0
    %p35 = por %p33, %p34
    %p36 = scmp.ne.s32.totalorder %s25, %s28
    %p37 = scmp.eq.s32.totalorder %s20, 1
    %p38 = por %p36, %p37
    %p39 = scmp.ne.s32.totalorder %s28, %s29
    %p40 = scmp.eq.s32.totalorder %s20, 0
    %p41 = por %p39, %p40
    %p42 = scmp.ne.s32.totalorder %s28, %s29
    %p43 = scmp.eq.s32.totalorder %s21, 1
    %p44 = por %p42, %p43
    %p46 = scmp.ne.s32.totalorder %s29, %s45
    %p47 = scmp.eq.s32.totalorder %s21, 0
    %p48 = por %p46, %p47
    %s50 = sadd.s32 %s49, 1
    %p53 = scmp.eq.s32.totalorder %s15, 1
    %p54 = scmp.ne.s32.totalorder %s49, %s51
    %p55 = scmp.eq.s32.totalorder %s15, 0
    %p56 = por %p54, %p55
    %p57 = scmp.ne.s32.totalorder %s49, %s51
    %p58 = scmp.eq.s32.totalorder %s20, 1
    %p59 = por %p57, %p58
    %p60 = scmp.ne.s32.totalorder %s51, %s52
    %p61 = scmp.eq.s32.totalorder %s20, 0
    %p62 = por %p60, %p61
    %p63 = scmp.ne.s32.totalorder %s51, %s52
    %p64 = scmp.eq.s32.totalorder %s21, 1
    %p65 = por %p63, %p64
    %p67 = scmp.ne.s32.totalorder %s52, %s66
    %p68 = scmp.eq.s32.totalorder %s21, 0
    %p69 = por %p67, %p68
    %s71 = sadd.s32 %s70, 1
    %p74 = scmp.eq.s32.totalorder %s15, 1
    %p75 = scmp.ne.s32.totalorder %s70, %s72
    %p76 = scmp.eq.s32.totalorder %s15, 0
    %p77 = por %p75, %p76
    %p78 = scmp.ne.s32.totalorder %s70, %s72
    %p79 = scmp.eq.s32.totalorder %s20, 1
    %p80 = por %p78, %p79
    %p81 = scmp.ne.s32.totalorder %s72, %s73
    %p82 = scmp.eq.s32.totalorder %s20, 0
    %p83 = por %p81, %p82
    %p84 = scmp.ne.s32.totalorder %s72, %s73
    %p85 = scmp.eq.s32.totalorder %s21, 1
    %p86 = por %p84, %p85
    %p88 = scmp.ne.s32.totalorder %s73, %s87
    %p89 = scmp.eq.s32.totalorder %s21, 0
    %p90 = por %p88, %p89
    %s92 = sadd.s32 %s91, 1
    %p95 = scmp.eq.s32.totalorder %s15, 1
    %p96 = scmp.ne.s32.totalorder %s91, %s93
    %p97 = scmp.eq.s32.totalorder %s15, 0
    %p98 = por %p96, %p97
    %p99 = scmp.ne.s32.totalorder %s91, %s93
    %p100 = scmp.eq.s32.totalorder %s20, 1
    %p101 = por %p99, %p100
    %p102 = scmp.ne.s32.totalorder %s93, %s94
    %p103 = scmp.eq.s32.totalorder %s20, 0
    %p104 = por %p102, %p103
    %p105 = scmp.ne.s32.totalorder %s93, %s94
    %p106 = scmp.eq.s32.totalorder %s21, 1
    %p107 = por %p105, %p106
    %p109 = scmp.ne.s32.totalorder %s94, %s108
    %p110 = scmp.eq.s32.totalorder %s21, 0
    %p111 = por %p109, %p110
    %s113 = sadd.s32 %s112, 1
    %p116 = scmp.eq.s32.totalorder %s15, 1
    %p117 = scmp.ne.s32.totalorder %s112, %s114
    %p118 = scmp.eq.s32.totalorder %s15, 0
    %p119 = por %p117, %p118
    %p120 = scmp.ne.s32.totalorder %s112, %s114
    %p121 = scmp.eq.s32.totalorder %s20, 1
    %p122 = por %p120, %p121
    %p123 = scmp.ne.s32.totalorder %s114, %s115
    %p124 = scmp.eq.s32.totalorder %s20, 0
    %p125 = por %p123, %p124
    %p126 = scmp.ne.s32.totalorder %s114, %s115
    %p127 = scmp.eq.s32.totalorder %s21, 1
    %p128 = por %p126, %p127
    %p130 = scmp.ne.s32.totalorder %s115, %s129
    %p131 = scmp.eq.s32.totalorder %s21, 0
    %p132 = por %p130, %p131
    %s134 = sadd.s32 %s133, 1
    %p137 = scmp.eq.s32.totalorder %s15, 1
    %p138 = scmp.ne.s32.totalorder %s133, %s135
    %p139 = scmp.eq.s32.totalorder %s15, 0
    %p140 = por %p138, %p139
    %p141 = scmp.ne.s32.totalorder %s133, %s135
    %p142 = scmp.eq.s32.totalorder %s20, 1
    %p143 = por %p141, %p142
    %p144 = scmp.ne.s32.totalorder %s135, %s136
    %p145 = scmp.eq.s32.totalorder %s20, 0
    %p146 = por %p144, %p145
    %p147 = scmp.ne.s32.totalorder %s135, %s136
    %p148 = scmp.eq.s32.totalorder %s21, 1
    %p149 = por %p147, %p148
    %p151 = scmp.ne.s32.totalorder %s136, %s150
    %p152 = scmp.eq.s32.totalorder %s21, 0
    %p153 = por %p151, %p152
    %s155 = sadd.s32 %s154, 1
    %p158 = scmp.eq.s32.totalorder %s15, 1
    %p159 = scmp.ne.s32.totalorder %s154, %s156
    %p160 = scmp.eq.s32.totalorder %s15, 0
    %p161 = por %p159, %p160
    %p162 = scmp.ne.s32.totalorder %s154, %s156
    %p163 = scmp.eq.s32.totalorder %s20, 1
    %p164 = por %p162, %p163
    %p165 = scmp.ne.s32.totalorder %s156, %s157
    %p166 = scmp.eq.s32.totalorder %s20, 0
    %p167 = por %p165, %p166
    %p168 = scmp.ne.s32.totalorder %s156, %s157
    %p169 = scmp.eq.s32.totalorder %s21, 1
    %p170 = por %p168, %p169
    %p172 = scmp.ne.s32.totalorder %s157, %s171
    %p173 = scmp.eq.s32.totalorder %s21, 0
    %p174 = por %p172, %p173
    %s176 = sadd.s32 %s175, 1
    %p179 = scmp.eq.s32.totalorder %s15, 1
    %p180 = scmp.ne.s32.totalorder %s175, %s177
    %p181 = scmp.eq.s32.totalorder %s15, 0
    %p182 = por %p180, %p181
    %p183 = scmp.ne.s32.totalorder %s175, %s177
    %p184 = scmp.eq.s32.totalorder %s20, 1
    %p185 = por %p183, %p184
    %p186 = scmp.ne.s32.totalorder %s177, %s178
    %p187 = scmp.eq.s32.totalorder %s20, 0
    %p188 = por %p186, %p187
    %p189 = scmp.ne.s32.totalorder %s177, %s178
    %p190 = scmp.eq.s32.totalorder %s21, 1
    %p191 = por %p189, %p190
    %p193 = scmp.ne.s32.totalorder %s178, %s192
    %p194 = scmp.eq.s32.totalorder %s21, 0
    %p195 = por %p193, %p194
    %s197 = sadd.s32 %s196, 1
    %p200 = scmp.eq.s32.totalorder %s15, 1
    %p201 = scmp.ne.s32.totalorder %s196, %s198
    %p202 = scmp.eq.s32.totalorder %s15, 0
    %p203 = por %p201, %p202
    %p204 = scmp.ne.s32.totalorder %s196, %s198
    %p205 = scmp.eq.s32.totalorder %s20, 1
    %p206 = por %p204, %p205
    %p207 = scmp.ne.s32.totalorder %s198, %s199
    %p208 = scmp.eq.s32.totalorder %s20, 0
    %p209 = por %p207, %p208
    %p210 = scmp.ne.s32.totalorder %s198, %s199
    %p211 = scmp.eq.s32.totalorder %s21, 1
    %p212 = por %p210, %p211
    %p214 = scmp.ne.s32.totalorder %s199, %s213
    %p215 = scmp.eq.s32.totalorder %s21, 0
    %p216 = por %p214, %p215
    %s217 = ssub.s32 %s15, %s22
    %p218 = scmp.eq.s32.totalorder %s217, 0
    %s220 = sadd.s32 %s219, 1
    %s221 = scalar_select %p218, %s219, %s220
    %p224 = pneg %p218
    %p225 = scmp.eq.s32.totalorder %s15, 1
    %p226 = por %p224, %p225
    %p227 = scmp.ne.s32.totalorder %s219, %s222
    %p228 = scmp.eq.s32.totalorder %s15, 0
    %p229 = por %p227, %p228
    %p230 = scmp.ne.s32.totalorder %s219, %s222
    %p231 = scmp.eq.s32.totalorder %s20, 1
    %p232 = por %p230, %p231
    %p233 = scmp.ne.s32.totalorder %s222, %s223
    %p234 = scmp.eq.s32.totalorder %s20, 0
    %p235 = por %p233, %p234
    %p236 = scmp.ne.s32.totalorder %s222, %s223
    %p237 = scmp.eq.s32.totalorder %s21, 1
    %p238 = por %p236, %p237
    %p240 = scmp.ne.s32.totalorder %s223, %s239
    %p241 = scmp.eq.s32.totalorder %s21, 0
    %p242 = por %p240, %p241
    %p243 = scmp.le.s32.totalorder 1, %s15
    %p244 = scmp.lt.s32.totalorder %s15, 3
    %p245 = pnand %p243, %p244
    %p246 = pneg %p245
    // Predicated region
    $region9: #{tpu_custom_call.1} parent=5 // pred_check
      _
    $region10: #{tpu_custom_call.1} parent=5 // pred_check_branch
      %248 = sbr.rel (%p245) target = $region12
    $region11: #{tpu_custom_call.1} parent=5 // pred_region
      %s249 = ssub.s32 %s15, 1
      // Predicated region
      $region13: #{tpu_custom_call.1} parent=11 // pred_check
        %p250 = pneg %p62
      $region14: #{tpu_custom_call.1} parent=11 // pred_check_branch
        %252 = sbr.rel (%p250) target = $region16
      $region15: #{tpu_custom_call.1} parent=11 // pred_region
        _
      $region16: #{tpu_custom_call.1} parent=11 // pred_fallthru
        _
      // Predicated region
      $region17: #{tpu_custom_call.1} parent=11 // pred_check
        %p253 = pneg %p83
      $region18: #{tpu_custom_call.1} parent=11 // pred_check_branch
        %255 = sbr.rel (%p253) target = $region20
      $region19: #{tpu_custom_call.1} parent=11 // pred_region
        _
      $region20: #{tpu_custom_call.1} parent=11 // pred_fallthru
        _
      // Predicated region
      $region21: #{tpu_custom_call.1} parent=11 // pred_check
        %p256 = pneg %p104
      $region22: #{tpu_custom_call.1} parent=11 // pred_check_branch
        %258 = sbr.rel (%p256) target = $region24
      $region23: #{tpu_custom_call.1} parent=11 // pred_region
        _
      $region24: #{tpu_custom_call.1} parent=11 // pred_fallthru
        _
      // Predicated region
      $region25: #{tpu_custom_call.1} parent=11 // pred_check
        %p259 = pneg %p125
      $region26: #{tpu_custom_call.1} parent=11 // pred_check_branch
        %261 = sbr.rel (%p259) target = $region28
      $region27: #{tpu_custom_call.1} parent=11 // pred_region
        _
      $region28: #{tpu_custom_call.1} parent=11 // pred_fallthru
        _
      // Predicated region
      $region29: #{tpu_custom_call.1} parent=11 // pred_check
        %p262 = pneg %p146
      $region30: #{tpu_custom_call.1} parent=11 // pred_check_branch
        %264 = sbr.rel (%p262) target = $region32
      $region31: #{tpu_custom_call.1} parent=11 // pred_region
        _
      $region32: #{tpu_custom_call.1} parent=11 // pred_fallthru
        _
      // Predicated region
      $region33: #{tpu_custom_call.1} parent=11 // pred_check
        %p265 = pneg %p167
      $region34: #{tpu_custom_call.1} parent=11 // pred_check_branch
        %267 = sbr.rel (%p265) target = $region36
      $region35: #{tpu_custom_call.1} parent=11 // pred_region
        _
      $region36: #{tpu_custom_call.1} parent=11 // pred_fallthru
        _
      // Predicated region
      $region37: #{tpu_custom_call.1} parent=11 // pred_check
        %p268 = pneg %p188
      $region38: #{tpu_custom_call.1} parent=11 // pred_check_branch
        %270 = sbr.rel (%p268) target = $region40
      $region39: #{tpu_custom_call.1} parent=11 // pred_region
        _
      $region40: #{tpu_custom_call.1} parent=11 // pred_fallthru
        _
      // Predicated region
      $region41: #{tpu_custom_call.1} parent=11 // pred_check
        %p271 = pneg %p209
      $region42: #{tpu_custom_call.1} parent=11 // pred_check_branch
        %273 = sbr.rel (%p271) target = $region44
      $region43: #{tpu_custom_call.1} parent=11 // pred_region
        _
      $region44: #{tpu_custom_call.1} parent=11 // pred_fallthru
        _
    $region12: #{tpu_custom_call.1} parent=5 // pred_fallthru
      _
    %p274 = scmp.lt.s32.totalorder %s15, 2
    // Predicated region
    $region45: #{tpu_custom_call.1} parent=5 // pred_check
      %p275 = pneg %p274
    $region46: #{tpu_custom_call.1} parent=5 // pred_check_branch
      %277 = sbr.rel (%p275) target = $region48
    $region47: #{tpu_custom_call.1} parent=5 // pred_region
      // Predicated region
      $region49: #{tpu_custom_call.1} parent=47 // pred_check
        %p278 = pneg %p35
      $region50: #{tpu_custom_call.1} parent=47 // pred_check_branch
        %280 = sbr.rel (%p278) target = $region52
      $region51: #{tpu_custom_call.1} parent=47 // pred_region
        %p281 = scmp.lt.s32.totalorder %s15, 1
        %s282 = scalar_select %p281, %s15, 1
        %s283 = smul.addr %s282, 32
        %s284 = smul.addr %s283, 8
        %s285 = scalar_lea.vmem %s0, %s284
      $region52: #{tpu_custom_call.1} parent=47 // pred_fallthru
        _
    $region48: #{tpu_custom_call.1} parent=5 // pred_fallthru
      _
    %p286 = scmp.le.s32.totalorder 1, %s15
    %p287 = scmp.lt.s32.totalorder %s15, 3
    %p288 = pnand %p286, %p287
    %p289 = pneg %p288
    // Predicated region
    $region53: #{tpu_custom_call.1} parent=5 // pred_check
      _
    $region54: #{tpu_custom_call.1} parent=5 // pred_check_branch
      %291 = sbr.rel (%p288) target = $region56
    $region55: #{tpu_custom_call.1} parent=5 // pred_region
      %s292 = ssub.s32 %s15, 1
      %p293 = scmp.lt.s32.totalorder %s20, 1
      %s294 = scalar_select %p293, %s20, 1
      %s295 = smul.addr %s294, 32
      %s296 = smul.addr %s295, 8
      %s297 = scalar_lea.vmem %s0, %s296
      %p298 = pneg %p41
      %p299 = pneg %p38
      %p300 = pneg %p62
      %p301 = pneg %p59
      %p302 = pneg %p83
      %p303 = pneg %p80
      %p304 = pneg %p104
      %p305 = pneg %p101
      %p306 = pneg %p125
      %p307 = pneg %p122
      %p308 = pneg %p146
      %p309 = pneg %p143
      %p310 = pneg %p167
      %p311 = pneg %p164
      %p312 = pneg %p188
      %p313 = pneg %p185
      %p314 = pneg %p209
      %p315 = pneg %p206
      %p316 = pneg %p235
      %p317 = pneg %p232
      %p318 = scmp.lt.s32.totalorder %s20, 1
      %s319 = scalar_select %p318, %s20, 1
      %s320 = smul.addr %s319, 8
      %s321 = smul.addr %s320, 8
      %s322 = scalar_lea.vmem %s9, %s321
      %p323 = scmp.lt.s32.totalorder %s20, 1
      %s324 = scalar_select %p323, %s20, 1
      %s325 = smul.addr %s324, 32
      %s326 = smul.addr %s325, 8
      %s327 = scalar_lea.vmem %s0, %s326
      %p328 = scmp.lt.s32.totalorder %s20, 1
      %s329 = scalar_select %p328, %s20, 1
      %s330 = smul.addr %s329, 8
      %s331 = smul.addr %s330, 8
      %s332 = scalar_lea.vmem %s9, %s331
      %v333 = vld [vmem:[%s327] sm:$0xff]
      %v334 = vld [vmem:[%s327 + $0x8] sm:$0xff]
      %v335 = vld [vmem:[%s327 + $0x10] sm:$0xff]
      %v336 = vld [vmem:[%s327 + $0x18] sm:$0xff]
      %v337 = vld [vmem:[%s327 + $0x20] sm:$0xff]
      %v338 = vld [vmem:[%s327 + $0x28] sm:$0xff]
      %v339 = vld [vmem:[%s327 + $0x30] sm:$0xff]
      %v340 = vld [vmem:[%s327 + $0x38] sm:$0xff]
      %v341 = vld [vmem:[%s327 + $0x40] sm:$0xff]
      %v342 = vld [vmem:[%s327 + $0x48] sm:$0xff]
      %v343 = vld [vmem:[%s327 + $0x50] sm:$0xff]
      %v344 = vld [vmem:[%s327 + $0x58] sm:$0xff]
      %v345 = vld [vmem:[%s327 + $0x60] sm:$0xff]
      %v346 = vld [vmem:[%s327 + $0x68] sm:$0xff]
      %v347 = vld [vmem:[%s327 + $0x70] sm:$0xff]
      %v348 = vld [vmem:[%s327 + $0x78] sm:$0xff]
      %v349 = vld [vmem:[%s327 + $0x80] sm:$0xff]
      %v350 = vld [vmem:[%s327 + $0x88] sm:$0xff]
      %v351 = vld [vmem:[%s327 + $0x90] sm:$0xff]
      %v352 = vld [vmem:[%s327 + $0x98] sm:$0xff]
      %v353 = vld [vmem:[%s327 + $0xa0] sm:$0xff]
      %v354 = vld [vmem:[%s327 + $0xa8] sm:$0xff]
      %v355 = vld [vmem:[%s327 + $0xb0] sm:$0xff]
      %v356 = vld [vmem:[%s327 + $0xb8] sm:$0xff]
      %v357 = vld [vmem:[%s327 + $0xc0] sm:$0xff]
      %v358 = vld [vmem:[%s327 + $0xc8] sm:$0xff]
      %v359 = vld [vmem:[%s327 + $0xd0] sm:$0xff]
      %v360 = vld [vmem:[%s327 + $0xd8] sm:$0xff]
      %v361 = vld [vmem:[%s327 + $0xe0] sm:$0xff]
      %v362 = vld [vmem:[%s327 + $0xe8] sm:$0xff]
      %v363 = vld [vmem:[%s327 + $0xf0] sm:$0xff]
      %v364 = vld [vmem:[%s327 + $0xf8] sm:$0xff]
      %v365 = vlaneseq
      %v366 = vshrl.u32 %v365, 7
      %v367 = vadd.s32 %v366, 8
      %v368 = vadd.s32 %v366, 16
      %v369 = vadd.s32 %v366, 24
      %v370 = vadd.s32 %v366, 32
      %v371 = vadd.s32 %v366, 40
      %v372 = vadd.s32 %v366, 48
      %v373 = vadd.s32 %v366, 56
      %v374 = vadd.s32 %v366, 64
      %v375 = vadd.s32 %v366, 72
      %v376 = vadd.s32 %v366, 80
      %v377 = vadd.s32 %v366, 88
      %v378 = vadd.s32 %v366, 96
      %v379 = vadd.s32 %v366, 104
      %v380 = vadd.s32 %v366, 112
      %v381 = vadd.s32 %v366, 120
      %v382 = vadd.s32 %v366, 128
      %v383 = vadd.s32 %v366, 136
      %v384 = vadd.s32 %v366, 144
      %v385 = vadd.s32 %v366, 152
      %v386 = vadd.s32 %v366, 160
      %v387 = vadd.s32 %v366, 168
      %v388 = vadd.s32 %v366, 176
      %v389 = vadd.s32 %v366, 184
      %v390 = vadd.s32 %v366, 192
      %v391 = vadd.s32 %v366, 200
      %v392 = vadd.s32 %v366, 208
      %v393 = vadd.s32 %v366, 216
      %v394 = vadd.s32 %v366, 224
      %v395 = vadd.s32 %v366, 232
      %v396 = vadd.s32 %v366, 240
      %v397 = vadd.s32 %v366, 248
      %vm398 = vcmp.lt.s32.totalorder %v366, 0
      %v399 = vsub.s32 0, %v366
      %v400 = vsel %vm398, %v399, %v366
      %v401 = vshrl.u32 %v400, 4
      %v402 = vand.u32 %v400, 15
      %v403 = vsub.s32 0, %v402
      %v404 = vsel %vm398, %v403, %v402
      %vm405 = vcmp.lt.s32.totalorder %v367, 0
      %v406 = vsub.s32 0, %v367
      %v407 = vsel %vm405, %v406, %v367
      %v408 = vshrl.u32 %v407, 4
      %v409 = vand.u32 %v407, 15
      %v410 = vsub.s32 0, %v409
      %v411 = vsel %vm405, %v410, %v409
      %vm412 = vcmp.lt.s32.totalorder %v368, 0
      %v413 = vsub.s32 0, %v368
      %v414 = vsel %vm412, %v413, %v368
      %v415 = vshrl.u32 %v414, 4
      %v416 = vand.u32 %v414, 15
      %v417 = vsub.s32 0, %v416
      %v418 = vsel %vm412, %v417, %v416
      %vm419 = vcmp.lt.s32.totalorder %v369, 0
      %v420 = vsub.s32 0, %v369
      %v421 = vsel %vm419, %v420, %v369
      %v422 = vshrl.u32 %v421, 4
      %v423 = vand.u32 %v421, 15
      %v424 = vsub.s32 0, %v423
      %v425 = vsel %vm419, %v424, %v423
      %vm426 = vcmp.lt.s32.totalorder %v370, 0
      %v427 = vsub.s32 0, %v370
      %v428 = vsel %vm426, %v427, %v370
      %v429 = vshrl.u32 %v428, 4
      %v430 = vand.u32 %v428, 15
      %v431 = vsub.s32 0, %v430
      %v432 = vsel %vm426, %v431, %v430
      %vm433 = vcmp.lt.s32.totalorder %v371, 0
      %v434 = vsub.s32 0, %v371
      %v435 = vsel %vm433, %v434, %v371
      %v436 = vshrl.u32 %v435, 4
      %v437 = vand.u32 %v435, 15
      %v438 = vsub.s32 0, %v437
      %v439 = vsel %vm433, %v438, %v437
      %vm440 = vcmp.lt.s32.totalorder %v372, 0
      %v441 = vsub.s32 0, %v372
      %v442 = vsel %vm440, %v441, %v372
      %v443 = vshrl.u32 %v442, 4
      %v444 = vand.u32 %v442, 15
      %v445 = vsub.s32 0, %v444
      %v446 = vsel %vm440, %v445, %v444
      %vm447 = vcmp.lt.s32.totalorder %v373, 0
      %v448 = vsub.s32 0, %v373
      %v449 = vsel %vm447, %v448, %v373
      %v450 = vshrl.u32 %v449, 4
      %v451 = vand.u32 %v449, 15
      %v452 = vsub.s32 0, %v451
      %v453 = vsel %vm447, %v452, %v451
      %vm454 = vcmp.lt.s32.totalorder %v374, 0
      %v455 = vsub.s32 0, %v374
      %v456 = vsel %vm454, %v455, %v374
      %v457 = vshrl.u32 %v456, 4
      %v458 = vand.u32 %v456, 15
      %v459 = vsub.s32 0, %v458
      %v460 = vsel %vm454, %v459, %v458
      %vm461 = vcmp.lt.s32.totalorder %v375, 0
      %v462 = vsub.s32 0, %v375
      %v463 = vsel %vm461, %v462, %v375
      %v464 = vshrl.u32 %v463, 4
      %v465 = vand.u32 %v463, 15
      %v466 = vsub.s32 0, %v465
      %v467 = vsel %vm461, %v466, %v465
      %vm468 = vcmp.lt.s32.totalorder %v376, 0
      %v469 = vsub.s32 0, %v376
      %v470 = vsel %vm468, %v469, %v376
      %v471 = vshrl.u32 %v470, 4
      %v472 = vand.u32 %v470, 15
      %v473 = vsub.s32 0, %v472
      %v474 = vsel %vm468, %v473, %v472
      %vm475 = vcmp.lt.s32.totalorder %v377, 0
      %v476 = vsub.s32 0, %v377
      %v477 = vsel %vm475, %v476, %v377
      %v478 = vshrl.u32 %v477, 4
      %v479 = vand.u32 %v477, 15
      %v480 = vsub.s32 0, %v479
      %v481 = vsel %vm475, %v480, %v479
      %vm482 = vcmp.lt.s32.totalorder %v378, 0
      %v483 = vsub.s32 0, %v378
      %v484 = vsel %vm482, %v483, %v378
      %v485 = vshrl.u32 %v484, 4
      %v486 = vand.u32 %v484, 15
      %v487 = vsub.s32 0, %v486
      %v488 = vsel %vm482, %v487, %v486
      %vm489 = vcmp.lt.s32.totalorder %v379, 0
      %v490 = vsub.s32 0, %v379
      %v491 = vsel %vm489, %v490, %v379
      %v492 = vshrl.u32 %v491, 4
      %v493 = vand.u32 %v491, 15
      %v494 = vsub.s32 0, %v493
      %v495 = vsel %vm489, %v494, %v493
      %vm496 = vcmp.lt.s32.totalorder %v380, 0
      %v497 = vsub.s32 0, %v380
      %v498 = vsel %vm496, %v497, %v380
      %v499 = vshrl.u32 %v498, 4
      %v500 = vand.u32 %v498, 15
      %v501 = vsub.s32 0, %v500
      %v502 = vsel %vm496, %v501, %v500
      %vm503 = vcmp.lt.s32.totalorder %v381, 0
      %v504 = vsub.s32 0, %v381
      %v505 = vsel %vm503, %v504, %v381
      %v506 = vshrl.u32 %v505, 4
      %v507 = vand.u32 %v505, 15
      %v508 = vsub.s32 0, %v507
      %v509 = vsel %vm503, %v508, %v507
      %vm510 = vcmp.lt.s32.totalorder %v382, 0
      %v511 = vsub.s32 0, %v382
      %v512 = vsel %vm510, %v511, %v382
      %v513 = vshrl.u32 %v512, 4
      %v514 = vand.u32 %v512, 15
      %v515 = vsub.s32 0, %v514
      %v516 = vsel %vm510, %v515, %v514
      %vm517 = vcmp.lt.s32.totalorder %v383, 0
      %v518 = vsub.s32 0, %v383
      %v519 = vsel %vm517, %v518, %v383
      %v520 = vshrl.u32 %v519, 4
      %v521 = vand.u32 %v519, 15
      %v522 = vsub.s32 0, %v521
      %v523 = vsel %vm517, %v522, %v521
      %vm524 = vcmp.lt.s32.totalorder %v384, 0
      %v525 = vsub.s32 0, %v384
      %v526 = vsel %vm524, %v525, %v384
      %v527 = vshrl.u32 %v526, 4
      %v528 = vand.u32 %v526, 15
      %v529 = vsub.s32 0, %v528
      %v530 = vsel %vm524, %v529, %v528
      %vm531 = vcmp.lt.s32.totalorder %v385, 0
      %v532 = vsub.s32 0, %v385
      %v533 = vsel %vm531, %v532, %v385
      %v534 = vshrl.u32 %v533, 4
      %v535 = vand.u32 %v533, 15
      %v536 = vsub.s32 0, %v535
      %v537 = vsel %vm531, %v536, %v535
      %vm538 = vcmp.lt.s32.totalorder %v386, 0
      %v539 = vsub.s32 0, %v386
      %v540 = vsel %vm538, %v539, %v386
      %v541 = vshrl.u32 %v540, 4
      %v542 = vand.u32 %v540, 15
      %v543 = vsub.s32 0, %v542
      %v544 = vsel %vm538, %v543, %v542
      %vm545 = vcmp.lt.s32.totalorder %v387, 0
      %v546 = vsub.s32 0, %v387
      %v547 = vsel %vm545, %v546, %v387
      %v548 = vshrl.u32 %v547, 4
      %v549 = vand.u32 %v547, 15
      %v550 = vsub.s32 0, %v549
      %v551 = vsel %vm545, %v550, %v549
      %vm552 = vcmp.lt.s32.totalorder %v388, 0
      %v553 = vsub.s32 0, %v388
      %v554 = vsel %vm552, %v553, %v388
      %v555 = vshrl.u32 %v554, 4
      %v556 = vand.u32 %v554, 15
      %v557 = vsub.s32 0, %v556
      %v558 = vsel %vm552, %v557, %v556
      %vm559 = vcmp.lt.s32.totalorder %v389, 0
      %v560 = vsub.s32 0, %v389
      %v561 = vsel %vm559, %v560, %v389
      %v562 = vshrl.u32 %v561, 4
      %v563 = vand.u32 %v561, 15
      %v564 = vsub.s32 0, %v563
      %v565 = vsel %vm559, %v564, %v563
      %vm566 = vcmp.lt.s32.totalorder %v390, 0
      %v567 = vsub.s32 0, %v390
      %v568 = vsel %vm566, %v567, %v390
      %v569 = vshrl.u32 %v568, 4
      %v570 = vand.u32 %v568, 15
      %v571 = vsub.s32 0, %v570
      %v572 = vsel %vm566, %v571, %v570
      %vm573 = vcmp.lt.s32.totalorder %v391, 0
      %v574 = vsub.s32 0, %v391
      %v575 = vsel %vm573, %v574, %v391
      %v576 = vshrl.u32 %v575, 4
      %v577 = vand.u32 %v575, 15
      %v578 = vsub.s32 0, %v577
      %v579 = vsel %vm573, %v578, %v577
      %vm580 = vcmp.lt.s32.totalorder %v392, 0
      %v581 = vsub.s32 0, %v392
      %v582 = vsel %vm580, %v581, %v392
      %v583 = vshrl.u32 %v582, 4
      %v584 = vand.u32 %v582, 15
      %v585 = vsub.s32 0, %v584
      %v586 = vsel %vm580, %v585, %v584
      %vm587 = vcmp.lt.s32.totalorder %v393, 0
      %v588 = vsub.s32 0, %v393
      %v589 = vsel %vm587, %v588, %v393
      %v590 = vshrl.u32 %v589, 4
      %v591 = vand.u32 %v589, 15
      %v592 = vsub.s32 0, %v591
      %v593 = vsel %vm587, %v592, %v591
      %vm594 = vcmp.lt.s32.totalorder %v394, 0
      %v595 = vsub.s32 0, %v394
      %v596 = vsel %vm594, %v595, %v394
      %v597 = vshrl.u32 %v596, 4
      %v598 = vand.u32 %v596, 15
      %v599 = vsub.s32 0, %v598
      %v600 = vsel %vm594, %v599, %v598
      %vm601 = vcmp.lt.s32.totalorder %v395, 0
      %v602 = vsub.s32 0, %v395
      %v603 = vsel %vm601, %v602, %v395
      %v604 = vshrl.u32 %v603, 4
      %v605 = vand.u32 %v603, 15
      %v606 = vsub.s32 0, %v605
      %v607 = vsel %vm601, %v606, %v605
      %vm608 = vcmp.lt.s32.totalorder %v396, 0
      %v609 = vsub.s32 0, %v396
      %v610 = vsel %vm608, %v609, %v396
      %v611 = vshrl.u32 %v610, 4
      %v612 = vand.u32 %v610, 15
      %v613 = vsub.s32 0, %v612
      %v614 = vsel %vm608, %v613, %v612
      %vm615 = vcmp.lt.s32.totalorder %v397, 0
      %v616 = vsub.s32 0, %v397
      %v617 = vsel %vm615, %v616, %v397
      %v618 = vshrl.u32 %v617, 4
      %v619 = vand.u32 %v617, 15
      %v620 = vsub.s32 0, %v619
      %v621 = vsel %vm615, %v620, %v619
      %vm622 = vcmp.ne.s32.totalorder %v404, 0
      %vm623 = vcmp.ne.s32.totalorder %v411, 0
      %vm624 = vcmp.ne.s32.totalorder %v418, 0
      %vm625 = vcmp.ne.s32.totalorder %v425, 0
      %vm626 = vcmp.ne.s32.totalorder %v432, 0
      %vm627 = vcmp.ne.s32.totalorder %v439, 0
      %vm628 = vcmp.ne.s32.totalorder %v446, 0
      %vm629 = vcmp.ne.s32.totalorder %v453, 0
      %vm630 = vcmp.ne.s32.totalorder %v460, 0
      %vm631 = vcmp.ne.s32.totalorder %v467, 0
      %vm632 = vcmp.ne.s32.totalorder %v474, 0
      %vm633 = vcmp.ne.s32.totalorder %v481, 0
      %vm634 = vcmp.ne.s32.totalorder %v488, 0
      %vm635 = vcmp.ne.s32.totalorder %v495, 0
      %vm636 = vcmp.ne.s32.totalorder %v502, 0
      %vm637 = vcmp.ne.s32.totalorder %v509, 0
      %vm638 = vcmp.ne.s32.totalorder %v516, 0
      %vm639 = vcmp.ne.s32.totalorder %v523, 0
      %vm640 = vcmp.ne.s32.totalorder %v530, 0
      %vm641 = vcmp.ne.s32.totalorder %v537, 0
      %vm642 = vcmp.ne.s32.totalorder %v544, 0
      %vm643 = vcmp.ne.s32.totalorder %v551, 0
      %vm644 = vcmp.ne.s32.totalorder %v558, 0
      %vm645 = vcmp.ne.s32.totalorder %v565, 0
      %vm646 = vcmp.ne.s32.totalorder %v572, 0
      %vm647 = vcmp.ne.s32.totalorder %v579, 0
      %vm648 = vcmp.ne.s32.totalorder %v586, 0
      %vm649 = vcmp.ne.s32.totalorder %v593, 0
      %vm650 = vcmp.ne.s32.totalorder %v600, 0
      %vm651 = vcmp.ne.s32.totalorder %v607, 0
      %vm652 = vcmp.ne.s32.totalorder %v614, 0
      %vm653 = vcmp.ne.s32.totalorder %v621, 0
      %vm654 = vcmp.lt.s32.totalorder %v404, 0
      %vm655 = vcmp.lt.s32.totalorder %v411, 0
      %vm656 = vcmp.lt.s32.totalorder %v418, 0
      %vm657 = vcmp.lt.s32.totalorder %v425, 0
      %vm658 = vcmp.lt.s32.totalorder %v432, 0
      %vm659 = vcmp.lt.s32.totalorder %v439, 0
      %vm660 = vcmp.lt.s32.totalorder %v446, 0
      %vm661 = vcmp.lt.s32.totalorder %v453, 0
      %vm662 = vcmp.lt.s32.totalorder %v460, 0
      %vm663 = vcmp.lt.s32.totalorder %v467, 0
      %vm664 = vcmp.lt.s32.totalorder %v474, 0
      %vm665 = vcmp.lt.s32.totalorder %v481, 0
      %vm666 = vcmp.lt.s32.totalorder %v488, 0
      %vm667 = vcmp.lt.s32.totalorder %v495, 0
      %vm668 = vcmp.lt.s32.totalorder %v502, 0
      %vm669 = vcmp.lt.s32.totalorder %v509, 0
      %vm670 = vcmp.lt.s32.totalorder %v516, 0
      %vm671 = vcmp.lt.s32.totalorder %v523, 0
      %vm672 = vcmp.lt.s32.totalorder %v530, 0
      %vm673 = vcmp.lt.s32.totalorder %v537, 0
      %vm674 = vcmp.lt.s32.totalorder %v544, 0
      %vm675 = vcmp.lt.s32.totalorder %v551, 0
      %vm676 = vcmp.lt.s32.totalorder %v558, 0
      %vm677 = vcmp.lt.s32.totalorder %v565, 0
      %vm678 = vcmp.lt.s32.totalorder %v572, 0
      %vm679 = vcmp.lt.s32.totalorder %v579, 0
      %vm680 = vcmp.lt.s32.totalorder %v586, 0
      %vm681 = vcmp.lt.s32.totalorder %v593, 0
      %vm682 = vcmp.lt.s32.totalorder %v600, 0
      %vm683 = vcmp.lt.s32.totalorder %v607, 0
      %vm684 = vcmp.lt.s32.totalorder %v614, 0
      %vm685 = vcmp.lt.s32.totalorder %v621, 0
      %vm686 = vmand %vm654, %vm622
      %vm687 = vmand %vm655, %vm623
      %vm688 = vmand %vm656, %vm624
      %vm689 = vmand %vm657, %vm625
      %vm690 = vmand %vm658, %vm626
      %vm691 = vmand %vm659, %vm627
      %vm692 = vmand %vm660, %vm628
      %vm693 = vmand %vm661, %vm629
      %vm694 = vmand %vm662, %vm630
      %vm695 = vmand %vm663, %vm631
      %vm696 = vmand %vm664, %vm632
      %vm697 = vmand %vm665, %vm633
      %vm698 = vmand %vm666, %vm634
      %vm699 = vmand %vm667, %vm635
      %vm700 = vmand %vm668, %vm636
      %vm701 = vmand %vm669, %vm637
      %vm702 = vmand %vm670, %vm638
      %vm703 = vmand %vm671, %vm639
      %vm704 = vmand %vm672, %vm640
      %vm705 = vmand %vm673, %vm641
      %vm706 = vmand %vm674, %vm642
      %vm707 = vmand %vm675, %vm643
      %vm708 = vmand %vm676, %vm644
      %vm709 = vmand %vm677, %vm645
      %vm710 = vmand %vm678, %vm646
      %vm711 = vmand %vm679, %vm647
      %vm712 = vmand %vm680, %vm648
      %vm713 = vmand %vm681, %vm649
      %vm714 = vmand %vm682, %vm650
      %vm715 = vmand %vm683, %vm651
      %vm716 = vmand %vm684, %vm652
      %vm717 = vmand %vm685, %vm653
      %v718 = vadd.s32 %v404, 16
      %v719 = vadd.s32 %v411, 16
      %v720 = vadd.s32 %v418, 16
      %v721 = vadd.s32 %v425, 16
      %v722 = vadd.s32 %v432, 16
      %v723 = vadd.s32 %v439, 16
      %v724 = vadd.s32 %v446, 16
      %v725 = vadd.s32 %v453, 16
      %v726 = vadd.s32 %v460, 16
      %v727 = vadd.s32 %v467, 16
      %v728 = vadd.s32 %v474, 16
      %v729 = vadd.s32 %v481, 16
      %v730 = vadd.s32 %v488, 16
      %v731 = vadd.s32 %v495, 16
      %v732 = vadd.s32 %v502, 16
      %v733 = vadd.s32 %v509, 16
      %v734 = vadd.s32 %v516, 16
      %v735 = vadd.s32 %v523, 16
      %v736 = vadd.s32 %v530, 16
      %v737 = vadd.s32 %v537, 16
      %v738 = vadd.s32 %v544, 16
      %v739 = vadd.s32 %v551, 16
      %v740 = vadd.s32 %v558, 16
      %v741 = vadd.s32 %v565, 16
      %v742 = vadd.s32 %v572, 16
      %v743 = vadd.s32 %v579, 16
      %v744 = vadd.s32 %v586, 16
      %v745 = vadd.s32 %v593, 16
      %v746 = vadd.s32 %v600, 16
      %v747 = vadd.s32 %v607, 16
      %v748 = vadd.s32 %v614, 16
      %v749 = vadd.s32 %v621, 16
      %v750 = vsel %vm686, %v718, %v404
      %v751 = vsel %vm687, %v719, %v411
      %v752 = vsel %vm688, %v720, %v418
      %v753 = vsel %vm689, %v721, %v425
      %v754 = vsel %vm690, %v722, %v432
      %v755 = vsel %vm691, %v723, %v439
      %v756 = vsel %vm692, %v724, %v446
      %v757 = vsel %vm693, %v725, %v453
      %v758 = vsel %vm694, %v726, %v460
      %v759 = vsel %vm695, %v727, %v467
      %v760 = vsel %vm696, %v728, %v474
      %v761 = vsel %vm697, %v729, %v481
      %v762 = vsel %vm698, %v730, %v488
      %v763 = vsel %vm699, %v731, %v495
      %v764 = vsel %vm700, %v732, %v502
      %v765 = vsel %vm701, %v733, %v509
      %v766 = vsel %vm702, %v734, %v516
      %v767 = vsel %vm703, %v735, %v523
      %v768 = vsel %vm704, %v736, %v530
      %v769 = vsel %vm705, %v737, %v537
      %v770 = vsel %vm706, %v738, %v544
      %v771 = vsel %vm707, %v739, %v551
      %v772 = vsel %vm708, %v740, %v558
      %v773 = vsel %vm709, %v741, %v565
      %v774 = vsel %vm710, %v742, %v572
      %v775 = vsel %vm711, %v743, %v579
      %v776 = vsel %vm712, %v744, %v586
      %v777 = vsel %vm713, %v745, %v593
      %v778 = vsel %vm714, %v746, %v600
      %v779 = vsel %vm715, %v747, %v607
      %v780 = vsel %vm716, %v748, %v614
      %v781 = vsel %vm717, %v749, %v621
      %vm782 = vcmp.ge.s32.totalorder %v750, 1
      %vm783 = vcmp.ge.s32.totalorder %v751, 1
      %vm784 = vcmp.ge.s32.totalorder %v752, 1
      %vm785 = vcmp.ge.s32.totalorder %v753, 1
      %vm786 = vcmp.ge.s32.totalorder %v754, 1
      %vm787 = vcmp.ge.s32.totalorder %v755, 1
      %vm788 = vcmp.ge.s32.totalorder %v756, 1
      %vm789 = vcmp.ge.s32.totalorder %v757, 1
      %vm790 = vcmp.ge.s32.totalorder %v758, 1
      %vm791 = vcmp.ge.s32.totalorder %v759, 1
      %vm792 = vcmp.ge.s32.totalorder %v760, 1
      %vm793 = vcmp.ge.s32.totalorder %v761, 1
      %vm794 = vcmp.ge.s32.totalorder %v762, 1
      %vm795 = vcmp.ge.s32.totalorder %v763, 1
      %vm796 = vcmp.ge.s32.totalorder %v764, 1
      %vm797 = vcmp.ge.s32.totalorder %v765, 1
      %vm798 = vcmp.ge.s32.totalorder %v766, 1
      %vm799 = vcmp.ge.s32.totalorder %v767, 1
      %vm800 = vcmp.ge.s32.totalorder %v768, 1
      %vm801 = vcmp.ge.s32.totalorder %v769, 1
      %vm802 = vcmp.ge.s32.totalorder %v770, 1
      %vm803 = vcmp.ge.s32.totalorder %v771, 1
      %vm804 = vcmp.ge.s32.totalorder %v772, 1
      %vm805 = vcmp.ge.s32.totalorder %v773, 1
      %vm806 = vcmp.ge.s32.totalorder %v774, 1
      %vm807 = vcmp.ge.s32.totalorder %v775, 1
      %vm808 = vcmp.ge.s32.totalorder %v776, 1
      %vm809 = vcmp.ge.s32.totalorder %v777, 1
      %vm810 = vcmp.ge.s32.totalorder %v778, 1
      %vm811 = vcmp.ge.s32.totalorder %v779, 1
      %vm812 = vcmp.ge.s32.totalorder %v780, 1
      %vm813 = vcmp.ge.s32.totalorder %v781, 1
      %vm814 = vcmp.le.s32.totalorder %v750, 14
      %vm815 = vcmp.le.s32.totalorder %v751, 14
      %vm816 = vcmp.le.s32.totalorder %v752, 14
      %vm817 = vcmp.le.s32.totalorder %v753, 14
      %vm818 = vcmp.le.s32.totalorder %v754, 14
      %vm819 = vcmp.le.s32.totalorder %v755, 14
      %vm820 = vcmp.le.s32.totalorder %v756, 14
      %vm821 = vcmp.le.s32.totalorder %v757, 14
      %vm822 = vcmp.le.s32.totalorder %v758, 14
      %vm823 = vcmp.le.s32.totalorder %v759, 14
      %vm824 = vcmp.le.s32.totalorder %v760, 14
      %vm825 = vcmp.le.s32.totalorder %v761, 14
      %vm826 = vcmp.le.s32.totalorder %v762, 14
      %vm827 = vcmp.le.s32.totalorder %v763, 14
      %vm828 = vcmp.le.s32.totalorder %v764, 14
      %vm829 = vcmp.le.s32.totalorder %v765, 14
      %vm830 = vcmp.le.s32.totalorder %v766, 14
      %vm831 = vcmp.le.s32.totalorder %v767, 14
      %vm832 = vcmp.le.s32.totalorder %v768, 14
      %vm833 = vcmp.le.s32.totalorder %v769, 14
      %vm834 = vcmp.le.s32.totalorder %v770, 14
      %vm835 = vcmp.le.s32.totalorder %v771, 14
      %vm836 = vcmp.le.s32.totalorder %v772, 14
      %vm837 = vcmp.le.s32.totalorder %v773, 14
      %vm838 = vcmp.le.s32.totalorder %v774, 14
      %vm839 = vcmp.le.s32.totalorder %v775, 14
      %vm840 = vcmp.le.s32.totalorder %v776, 14
      %vm841 = vcmp.le.s32.totalorder %v777, 14
      %vm842 = vcmp.le.s32.totalorder %v778, 14
      %vm843 = vcmp.le.s32.totalorder %v779, 14
      %vm844 = vcmp.le.s32.totalorder %v780, 14
      %vm845 = vcmp.le.s32.totalorder %v781, 14
      %v846 = vmul.f32 %v333, 0.5
      %v847 = vmul.f32 %v334, 0.5
      %v848 = vmul.f32 %v335, 0.5
      %v849 = vmul.f32 %v336, 0.5
      %v850 = vmul.f32 %v337, 0.5
      %v851 = vmul.f32 %v338, 0.5
      %v852 = vmul.f32 %v339, 0.5
      %v853 = vmul.f32 %v340, 0.5
      %v854 = vmul.f32 %v341, 0.5
      %v855 = vmul.f32 %v342, 0.5
      %v856 = vmul.f32 %v343, 0.5
      %v857 = vmul.f32 %v344, 0.5
      %v858 = vmul.f32 %v345, 0.5
      %v859 = vmul.f32 %v346, 0.5
      %v860 = vmul.f32 %v347, 0.5
      %v861 = vmul.f32 %v348, 0.5
      %v862 = vmul.f32 %v349, 0.5
      %v863 = vmul.f32 %v350, 0.5
      %v864 = vmul.f32 %v351, 0.5
      %v865 = vmul.f32 %v352, 0.5
      %v866 = vmul.f32 %v353, 0.5
      %v867 = vmul.f32 %v354, 0.5
      %v868 = vmul.f32 %v355, 0.5
      %v869 = vmul.f32 %v356, 0.5
      %v870 = vmul.f32 %v357, 0.5
      %v871 = vmul.f32 %v358, 0.5
      %v872 = vmul.f32 %v359, 0.5
      %v873 = vmul.f32 %v360, 0.5
      %v874 = vmul.f32 %v361, 0.5
      %v875 = vmul.f32 %v362, 0.5
      %v876 = vmul.f32 %v363, 0.5
      %v877 = vmul.f32 %v364, 0.5
      %v878 = vmul.f32 %v333, 0.70710677
      %v879 = vmul.f32 %v334, 0.70710677
      %v880 = vmul.f32 %v335, 0.70710677
      %v881 = vmul.f32 %v336, 0.70710677
      %v882 = vmul.f32 %v337, 0.70710677
      %v883 = vmul.f32 %v338, 0.70710677
      %v884 = vmul.f32 %v339, 0.70710677
      %v885 = vmul.f32 %v340, 0.70710677
      %v886 = vmul.f32 %v341, 0.70710677
      %v887 = vmul.f32 %v342, 0.70710677
      %v888 = vmul.f32 %v343, 0.70710677
      %v889 = vmul.f32 %v344, 0.70710677
      %v890 = vmul.f32 %v345, 0.70710677
      %v891 = vmul.f32 %v346, 0.70710677
      %v892 = vmul.f32 %v347, 0.70710677
      %v893 = vmul.f32 %v348, 0.70710677
      %v894 = vmul.f32 %v349, 0.70710677
      %v895 = vmul.f32 %v350, 0.70710677
      %v896 = vmul.f32 %v351, 0.70710677
      %v897 = vmul.f32 %v352, 0.70710677
      %v898 = vmul.f32 %v353, 0.70710677
      %v899 = vmul.f32 %v354, 0.70710677
      %v900 = vmul.f32 %v355, 0.70710677
      %v901 = vmul.f32 %v356, 0.70710677
      %v902 = vmul.f32 %v357, 0.70710677
      %v903 = vmul.f32 %v358, 0.70710677
      %v904 = vmul.f32 %v359, 0.70710677
      %v905 = vmul.f32 %v360, 0.70710677
      %v906 = vmul.f32 %v361, 0.70710677
      %v907 = vmul.f32 %v362, 0.70710677
      %v908 = vmul.f32 %v363, 0.70710677
      %v909 = vmul.f32 %v364, 0.70710677
      %v910 = verf.f32.pop %v878
      %v911 = verf.f32.pop %v879
      %v912 = verf.f32.pop %v880
      %v913 = verf.f32.pop %v881
      %v914 = verf.f32.pop %v882
      %v915 = verf.f32.pop %v883
      %v916 = verf.f32.pop %v884
      %v917 = verf.f32.pop %v885
      %v918 = verf.f32.pop %v886
      %v919 = verf.f32.pop %v887
      %v920 = verf.f32.pop %v888
      %v921 = verf.f32.pop %v889
      %v922 = verf.f32.pop %v890
      %v923 = verf.f32.pop %v891
      %v924 = verf.f32.pop %v892
      %v925 = verf.f32.pop %v893
      %v926 = verf.f32.pop %v894
      %v927 = verf.f32.pop %v895
      %v928 = verf.f32.pop %v896
      %v929 = verf.f32.pop %v897
      %v930 = verf.f32.pop %v898
      %v931 = verf.f32.pop %v899
      %v932 = verf.f32.pop %v900
      %v933 = verf.f32.pop %v901
      %v934 = verf.f32.pop %v902
      %v935 = verf.f32.pop %v903
      %v936 = verf.f32.pop %v904
      %v937 = verf.f32.pop %v905
      %v938 = verf.f32.pop %v906
      %v939 = verf.f32.pop %v907
      %v940 = verf.f32.pop %v908
      %v941 = verf.f32.pop %v909
      %v942 = vadd.f32 %v910, 1.0
      %v943 = vadd.f32 %v911, 1.0
      %v944 = vadd.f32 %v912, 1.0
      %v945 = vadd.f32 %v913, 1.0
      %v946 = vadd.f32 %v914, 1.0
      %v947 = vadd.f32 %v915, 1.0
      %v948 = vadd.f32 %v916, 1.0
      %v949 = vadd.f32 %v917, 1.0
      %v950 = vadd.f32 %v918, 1.0
      %v951 = vadd.f32 %v919, 1.0
      %v952 = vadd.f32 %v920, 1.0
      %v953 = vadd.f32 %v921, 1.0
      %v954 = vadd.f32 %v922, 1.0
      %v955 = vadd.f32 %v923, 1.0
      %v956 = vadd.f32 %v924, 1.0
      %v957 = vadd.f32 %v925, 1.0
      %v958 = vadd.f32 %v926, 1.0
      %v959 = vadd.f32 %v927, 1.0
      %v960 = vadd.f32 %v928, 1.0
      %v961 = vadd.f32 %v929, 1.0
      %v962 = vadd.f32 %v930, 1.0
      %v963 = vadd.f32 %v931, 1.0
      %v964 = vadd.f32 %v932, 1.0
      %v965 = vadd.f32 %v933, 1.0
      %v966 = vadd.f32 %v934, 1.0
      %v967 = vadd.f32 %v935, 1.0
      %v968 = vadd.f32 %v936, 1.0
      %v969 = vadd.f32 %v937, 1.0
      %v970 = vadd.f32 %v938, 1.0
      %v971 = vadd.f32 %v939, 1.0
      %v972 = vadd.f32 %v940, 1.0
      %v973 = vadd.f32 %v941, 1.0
      %v974 = vmul.f32 %v846, %v942
      %v975 = vmul.f32 %v847, %v943
      %v976 = vmul.f32 %v848, %v944
      %v977 = vmul.f32 %v849, %v945
      %v978 = vmul.f32 %v850, %v946
      %v979 = vmul.f32 %v851, %v947
      %v980 = vmul.f32 %v852, %v948
      %v981 = vmul.f32 %v853, %v949
      %v982 = vmul.f32 %v854, %v950
      %v983 = vmul.f32 %v855, %v951
      %v984 = vmul.f32 %v856, %v952
      %v985 = vmul.f32 %v857, %v953
      %v986 = vmul.f32 %v858, %v954
      %v987 = vmul.f32 %v859, %v955
      %v988 = vmul.f32 %v860, %v956
      %v989 = vmul.f32 %v861, %v957
      %v990 = vmul.f32 %v862, %v958
      %v991 = vmul.f32 %v863, %v959
      %v992 = vmul.f32 %v864, %v960
      %v993 = vmul.f32 %v865, %v961
      %v994 = vmul.f32 %v866, %v962
      %v995 = vmul.f32 %v867, %v963
      %v996 = vmul.f32 %v868, %v964
      %v997 = vmul.f32 %v869, %v965
      %v998 = vmul.f32 %v870, %v966
      %v999 = vmul.f32 %v871, %v967
      %v1000 = vmul.f32 %v872, %v968
      %v1001 = vmul.f32 %v873, %v969
      %v1002 = vmul.f32 %v874, %v970
      %v1003 = vmul.f32 %v875, %v971
      %v1004 = vmul.f32 %v876, %v972
      %v1005 = vmul.f32 %v877, %v973
      %v1006 = vld [vmem:[%s1] sm:$0xff]
      %v1007 = vld [vmem:[%s1 + $0x8] sm:$0xff]
      %v1008 = vld [vmem:[%s1 + $0x10] sm:$0xff]
      %v1009 = vld [vmem:[%s1 + $0x18] sm:$0xff]
      %v1010 = vld [vmem:[%s2] sm:$0x1]
      %v1012 = vlaneseq
      %v1013 = vshrl.u32 %v1012, 7
      %v1014 = vsub.s32 0, %v1013
      %v1015 = vrot.slane %v1010, %v1014
      %vm1017 = vcmask 261120
      %v1019 = vsel %vm1017, %v974, 0
      %v1022 = vsel %vm1017, %v975, 0
      %v1025 = vsel %vm1017, %v976, 0
      %v1028 = vsel %vm1017, %v977, 0
      %v1031 = vsel %vm1017, %v978, 0
      %v1034 = vsel %vm1017, %v979, 0
      %v1037 = vsel %vm1017, %v980, 0
      %v1040 = vsel %vm1017, %v981, 0
      %v1043 = vsel %vm1017, %v982, 0
      %v1046 = vsel %vm1017, %v983, 0
      %v1049 = vsel %vm1017, %v984, 0
      %v1052 = vsel %vm1017, %v985, 0
      %v1055 = vsel %vm1017, %v986, 0
      %v1058 = vsel %vm1017, %v987, 0
      %v1061 = vsel %vm1017, %v988, 0
      %v1064 = vsel %vm1017, %v989, 0
      %v1067 = vsel %vm1017, %v990, 0
      %v1070 = vsel %vm1017, %v991, 0
      %v1073 = vsel %vm1017, %v992, 0
      %v1076 = vsel %vm1017, %v993, 0
      %v1079 = vsel %vm1017, %v994, 0
      %v1082 = vsel %vm1017, %v995, 0
      %v1085 = vsel %vm1017, %v996, 0
      %v1088 = vsel %vm1017, %v997, 0
      %v1091 = vsel %vm1017, %v998, 0
      %v1094 = vsel %vm1017, %v999, 0
      %v1097 = vsel %vm1017, %v1000, 0
      %v1100 = vsel %vm1017, %v1001, 0
      %v1103 = vsel %vm1017, %v1002, 0
      %v1106 = vsel %vm1017, %v1003, 0
      %v1109 = vsel %vm1017, %v1004, 0
      %v1112 = vsel %vm1017, %v1005, 0
      %1114 = vmatprep.subr.mxu0 0.0
      %1115 = vmatpush1.msra.mxu0 0.0
      %1116 = vmatprep.subr.mxu0 0.0
      %1117 = vmatpush1.msra.mxu0 0.0
      %1118 = vmatprep.subr.mxu0 0.0
      %1119 = vmatpush1.msra.mxu0 0.0
      %1120 = vmatprep.subr.mxu0 0.0
      %1121 = vmatpush1.msra.mxu0 0.0
      %1122 = vmatprep.subr.mxu0 0.0
      %1123 = vmatpush1.msra.mxu0 0.0
      %1124 = vmatprep.subr.mxu0 0.0
      %1125 = vmatpush1.msra.mxu0 0.0
      %1126 = vmatprep.subr.mxu0 0.0
      %1127 = vmatpush1.msra.mxu0 0.0
      %1128 = vmatprep.subr.mxu0 0.0
      %1129 = vmatpush1.msra.mxu0 0.0
      %1130 = vmatprep.subr.mxu0 0.0
      %1131 = vmatpush1.msra.mxu0 0.0
      %1132 = vmatprep.subr.mxu0 0.0
      %1133 = vmatpush1.msra.mxu0 0.0
      %1134 = vmatprep.subr.mxu0 0.0
      %1135 = vmatpush1.msra.mxu0 0.0
      %1136 = vmatprep.subr.mxu0 0.0
      %1137 = vmatpush1.msra.mxu0 0.0
      %1138 = vmatprep.subr.mxu0 0.0
      %1139 = vmatpush1.msra.mxu0 %v1009
      %1140 = vmatprep.subr.mxu0 0.0
      %1141 = vmatpush1.msra.mxu0 %v1008
      %1142 = vmatprep.subr.mxu0 0.0
      %1143 = vmatpush1.msra.mxu0 %v1007
      %1144 = vmatprep.subr.mxu0 0.0
      %1145 = vmatpush1.msra.mxu0 %v1006
      %1146 = vmatprep.subr.mxu0 0.0
      %1147 = vmatpush2.msra.mxu0 0.0
      %1148 = vmatprep.subr.mxu0 0.0
      %1149 = vmatpush2.msra.mxu0 0.0
      %1150 = vmatprep.subr.mxu0 0.0
      %1151 = vmatpush2.msra.mxu0 0.0
      %1152 = vmatprep.subr.mxu0 0.0
      %1153 = vmatpush2.msra.mxu0 0.0
      %1154 = vmatprep.subr.mxu0 0.0
      %1155 = vmatpush2.msra.mxu0 0.0
      %1156 = vmatprep.subr.mxu0 0.0
      %1157 = vmatpush2.msra.mxu0 0.0
      %1158 = vmatprep.subr.mxu0 0.0
      %1159 = vmatpush2.msra.mxu0 0.0
      %1160 = vmatprep.subr.mxu0 0.0
      %1161 = vmatpush2.msra.mxu0 0.0
      %1162 = vmatprep.subr.mxu0 0.0
      %1163 = vmatpush2.msra.mxu0 0.0
      %1164 = vmatprep.subr.mxu0 0.0
      %1165 = vmatpush2.msra.mxu0 0.0
      %1166 = vmatprep.subr.mxu0 0.0
      %1167 = vmatpush2.msra.mxu0 0.0
      %1168 = vmatprep.subr.mxu0 0.0
      %1169 = vmatpush2.msra.mxu0 0.0
      %1170 = vmatprep.subr.mxu0 0.0
      %1171 = vmatpush2.msra.mxu0 0.0
      %1172 = vmatprep.subr.mxu0 0.0
      %1173 = vmatpush2.msra.mxu0 0.0
      %1174 = vmatprep.subr.mxu0 0.0
      %1175 = vmatpush2.msra.mxu0 0.0
      %1176 = vmatprep.subr.mxu0 0.0
      %1177 = vmatpush2.msra.mxu0 0.0
      %1178 = vmatprep.mubr.f32.mxu0 0.0
      %1179 = vmatmul.mubr.f32.gmra.mxu0 %v1019
      %v1180 = vpop.f32.mrf.mxu0
      %v1181 = vadd.f32 %v1015, %v1180
      %v1182 = vpop.f32.mrf.mxu0
      %1183 = vmatprep.mubr.f32.mxu0 0.0
      %1184 = vmatmul.mubr.f32.gmra.mxu0 %v1022
      %v1185 = vpop.f32.mrf.mxu0
      %v1186 = vadd.f32 %v1015, %v1185
      %v1187 = vpop.f32.mrf.mxu0
      %1188 = vmatprep.mubr.f32.mxu0 0.0
      %1189 = vmatmul.mubr.f32.gmra.mxu0 %v1025
      %v1190 = vpop.f32.mrf.mxu0
      %v1191 = vadd.f32 %v1015, %v1190
      %v1192 = vpop.f32.mrf.mxu0
      %1193 = vmatprep.mubr.f32.mxu0 0.0
      %1194 = vmatmul.mubr.f32.gmra.mxu0 %v1028
      %v1195 = vpop.f32.mrf.mxu0
      %v1196 = vadd.f32 %v1015, %v1195
      %v1197 = vpop.f32.mrf.mxu0
      %1198 = vmatprep.mubr.f32.mxu0 0.0
      %1199 = vmatmul.mubr.f32.gmra.mxu0 %v1031
      %v1200 = vpop.f32.mrf.mxu0
      %v1201 = vadd.f32 %v1015, %v1200
      %v1202 = vpop.f32.mrf.mxu0
      %1203 = vmatprep.mubr.f32.mxu0 0.0
      %1204 = vmatmul.mubr.f32.gmra.mxu0 %v1034
      %v1205 = vpop.f32.mrf.mxu0
      %v1206 = vadd.f32 %v1015, %v1205
      %v1207 = vpop.f32.mrf.mxu0
      %1208 = vmatprep.mubr.f32.mxu0 0.0
      %1209 = vmatmul.mubr.f32.gmra.mxu0 %v1037
      %v1210 = vpop.f32.mrf.mxu0
      %v1211 = vadd.f32 %v1015, %v1210
      %v1212 = vpop.f32.mrf.mxu0
      %1213 = vmatprep.mubr.f32.mxu0 0.0
      %1214 = vmatmul.mubr.f32.gmra.mxu0 %v1040
      %v1215 = vpop.f32.mrf.mxu0
      %v1216 = vadd.f32 %v1015, %v1215
      %v1217 = vpop.f32.mrf.mxu0
      %1218 = vmatprep.mubr.f32.mxu0 0.0
      %1219 = vmatmul.mubr.f32.gmra.mxu0 %v1043
      %v1220 = vpop.f32.mrf.mxu0
      %v1221 = vadd.f32 %v1015, %v1220
      %v1222 = vpop.f32.mrf.mxu0
      %1223 = vmatprep.mubr.f32.mxu0 0.0
      %1224 = vmatmul.mubr.f32.gmra.mxu0 %v1046
      %v1225 = vpop.f32.mrf.mxu0
      %v1226 = vadd.f32 %v1015, %v1225
      %v1227 = vpop.f32.mrf.mxu0
      %1228 = vmatprep.mubr.f32.mxu0 0.0
      %1229 = vmatmul.mubr.f32.gmra.mxu0 %v1049
      %v1230 = vpop.f32.mrf.mxu0
      %v1231 = vadd.f32 %v1015, %v1230
      %v1232 = vpop.f32.mrf.mxu0
      %1233 = vmatprep.mubr.f32.mxu0 0.0
      %1234 = vmatmul.mubr.f32.gmra.mxu0 %v1052
      %v1235 = vpop.f32.mrf.mxu0
      %v1236 = vadd.f32 %v1015, %v1235
      %v1237 = vpop.f32.mrf.mxu0
      %1238 = vmatprep.mubr.f32.mxu0 0.0
      %1239 = vmatmul.mubr.f32.gmra.mxu0 %v1055
      %v1240 = vpop.f32.mrf.mxu0
      %v1241 = vadd.f32 %v1015, %v1240
      %v1242 = vpop.f32.mrf.mxu0
      %1243 = vmatprep.mubr.f32.mxu0 0.0
      %1244 = vmatmul.mubr.f32.gmra.mxu0 %v1058
      %v1245 = vpop.f32.mrf.mxu0
      %v1246 = vadd.f32 %v1015, %v1245
      %v1247 = vpop.f32.mrf.mxu0
      %1248 = vmatprep.mubr.f32.mxu0 0.0
      %1249 = vmatmul.mubr.f32.gmra.mxu0 %v1061
      %v1250 = vpop.f32.mrf.mxu0
      %v1251 = vadd.f32 %v1015, %v1250
      %v1252 = vpop.f32.mrf.mxu0
      %1253 = vmatprep.mubr.f32.mxu0 0.0
      %1254 = vmatmul.mubr.f32.gmra.mxu0 %v1064
      %v1255 = vpop.f32.mrf.mxu0
      %v1256 = vadd.f32 %v1015, %v1255
      %v1257 = vpop.f32.mrf.mxu0
      %1258 = vmatprep.mubr.f32.mxu0 0.0
      %1259 = vmatmul.mubr.f32.gmra.mxu0 %v1067
      %v1260 = vpop.f32.mrf.mxu0
      %v1261 = vadd.f32 %v1015, %v1260
      %v1262 = vpop.f32.mrf.mxu0
      %1263 = vmatprep.mubr.f32.mxu0 0.0
      %1264 = vmatmul.mubr.f32.gmra.mxu0 %v1070
      %v1265 = vpop.f32.mrf.mxu0
      %v1266 = vadd.f32 %v1015, %v1265
      %v1267 = vpop.f32.mrf.mxu0
      %1268 = vmatprep.mubr.f32.mxu0 0.0
      %1269 = vmatmul.mubr.f32.gmra.mxu0 %v1073
      %v1270 = vpop.f32.mrf.mxu0
      %v1271 = vadd.f32 %v1015, %v1270
      %v1272 = vpop.f32.mrf.mxu0
      %1273 = vmatprep.mubr.f32.mxu0 0.0
      %1274 = vmatmul.mubr.f32.gmra.mxu0 %v1076
      %v1275 = vpop.f32.mrf.mxu0
      %v1276 = vadd.f32 %v1015, %v1275
      %v1277 = vpop.f32.mrf.mxu0
      %1278 = vmatprep.mubr.f32.mxu0 0.0
      %1279 = vmatmul.mubr.f32.gmra.mxu0 %v1079
      %v1280 = vpop.f32.mrf.mxu0
      %v1281 = vadd.f32 %v1015, %v1280
      %v1282 = vpop.f32.mrf.mxu0
      %1283 = vmatprep.mubr.f32.mxu0 0.0
      %1284 = vmatmul.mubr.f32.gmra.mxu0 %v1082
      %v1285 = vpop.f32.mrf.mxu0
      %v1286 = vadd.f32 %v1015, %v1285
      %v1287 = vpop.f32.mrf.mxu0
      %1288 = vmatprep.mubr.f32.mxu0 0.0
      %1289 = vmatmul.mubr.f32.gmra.mxu0 %v1085
      %v1290 = vpop.f32.mrf.mxu0
      %v1291 = vadd.f32 %v1015, %v1290
      %v1292 = vpop.f32.mrf.mxu0
      %1293 = vmatprep.mubr.f32.mxu0 0.0
      %1294 = vmatmul.mubr.f32.gmra.mxu0 %v1088
      %v1295 = vpop.f32.mrf.mxu0
      %v1296 = vadd.f32 %v1015, %v1295
      %v1297 = vpop.f32.mrf.mxu0
      %1298 = vmatprep.mubr.f32.mxu0 0.0
      %1299 = vmatmul.mubr.f32.gmra.mxu0 %v1091
      %v1300 = vpop.f32.mrf.mxu0
      %v1301 = vadd.f32 %v1015, %v1300
      %v1302 = vpop.f32.mrf.mxu0
      %1303 = vmatprep.mubr.f32.mxu0 0.0
      %1304 = vmatmul.mubr.f32.gmra.mxu0 %v1094
      %v1305 = vpop.f32.mrf.mxu0
      %v1306 = vadd.f32 %v1015, %v1305
      %v1307 = vpop.f32.mrf.mxu0
      %1308 = vmatprep.mubr.f32.mxu0 0.0
      %1309 = vmatmul.mubr.f32.gmra.mxu0 %v1097
      %v1310 = vpop.f32.mrf.mxu0
      %v1311 = vadd.f32 %v1015, %v1310
      %v1312 = vpop.f32.mrf.mxu0
      %1313 = vmatprep.mubr.f32.mxu0 0.0
      %1314 = vmatmul.mubr.f32.gmra.mxu0 %v1100
      %v1315 = vpop.f32.mrf.mxu0
      %v1316 = vadd.f32 %v1015, %v1315
      %v1317 = vpop.f32.mrf.mxu0
      %1318 = vmatprep.mubr.f32.mxu0 0.0
      %1319 = vmatmul.mubr.f32.gmra.mxu0 %v1103
      %v1320 = vpop.f32.mrf.mxu0
      %v1321 = vadd.f32 %v1015, %v1320
      %v1322 = vpop.f32.mrf.mxu0
      %1323 = vmatprep.mubr.f32.mxu0 0.0
      %1324 = vmatmul.mubr.f32.gmra.mxu0 %v1106
      %v1325 = vpop.f32.mrf.mxu0
      %v1326 = vadd.f32 %v1015, %v1325
      %v1327 = vpop.f32.mrf.mxu0
      %1328 = vmatprep.mubr.f32.mxu0 0.0
      %1329 = vmatmul.mubr.f32.gmra.mxu0 %v1109
      %v1330 = vpop.f32.mrf.mxu0
      %v1331 = vadd.f32 %v1015, %v1330
      %v1332 = vpop.f32.mrf.mxu0
      %1333 = vmatprep.mubr.f32.mxu0 0.0
      %1334 = vmatmul.mubr.f32.gmra.mxu0 %v1112
      %v1335 = vpop.f32.mrf.mxu0
      %v1336 = vadd.f32 %v1015, %v1335
      %v1337 = vpop.f32.mrf.mxu0
      %1338 = vdwg.mxu0
      %v1339 = vmul.f32 %v1181, 0.5
      %v1340 = vmul.f32 %v1186, 0.5
      %v1341 = vmul.f32 %v1191, 0.5
      %v1342 = vmul.f32 %v1196, 0.5
      %v1343 = vmul.f32 %v1201, 0.5
      %v1344 = vmul.f32 %v1206, 0.5
      %v1345 = vmul.f32 %v1211, 0.5
      %v1346 = vmul.f32 %v1216, 0.5
      %v1347 = vmul.f32 %v1221, 0.5
      %v1348 = vmul.f32 %v1226, 0.5
      %v1349 = vmul.f32 %v1231, 0.5
      %v1350 = vmul.f32 %v1236, 0.5
      %v1351 = vmul.f32 %v1241, 0.5
      %v1352 = vmul.f32 %v1246, 0.5
      %v1353 = vmul.f32 %v1251, 0.5
      %v1354 = vmul.f32 %v1256, 0.5
      %v1355 = vmul.f32 %v1261, 0.5
      %v1356 = vmul.f32 %v1266, 0.5
      %v1357 = vmul.f32 %v1271, 0.5
      %v1358 = vmul.f32 %v1276, 0.5
      %v1359 = vmul.f32 %v1281, 0.5
      %v1360 = vmul.f32 %v1286, 0.5
      %v1361 = vmul.f32 %v1291, 0.5
      %v1362 = vmul.f32 %v1296, 0.5
      %v1363 = vmul.f32 %v1301, 0.5
      %v1364 = vmul.f32 %v1306, 0.5
      %v1365 = vmul.f32 %v1311, 0.5
      %v1366 = vmul.f32 %v1316, 0.5
      %v1367 = vmul.f32 %v1321, 0.5
      %v1368 = vmul.f32 %v1326, 0.5
      %v1369 = vmul.f32 %v1331, 0.5
      %v1370 = vmul.f32 %v1336, 0.5
      %v1371 = vmul.f32 %v1181, 0.70710677
      %v1372 = vmul.f32 %v1186, 0.70710677
      %v1373 = vmul.f32 %v1191, 0.70710677
      %v1374 = vmul.f32 %v1196, 0.70710677
      %v1375 = vmul.f32 %v1201, 0.70710677
      %v1376 = vmul.f32 %v1206, 0.70710677
      %v1377 = vmul.f32 %v1211, 0.70710677
      %v1378 = vmul.f32 %v1216, 0.70710677
      %v1379 = vmul.f32 %v1221, 0.70710677
      %v1380 = vmul.f32 %v1226, 0.70710677
      %v1381 = vmul.f32 %v1231, 0.70710677
      %v1382 = vmul.f32 %v1236, 0.70710677
      %v1383 = vmul.f32 %v1241, 0.70710677
      %v1384 = vmul.f32 %v1246, 0.70710677
      %v1385 = vmul.f32 %v1251, 0.70710677
      %v1386 = vmul.f32 %v1256, 0.70710677
      %v1387 = vmul.f32 %v1261, 0.70710677
      %v1388 = vmul.f32 %v1266, 0.70710677
      %v1389 = vmul.f32 %v1271, 0.70710677
      %v1390 = vmul.f32 %v1276, 0.70710677
      %v1391 = vmul.f32 %v1281, 0.70710677
      %v1392 = vmul.f32 %v1286, 0.70710677
      %v1393 = vmul.f32 %v1291, 0.70710677
      %v1394 = vmul.f32 %v1296, 0.70710677
      %v1395 = vmul.f32 %v1301, 0.70710677
      %v1396 = vmul.f32 %v1306, 0.70710677
      %v1397 = vmul.f32 %v1311, 0.70710677
      %v1398 = vmul.f32 %v1316, 0.70710677
      %v1399 = vmul.f32 %v1321, 0.70710677
      %v1400 = vmul.f32 %v1326, 0.70710677
      %v1401 = vmul.f32 %v1331, 0.70710677
      %v1402 = vmul.f32 %v1336, 0.70710677
      %v1403 = verf.f32.pop %v1371
      %v1404 = verf.f32.pop %v1372
      %v1405 = verf.f32.pop %v1373
      %v1406 = verf.f32.pop %v1374
      %v1407 = verf.f32.pop %v1375
      %v1408 = verf.f32.pop %v1376
      %v1409 = verf.f32.pop %v1377
      %v1410 = verf.f32.pop %v1378
      %v1411 = verf.f32.pop %v1379
      %v1412 = verf.f32.pop %v1380
      %v1413 = verf.f32.pop %v1381
      %v1414 = verf.f32.pop %v1382
      %v1415 = verf.f32.pop %v1383
      %v1416 = verf.f32.pop %v1384
      %v1417 = verf.f32.pop %v1385
      %v1418 = verf.f32.pop %v1386
      %v1419 = verf.f32.pop %v1387
      %v1420 = verf.f32.pop %v1388
      %v1421 = verf.f32.pop %v1389
      %v1422 = verf.f32.pop %v1390
      %v1423 = verf.f32.pop %v1391
      %v1424 = verf.f32.pop %v1392
      %v1425 = verf.f32.pop %v1393
      %v1426 = verf.f32.pop %v1394
      %v1427 = verf.f32.pop %v1395
      %v1428 = verf.f32.pop %v1396
      %v1429 = verf.f32.pop %v1397
      %v1430 = verf.f32.pop %v1398
      %v1431 = verf.f32.pop %v1399
      %v1432 = verf.f32.pop %v1400
      %v1433 = verf.f32.pop %v1401
      %v1434 = verf.f32.pop %v1402
      %v1435 = vadd.f32 %v1403, 1.0
      %v1436 = vadd.f32 %v1404, 1.0
      %v1437 = vadd.f32 %v1405, 1.0
      %v1438 = vadd.f32 %v1406, 1.0
      %v1439 = vadd.f32 %v1407, 1.0
      %v1440 = vadd.f32 %v1408, 1.0
      %v1441 = vadd.f32 %v1409, 1.0
      %v1442 = vadd.f32 %v1410, 1.0
      %v1443 = vadd.f32 %v1411, 1.0
      %v1444 = vadd.f32 %v1412, 1.0
      %v1445 = vadd.f32 %v1413, 1.0
      %v1446 = vadd.f32 %v1414, 1.0
      %v1447 = vadd.f32 %v1415, 1.0
      %v1448 = vadd.f32 %v1416, 1.0
      %v1449 = vadd.f32 %v1417, 1.0
      %v1450 = vadd.f32 %v1418, 1.0
      %v1451 = vadd.f32 %v1419, 1.0
      %v1452 = vadd.f32 %v1420, 1.0
      %v1453 = vadd.f32 %v1421, 1.0
      %v1454 = vadd.f32 %v1422, 1.0
      %v1455 = vadd.f32 %v1423, 1.0
      %v1456 = vadd.f32 %v1424, 1.0
      %v1457 = vadd.f32 %v1425, 1.0
      %v1458 = vadd.f32 %v1426, 1.0
      %v1459 = vadd.f32 %v1427, 1.0
      %v1460 = vadd.f32 %v1428, 1.0
      %v1461 = vadd.f32 %v1429, 1.0
      %v1462 = vadd.f32 %v1430, 1.0
      %v1463 = vadd.f32 %v1431, 1.0
      %v1464 = vadd.f32 %v1432, 1.0
      %v1465 = vadd.f32 %v1433, 1.0
      %v1466 = vadd.f32 %v1434, 1.0
      %v1467 = vmul.f32 %v1339, %v1435
      %v1468 = vmul.f32 %v1340, %v1436
      %v1469 = vmul.f32 %v1341, %v1437
      %v1470 = vmul.f32 %v1342, %v1438
      %v1471 = vmul.f32 %v1343, %v1439
      %v1472 = vmul.f32 %v1344, %v1440
      %v1473 = vmul.f32 %v1345, %v1441
      %v1474 = vmul.f32 %v1346, %v1442
      %v1475 = vmul.f32 %v1347, %v1443
      %v1476 = vmul.f32 %v1348, %v1444
      %v1477 = vmul.f32 %v1349, %v1445
      %v1478 = vmul.f32 %v1350, %v1446
      %v1479 = vmul.f32 %v1351, %v1447
      %v1480 = vmul.f32 %v1352, %v1448
      %v1481 = vmul.f32 %v1353, %v1449
      %v1482 = vmul.f32 %v1354, %v1450
      %v1483 = vmul.f32 %v1355, %v1451
      %v1484 = vmul.f32 %v1356, %v1452
      %v1485 = vmul.f32 %v1357, %v1453
      %v1486 = vmul.f32 %v1358, %v1454
      %v1487 = vmul.f32 %v1359, %v1455
      %v1488 = vmul.f32 %v1360, %v1456
      %v1489 = vmul.f32 %v1361, %v1457
      %v1490 = vmul.f32 %v1362, %v1458
      %v1491 = vmul.f32 %v1363, %v1459
      %v1492 = vmul.f32 %v1364, %v1460
      %v1493 = vmul.f32 %v1365, %v1461
      %v1494 = vmul.f32 %v1366, %v1462
      %v1495 = vmul.f32 %v1367, %v1463
      %v1496 = vmul.f32 %v1368, %v1464
      %v1497 = vmul.f32 %v1369, %v1465
      %v1498 = vmul.f32 %v1370, %v1466
      %vm1529 = vcmask 1040384
      %v1530 = vrot.slane %v1467, 7
      %v1531 = vrot.slane %v1468, 7
      %v1532 = vsel %vm1529, %v1530, %v1531
      %v1533 = vrot.slane %v1469, 7
      %v1534 = vsel %vm1529, %v1531, %v1533
      %v1535 = vrot.slane %v1470, 7
      %v1536 = vsel %vm1529, %v1533, %v1535
      %v1537 = vrot.slane %v1471, 7
      %v1538 = vsel %vm1529, %v1535, %v1537
      %v1539 = vrot.slane %v1472, 7
      %v1540 = vsel %vm1529, %v1537, %v1539
      %v1541 = vrot.slane %v1473, 7
      %v1542 = vsel %vm1529, %v1539, %v1541
      %v1543 = vrot.slane %v1474, 7
      %v1544 = vsel %vm1529, %v1541, %v1543
      %v1545 = vrot.slane %v1475, 7
      %v1546 = vsel %vm1529, %v1543, %v1545
      %v1547 = vrot.slane %v1476, 7
      %v1548 = vsel %vm1529, %v1545, %v1547
      %v1549 = vrot.slane %v1477, 7
      %v1550 = vsel %vm1529, %v1547, %v1549
      %v1551 = vrot.slane %v1478, 7
      %v1552 = vsel %vm1529, %v1549, %v1551
      %v1553 = vrot.slane %v1479, 7
      %v1554 = vsel %vm1529, %v1551, %v1553
      %v1555 = vrot.slane %v1480, 7
      %v1556 = vsel %vm1529, %v1553, %v1555
      %v1557 = vrot.slane %v1481, 7
      %v1558 = vsel %vm1529, %v1555, %v1557
      %v1559 = vrot.slane %v1482, 7
      %v1560 = vsel %vm1529, %v1557, %v1559
      %v1561 = vrot.slane %v1483, 7
      %v1562 = vsel %vm1529, %v1559, %v1561
      %v1563 = vrot.slane %v1484, 7
      %v1564 = vsel %vm1529, %v1561, %v1563
      %v1565 = vrot.slane %v1485, 7
      %v1566 = vsel %vm1529, %v1563, %v1565
      %v1567 = vrot.slane %v1486, 7
      %v1568 = vsel %vm1529, %v1565, %v1567
      %v1569 = vrot.slane %v1487, 7
      %v1570 = vsel %vm1529, %v1567, %v1569
      %v1571 = vrot.slane %v1488, 7
      %v1572 = vsel %vm1529, %v1569, %v1571
      %v1573 = vrot.slane %v1489, 7
      %v1574 = vsel %vm1529, %v1571, %v1573
      %v1575 = vrot.slane %v1490, 7
      %v1576 = vsel %vm1529, %v1573, %v1575
      %v1577 = vrot.slane %v1491, 7
      %v1578 = vsel %vm1529, %v1575, %v1577
      %v1579 = vrot.slane %v1492, 7
      %v1580 = vsel %vm1529, %v1577, %v1579
      %v1581 = vrot.slane %v1493, 7
      %v1582 = vsel %vm1529, %v1579, %v1581
      %v1583 = vrot.slane %v1494, 7
      %v1584 = vsel %vm1529, %v1581, %v1583
      %v1585 = vrot.slane %v1495, 7
      %v1586 = vsel %vm1529, %v1583, %v1585
      %v1587 = vrot.slane %v1496, 7
      %v1588 = vsel %vm1529, %v1585, %v1587
      %v1619 = vsel %vm1529, 0.0, %v1530
      %v1620 = vsel %vm782, 1, 0
      %v1621 = vsel %vm783, 1, 0
      %v1622 = vsel %vm784, 1, 0
      %v1623 = vsel %vm785, 1, 0
      %v1624 = vsel %vm786, 1, 0
      %v1625 = vsel %vm787, 1, 0
      %v1626 = vsel %vm788, 1, 0
      %v1627 = vsel %vm789, 1, 0
      %v1628 = vsel %vm790, 1, 0
      %v1629 = vsel %vm791, 1, 0
      %v1630 = vsel %vm792, 1, 0
      %v1631 = vsel %vm793, 1, 0
      %v1632 = vsel %vm794, 1, 0
      %v1633 = vsel %vm795, 1, 0
      %v1634 = vsel %vm796, 1, 0
      %v1635 = vsel %vm797, 1, 0
      %v1636 = vsel %vm798, 1, 0
      %v1637 = vsel %vm799, 1, 0
      %v1638 = vsel %vm800, 1, 0
      %v1639 = vsel %vm801, 1, 0
      %v1640 = vsel %vm802, 1, 0
      %v1641 = vsel %vm803, 1, 0
      %v1642 = vsel %vm804, 1, 0
      %v1643 = vsel %vm805, 1, 0
      %v1644 = vsel %vm806, 1, 0
      %v1645 = vsel %vm807, 1, 0
      %v1646 = vsel %vm808, 1, 0
      %v1647 = vsel %vm809, 1, 0
      %v1648 = vsel %vm810, 1, 0
      %v1649 = vsel %vm811, 1, 0
      %v1650 = vsel %vm812, 1, 0
      %v1651 = vsel %vm813, 1, 0
      %vm1652 = vcmp.eq.s32.totalorder %v1620, 1
      %vm1653 = vcmp.eq.s32.totalorder %v1621, 1
      %vm1654 = vcmp.eq.s32.totalorder %v1622, 1
      %vm1655 = vcmp.eq.s32.totalorder %v1623, 1
      %vm1656 = vcmp.eq.s32.totalorder %v1624, 1
      %vm1657 = vcmp.eq.s32.totalorder %v1625, 1
      %vm1658 = vcmp.eq.s32.totalorder %v1626, 1
      %vm1659 = vcmp.eq.s32.totalorder %v1627, 1
      %vm1660 = vcmp.eq.s32.totalorder %v1628, 1
      %vm1661 = vcmp.eq.s32.totalorder %v1629, 1
      %vm1662 = vcmp.eq.s32.totalorder %v1630, 1
      %vm1663 = vcmp.eq.s32.totalorder %v1631, 1
      %vm1664 = vcmp.eq.s32.totalorder %v1632, 1
      %vm1665 = vcmp.eq.s32.totalorder %v1633, 1
      %vm1666 = vcmp.eq.s32.totalorder %v1634, 1
      %vm1667 = vcmp.eq.s32.totalorder %v1635, 1
      %vm1668 = vcmp.eq.s32.totalorder %v1636, 1
      %vm1669 = vcmp.eq.s32.totalorder %v1637, 1
      %vm1670 = vcmp.eq.s32.totalorder %v1638, 1
      %vm1671 = vcmp.eq.s32.totalorder %v1639, 1
      %vm1672 = vcmp.eq.s32.totalorder %v1640, 1
      %vm1673 = vcmp.eq.s32.totalorder %v1641, 1
      %vm1674 = vcmp.eq.s32.totalorder %v1642, 1
      %vm1675 = vcmp.eq.s32.totalorder %v1643, 1
      %vm1676 = vcmp.eq.s32.totalorder %v1644, 1
      %vm1677 = vcmp.eq.s32.totalorder %v1645, 1
      %vm1678 = vcmp.eq.s32.totalorder %v1646, 1
      %vm1679 = vcmp.eq.s32.totalorder %v1647, 1
      %vm1680 = vcmp.eq.s32.totalorder %v1648, 1
      %vm1681 = vcmp.eq.s32.totalorder %v1649, 1
      %vm1682 = vcmp.eq.s32.totalorder %v1650, 1
      %vm1683 = vcmp.eq.s32.totalorder %v1651, 1
      %v1684 = vsel %vm1654, %v1619, 0.0
      %v1685 = vsel %vm1655, %v1532, 0.0
      %v1686 = vsel %vm1656, %v1534, 0.0
      %v1687 = vsel %vm1657, %v1536, 0.0
      %v1688 = vsel %vm1658, %v1538, 0.0
      %v1689 = vsel %vm1659, %v1540, 0.0
      %v1690 = vsel %vm1660, %v1542, 0.0
      %v1691 = vsel %vm1661, %v1544, 0.0
      %v1692 = vsel %vm1662, %v1546, 0.0
      %v1693 = vsel %vm1663, %v1548, 0.0
      %v1694 = vsel %vm1664, %v1550, 0.0
      %v1695 = vsel %vm1665, %v1552, 0.0
      %v1696 = vsel %vm1666, %v1554, 0.0
      %v1697 = vsel %vm1667, %v1556, 0.0
      %v1698 = vsel %vm1668, %v1558, 0.0
      %v1699 = vsel %vm1669, %v1560, 0.0
      %v1700 = vsel %vm1670, %v1562, 0.0
      %v1701 = vsel %vm1671, %v1564, 0.0
      %v1702 = vsel %vm1672, %v1566, 0.0
      %v1703 = vsel %vm1673, %v1568, 0.0
      %v1704 = vsel %vm1674, %v1570, 0.0
      %v1705 = vsel %vm1675, %v1572, 0.0
      %v1706 = vsel %vm1676, %v1574, 0.0
      %v1707 = vsel %vm1677, %v1576, 0.0
      %v1708 = vsel %vm1678, %v1578, 0.0
      %v1709 = vsel %vm1679, %v1580, 0.0
      %v1710 = vsel %vm1680, %v1582, 0.0
      %v1711 = vsel %vm1681, %v1584, 0.0
      %v1712 = vsel %vm1682, %v1586, 0.0
      %v1713 = vsel %vm1683, %v1588, 0.0
      %vm1715 = vcmask 1046528
      %v1716 = vrot.slane %v1467, 1
      %v1717 = vrot.slane %v1468, 1
      %v1718 = vsel %vm1715, %v1716, %v1717
      %v1719 = vrot.slane %v1469, 1
      %v1720 = vsel %vm1715, %v1717, %v1719
      %v1721 = vrot.slane %v1470, 1
      %v1722 = vsel %vm1715, %v1719, %v1721
      %v1723 = vrot.slane %v1471, 1
      %v1724 = vsel %vm1715, %v1721, %v1723
      %v1725 = vrot.slane %v1472, 1
      %v1726 = vsel %vm1715, %v1723, %v1725
      %v1727 = vrot.slane %v1473, 1
      %v1728 = vsel %vm1715, %v1725, %v1727
      %v1729 = vrot.slane %v1474, 1
      %v1730 = vsel %vm1715, %v1727, %v1729
      %v1731 = vrot.slane %v1475, 1
      %v1732 = vsel %vm1715, %v1729, %v1731
      %v1733 = vrot.slane %v1476, 1
      %v1734 = vsel %vm1715, %v1731, %v1733
      %v1735 = vrot.slane %v1477, 1
      %v1736 = vsel %vm1715, %v1733, %v1735
      %v1737 = vrot.slane %v1478, 1
      %v1738 = vsel %vm1715, %v1735, %v1737
      %v1739 = vrot.slane %v1479, 1
      %v1740 = vsel %vm1715, %v1737, %v1739
      %v1741 = vrot.slane %v1480, 1
      %v1742 = vsel %vm1715, %v1739, %v1741
      %v1743 = vrot.slane %v1481, 1
      %v1744 = vsel %vm1715, %v1741, %v1743
      %v1745 = vrot.slane %v1482, 1
      %v1746 = vsel %vm1715, %v1743, %v1745
      %v1747 = vrot.slane %v1483, 1
      %v1748 = vsel %vm1715, %v1745, %v1747
      %v1749 = vrot.slane %v1484, 1
      %v1750 = vsel %vm1715, %v1747, %v1749
      %v1751 = vrot.slane %v1485, 1
      %v1752 = vsel %vm1715, %v1749, %v1751
      %v1753 = vrot.slane %v1486, 1
      %v1754 = vsel %vm1715, %v1751, %v1753
      %v1755 = vrot.slane %v1487, 1
      %v1756 = vsel %vm1715, %v1753, %v1755
      %v1757 = vrot.slane %v1488, 1
      %v1758 = vsel %vm1715, %v1755, %v1757
      %v1759 = vrot.slane %v1489, 1
      %v1760 = vsel %vm1715, %v1757, %v1759
      %v1761 = vrot.slane %v1490, 1
      %v1762 = vsel %vm1715, %v1759, %v1761
      %v1763 = vrot.slane %v1491, 1
      %v1764 = vsel %vm1715, %v1761, %v1763
      %v1765 = vrot.slane %v1492, 1
      %v1766 = vsel %vm1715, %v1763, %v1765
      %v1767 = vrot.slane %v1493, 1
      %v1768 = vsel %vm1715, %v1765, %v1767
      %v1769 = vrot.slane %v1494, 1
      %v1770 = vsel %vm1715, %v1767, %v1769
      %v1771 = vrot.slane %v1495, 1
      %v1772 = vsel %vm1715, %v1769, %v1771
      %v1773 = vrot.slane %v1496, 1
      %v1774 = vsel %vm1715, %v1771, %v1773
      %v1775 = vrot.slane %v1497, 1
      %v1776 = vsel %vm1715, %v1773, %v1775
      %v1808 = vsel %vm1715, 0.0, %v1716
      %v1809 = vsel %vm814, 1, 0
      %v1810 = vsel %vm815, 1, 0
      %v1811 = vsel %vm816, 1, 0
      %v1812 = vsel %vm817, 1, 0
      %v1813 = vsel %vm818, 1, 0
      %v1814 = vsel %vm819, 1, 0
      %v1815 = vsel %vm820, 1, 0
      %v1816 = vsel %vm821, 1, 0
      %v1817 = vsel %vm822, 1, 0
      %v1818 = vsel %vm823, 1, 0
      %v1819 = vsel %vm824, 1, 0
      %v1820 = vsel %vm825, 1, 0
      %v1821 = vsel %vm826, 1, 0
      %v1822 = vsel %vm827, 1, 0
      %v1823 = vsel %vm828, 1, 0
      %v1824 = vsel %vm829, 1, 0
      %v1825 = vsel %vm830, 1, 0
      %v1826 = vsel %vm831, 1, 0
      %v1827 = vsel %vm832, 1, 0
      %v1828 = vsel %vm833, 1, 0
      %v1829 = vsel %vm834, 1, 0
      %v1830 = vsel %vm835, 1, 0
      %v1831 = vsel %vm836, 1, 0
      %v1832 = vsel %vm837, 1, 0
      %v1833 = vsel %vm838, 1, 0
      %v1834 = vsel %vm839, 1, 0
      %v1835 = vsel %vm840, 1, 0
      %v1836 = vsel %vm841, 1, 0
      %v1837 = vsel %vm842, 1, 0
      %v1838 = vsel %vm843, 1, 0
      %v1839 = vsel %vm844, 1, 0
      %v1840 = vsel %vm845, 1, 0
      %vm1841 = vcmp.eq.s32.totalorder %v1809, 1
      %vm1842 = vcmp.eq.s32.totalorder %v1810, 1
      %vm1843 = vcmp.eq.s32.totalorder %v1811, 1
      %vm1844 = vcmp.eq.s32.totalorder %v1812, 1
      %vm1845 = vcmp.eq.s32.totalorder %v1813, 1
      %vm1846 = vcmp.eq.s32.totalorder %v1814, 1
      %vm1847 = vcmp.eq.s32.totalorder %v1815, 1
      %vm1848 = vcmp.eq.s32.totalorder %v1816, 1
      %vm1849 = vcmp.eq.s32.totalorder %v1817, 1
      %vm1850 = vcmp.eq.s32.totalorder %v1818, 1
      %vm1851 = vcmp.eq.s32.totalorder %v1819, 1
      %vm1852 = vcmp.eq.s32.totalorder %v1820, 1
      %vm1853 = vcmp.eq.s32.totalorder %v1821, 1
      %vm1854 = vcmp.eq.s32.totalorder %v1822, 1
      %vm1855 = vcmp.eq.s32.totalorder %v1823, 1
      %vm1856 = vcmp.eq.s32.totalorder %v1824, 1
      %vm1857 = vcmp.eq.s32.totalorder %v1825, 1
      %vm1858 = vcmp.eq.s32.totalorder %v1826, 1
      %vm1859 = vcmp.eq.s32.totalorder %v1827, 1
      %vm1860 = vcmp.eq.s32.totalorder %v1828, 1
      %vm1861 = vcmp.eq.s32.totalorder %v1829, 1
      %vm1862 = vcmp.eq.s32.totalorder %v1830, 1
      %vm1863 = vcmp.eq.s32.totalorder %v1831, 1
      %vm1864 = vcmp.eq.s32.totalorder %v1832, 1
      %vm1865 = vcmp.eq.s32.totalorder %v1833, 1
      %vm1866 = vcmp.eq.s32.totalorder %v1834, 1
      %vm1867 = vcmp.eq.s32.totalorder %v1835, 1
      %vm1868 = vcmp.eq.s32.totalorder %v1836, 1
      %vm1869 = vcmp.eq.s32.totalorder %v1837, 1
      %vm1870 = vcmp.eq.s32.totalorder %v1838, 1
      %vm1871 = vcmp.eq.s32.totalorder %v1839, 1
      %vm1872 = vcmp.eq.s32.totalorder %v1840, 1
      %v1873 = vsel %vm1842, %v1808, 0.0
      %v1874 = vsel %vm1843, %v1718, 0.0
      %v1875 = vsel %vm1844, %v1720, 0.0
      %v1876 = vsel %vm1845, %v1722, 0.0
      %v1877 = vsel %vm1846, %v1724, 0.0
      %v1878 = vsel %vm1847, %v1726, 0.0
      %v1879 = vsel %vm1848, %v1728, 0.0
      %v1880 = vsel %vm1849, %v1730, 0.0
      %v1881 = vsel %vm1850, %v1732, 0.0
      %v1882 = vsel %vm1851, %v1734, 0.0
      %v1883 = vsel %vm1852, %v1736, 0.0
      %v1884 = vsel %vm1853, %v1738, 0.0
      %v1885 = vsel %vm1854, %v1740, 0.0
      %v1886 = vsel %vm1855, %v1742, 0.0
      %v1887 = vsel %vm1856, %v1744, 0.0
      %v1888 = vsel %vm1857, %v1746, 0.0
      %v1889 = vsel %vm1858, %v1748, 0.0
      %v1890 = vsel %vm1859, %v1750, 0.0
      %v1891 = vsel %vm1860, %v1752, 0.0
      %v1892 = vsel %vm1861, %v1754, 0.0
      %v1893 = vsel %vm1862, %v1756, 0.0
      %v1894 = vsel %vm1863, %v1758, 0.0
      %v1895 = vsel %vm1864, %v1760, 0.0
      %v1896 = vsel %vm1865, %v1762, 0.0
      %v1897 = vsel %vm1866, %v1764, 0.0
      %v1898 = vsel %vm1867, %v1766, 0.0
      %v1899 = vsel %vm1868, %v1768, 0.0
      %v1900 = vsel %vm1869, %v1770, 0.0
      %v1901 = vsel %vm1870, %v1772, 0.0
      %v1902 = vsel %vm1871, %v1774, 0.0
      %v1903 = vsel %vm1872, %v1776, 0.0
      %v1905 = vrot.slane %v1497, 7
      %v1906 = vsel %vm1529, %v1587, %v1905
      %v1907 = vrot.slane %v1498, 7
      %v1908 = vsel %vm1529, %v1905, %v1907
      %v1911 = vsel %vm1652, %v1619, 0.0
      %v1912 = vsel %vm1653, %v1532, 0.0
      %v1913 = vsel %vm1654, %v1534, 0.0
      %v1914 = vsel %vm1655, %v1536, 0.0
      %v1915 = vsel %vm1656, %v1538, 0.0
      %v1916 = vsel %vm1657, %v1540, 0.0
      %v1917 = vsel %vm1658, %v1542, 0.0
      %v1918 = vsel %vm1659, %v1544, 0.0
      %v1919 = vsel %vm1660, %v1546, 0.0
      %v1920 = vsel %vm1661, %v1548, 0.0
      %v1921 = vsel %vm1662, %v1550, 0.0
      %v1922 = vsel %vm1663, %v1552, 0.0
      %v1923 = vsel %vm1664, %v1554, 0.0
      %v1924 = vsel %vm1665, %v1556, 0.0
      %v1925 = vsel %vm1666, %v1558, 0.0
      %v1926 = vsel %vm1667, %v1560, 0.0
      %v1927 = vsel %vm1668, %v1562, 0.0
      %v1928 = vsel %vm1669, %v1564, 0.0
      %v1929 = vsel %vm1670, %v1566, 0.0
      %v1930 = vsel %vm1671, %v1568, 0.0
      %v1931 = vsel %vm1672, %v1570, 0.0
      %v1932 = vsel %vm1673, %v1572, 0.0
      %v1933 = vsel %vm1674, %v1574, 0.0
      %v1934 = vsel %vm1675, %v1576, 0.0
      %v1935 = vsel %vm1676, %v1578, 0.0
      %v1936 = vsel %vm1677, %v1580, 0.0
      %v1937 = vsel %vm1678, %v1582, 0.0
      %v1938 = vsel %vm1679, %v1584, 0.0
      %v1939 = vsel %vm1680, %v1586, 0.0
      %v1940 = vsel %vm1681, %v1588, 0.0
      %v1941 = vsel %vm1682, %v1906, 0.0
      %v1942 = vsel %vm1683, %v1908, 0.0
      %v1943 = vrot.slane %v1498, 1
      %v1944 = vsel %vm1715, %v1775, %v1943
      %v1947 = vsel %vm1715, %v1943, 0.0
      %v1948 = vsel %vm1841, %v1718, 0.0
      %v1949 = vsel %vm1842, %v1720, 0.0
      %v1950 = vsel %vm1843, %v1722, 0.0
      %v1951 = vsel %vm1844, %v1724, 0.0
      %v1952 = vsel %vm1845, %v1726, 0.0
      %v1953 = vsel %vm1846, %v1728, 0.0
      %v1954 = vsel %vm1847, %v1730, 0.0
      %v1955 = vsel %vm1848, %v1732, 0.0
      %v1956 = vsel %vm1849, %v1734, 0.0
      %v1957 = vsel %vm1850, %v1736, 0.0
      %v1958 = vsel %vm1851, %v1738, 0.0
      %v1959 = vsel %vm1852, %v1740, 0.0
      %v1960 = vsel %vm1853, %v1742, 0.0
      %v1961 = vsel %vm1854, %v1744, 0.0
      %v1962 = vsel %vm1855, %v1746, 0.0
      %v1963 = vsel %vm1856, %v1748, 0.0
      %v1964 = vsel %vm1857, %v1750, 0.0
      %v1965 = vsel %vm1858, %v1752, 0.0
      %v1966 = vsel %vm1859, %v1754, 0.0
      %v1967 = vsel %vm1860, %v1756, 0.0
      %v1968 = vsel %vm1861, %v1758, 0.0
      %v1969 = vsel %vm1862, %v1760, 0.0
      %v1970 = vsel %vm1863, %v1762, 0.0
      %v1971 = vsel %vm1864, %v1764, 0.0
      %v1972 = vsel %vm1865, %v1766, 0.0
      %v1973 = vsel %vm1866, %v1768, 0.0
      %v1974 = vsel %vm1867, %v1770, 0.0
      %v1975 = vsel %vm1868, %v1772, 0.0
      %v1976 = vsel %vm1869, %v1774, 0.0
      %v1977 = vsel %vm1870, %v1776, 0.0
      %v1978 = vsel %vm1871, %v1944, 0.0
      %v1979 = vsel %vm1872, %v1947, 0.0
      %v1981 = vsel %vm1529, %v1907, 0.0
      %v1982 = vsel %vm1652, %v1534, 0.0
      %v1983 = vsel %vm1653, %v1536, 0.0
      %v1984 = vsel %vm1654, %v1538, 0.0
      %v1985 = vsel %vm1655, %v1540, 0.0
      %v1986 = vsel %vm1656, %v1542, 0.0
      %v1987 = vsel %vm1657, %v1544, 0.0
      %v1988 = vsel %vm1658, %v1546, 0.0
      %v1989 = vsel %vm1659, %v1548, 0.0
      %v1990 = vsel %vm1660, %v1550, 0.0
      %v1991 = vsel %vm1661, %v1552, 0.0
      %v1992 = vsel %vm1662, %v1554, 0.0
      %v1993 = vsel %vm1663, %v1556, 0.0
      %v1994 = vsel %vm1664, %v1558, 0.0
      %v1995 = vsel %vm1665, %v1560, 0.0
      %v1996 = vsel %vm1666, %v1562, 0.0
      %v1997 = vsel %vm1667, %v1564, 0.0
      %v1998 = vsel %vm1668, %v1566, 0.0
      %v1999 = vsel %vm1669, %v1568, 0.0
      %v2000 = vsel %vm1670, %v1570, 0.0
      %v2001 = vsel %vm1671, %v1572, 0.0
      %v2002 = vsel %vm1672, %v1574, 0.0
      %v2003 = vsel %vm1673, %v1576, 0.0
      %v2004 = vsel %vm1674, %v1578, 0.0
      %v2005 = vsel %vm1675, %v1580, 0.0
      %v2006 = vsel %vm1676, %v1582, 0.0
      %v2007 = vsel %vm1677, %v1584, 0.0
      %v2008 = vsel %vm1678, %v1586, 0.0
      %v2009 = vsel %vm1679, %v1588, 0.0
      %v2010 = vsel %vm1680, %v1906, 0.0
      %v2011 = vsel %vm1681, %v1908, 0.0
      %v2012 = vsel %vm1682, %v1981, 0.0
      %v2013 = vsel %vm1841, %v1722, 0.0
      %v2014 = vsel %vm1842, %v1724, 0.0
      %v2015 = vsel %vm1843, %v1726, 0.0
      %v2016 = vsel %vm1844, %v1728, 0.0
      %v2017 = vsel %vm1845, %v1730, 0.0
      %v2018 = vsel %vm1846, %v1732, 0.0
      %v2019 = vsel %vm1847, %v1734, 0.0
      %v2020 = vsel %vm1848, %v1736, 0.0
      %v2021 = vsel %vm1849, %v1738, 0.0
      %v2022 = vsel %vm1850, %v1740, 0.0
      %v2023 = vsel %vm1851, %v1742, 0.0
      %v2024 = vsel %vm1852, %v1744, 0.0
      %v2025 = vsel %vm1853, %v1746, 0.0
      %v2026 = vsel %vm1854, %v1748, 0.0
      %v2027 = vsel %vm1855, %v1750, 0.0
      %v2028 = vsel %vm1856, %v1752, 0.0
      %v2029 = vsel %vm1857, %v1754, 0.0
      %v2030 = vsel %vm1858, %v1756, 0.0
      %v2031 = vsel %vm1859, %v1758, 0.0
      %v2032 = vsel %vm1860, %v1760, 0.0
      %v2033 = vsel %vm1861, %v1762, 0.0
      %v2034 = vsel %vm1862, %v1764, 0.0
      %v2035 = vsel %vm1863, %v1766, 0.0
      %v2036 = vsel %vm1864, %v1768, 0.0
      %v2037 = vsel %vm1865, %v1770, 0.0
      %v2038 = vsel %vm1866, %v1772, 0.0
      %v2039 = vsel %vm1867, %v1774, 0.0
      %v2040 = vsel %vm1868, %v1776, 0.0
      %v2041 = vsel %vm1869, %v1944, 0.0
      %v2042 = vsel %vm1870, %v1947, 0.0
      %2044 = vrot.lane.b32.xlu0 0.0, 16
      %v2045 = vpop.permute.xlu0 %2044
      %2046 = vrot.lane.b32.xlu0 %v1467, 16
      %v2047 = vpop.permute.xlu0 %2046
      %2048 = vrot.lane.b32.xlu0 %v1468, 16
      %v2049 = vpop.permute.xlu0 %2048
      %2050 = vrot.lane.b32.xlu0 %v1469, 16
      %v2051 = vpop.permute.xlu0 %2050
      %2052 = vrot.lane.b32.xlu0 %v1470, 16
      %v2053 = vpop.permute.xlu0 %2052
      %2054 = vrot.lane.b32.xlu0 %v1471, 16
      %v2055 = vpop.permute.xlu0 %2054
      %2056 = vrot.lane.b32.xlu0 %v1472, 16
      %v2057 = vpop.permute.xlu0 %2056
      %2058 = vrot.lane.b32.xlu0 %v1473, 16
      %v2059 = vpop.permute.xlu0 %2058
      %2060 = vrot.lane.b32.xlu0 %v1474, 16
      %v2061 = vpop.permute.xlu0 %2060
      %2062 = vrot.lane.b32.xlu0 %v1475, 16
      %v2063 = vpop.permute.xlu0 %2062
      %2064 = vrot.lane.b32.xlu0 %v1476, 16
      %v2065 = vpop.permute.xlu0 %2064
      %2066 = vrot.lane.b32.xlu0 %v1477, 16
      %v2067 = vpop.permute.xlu0 %2066
      %2068 = vrot.lane.b32.xlu0 %v1478, 16
      %v2069 = vpop.permute.xlu0 %2068
      %2070 = vrot.lane.b32.xlu0 %v1479, 16
      %v2071 = vpop.permute.xlu0 %2070
      %2072 = vrot.lane.b32.xlu0 %v1480, 16
      %v2073 = vpop.permute.xlu0 %2072
      %2074 = vrot.lane.b32.xlu0 %v1481, 16
      %v2075 = vpop.permute.xlu0 %2074
      %2076 = vrot.lane.b32.xlu0 %v1482, 16
      %v2077 = vpop.permute.xlu0 %2076
      %2078 = vrot.lane.b32.xlu0 %v1483, 16
      %v2079 = vpop.permute.xlu0 %2078
      %2080 = vrot.lane.b32.xlu0 %v1484, 16
      %v2081 = vpop.permute.xlu0 %2080
      %2082 = vrot.lane.b32.xlu0 %v1485, 16
      %v2083 = vpop.permute.xlu0 %2082
      %2084 = vrot.lane.b32.xlu0 %v1486, 16
      %v2085 = vpop.permute.xlu0 %2084
      %2086 = vrot.lane.b32.xlu0 %v1487, 16
      %v2087 = vpop.permute.xlu0 %2086
      %2088 = vrot.lane.b32.xlu0 %v1488, 16
      %v2089 = vpop.permute.xlu0 %2088
      %2090 = vrot.lane.b32.xlu0 %v1489, 16
      %v2091 = vpop.permute.xlu0 %2090
      %2092 = vrot.lane.b32.xlu0 %v1490, 16
      %v2093 = vpop.permute.xlu0 %2092
      %2094 = vrot.lane.b32.xlu0 %v1491, 16
      %v2095 = vpop.permute.xlu0 %2094
      %2096 = vrot.lane.b32.xlu0 %v1492, 16
      %v2097 = vpop.permute.xlu0 %2096
      %2098 = vrot.lane.b32.xlu0 %v1493, 16
      %v2099 = vpop.permute.xlu0 %2098
      %2100 = vrot.lane.b32.xlu0 %v1494, 16
      %v2101 = vpop.permute.xlu0 %2100
      %2102 = vrot.lane.b32.xlu0 %v1495, 16
      %v2103 = vpop.permute.xlu0 %2102
      %2104 = vrot.lane.b32.xlu0 %v1496, 16
      %v2105 = vpop.permute.xlu0 %2104
      %2168 = vrot.lane.b32.xlu0 0.0, 32
      %v2169 = vpop.permute.xlu0 %2168
      %2170 = vrot.lane.b32.xlu0 %v1873, 32
      %v2171 = vpop.permute.xlu0 %2170
      %2172 = vrot.lane.b32.xlu0 %v1874, 32
      %v2173 = vpop.permute.xlu0 %2172
      %2174 = vrot.lane.b32.xlu0 %v1875, 32
      %v2175 = vpop.permute.xlu0 %2174
      %2176 = vrot.lane.b32.xlu0 %v1876, 32
      %v2177 = vpop.permute.xlu0 %2176
      %2178 = vrot.lane.b32.xlu0 %v1877, 32
      %v2179 = vpop.permute.xlu0 %2178
      %2180 = vrot.lane.b32.xlu0 %v1878, 32
      %v2181 = vpop.permute.xlu0 %2180
      %2182 = vrot.lane.b32.xlu0 %v1879, 32
      %v2183 = vpop.permute.xlu0 %2182
      %2184 = vrot.lane.b32.xlu0 %v1880, 32
      %v2185 = vpop.permute.xlu0 %2184
      %2186 = vrot.lane.b32.xlu0 %v1881, 32
      %v2187 = vpop.permute.xlu0 %2186
      %2188 = vrot.lane.b32.xlu0 %v1882, 32
      %v2189 = vpop.permute.xlu0 %2188
      %2190 = vrot.lane.b32.xlu0 %v1883, 32
      %v2191 = vpop.permute.xlu0 %2190
      %2192 = vrot.lane.b32.xlu0 %v1884, 32
      %v2193 = vpop.permute.xlu0 %2192
      %2194 = vrot.lane.b32.xlu0 %v1885, 32
      %v2195 = vpop.permute.xlu0 %2194
      %2196 = vrot.lane.b32.xlu0 %v1886, 32
      %v2197 = vpop.permute.xlu0 %2196
      %2198 = vrot.lane.b32.xlu0 %v1887, 32
      %v2199 = vpop.permute.xlu0 %2198
      %2200 = vrot.lane.b32.xlu0 %v1888, 32
      %v2201 = vpop.permute.xlu0 %2200
      %2202 = vrot.lane.b32.xlu0 %v1889, 32
      %v2203 = vpop.permute.xlu0 %2202
      %2204 = vrot.lane.b32.xlu0 %v1890, 32
      %v2205 = vpop.permute.xlu0 %2204
      %2206 = vrot.lane.b32.xlu0 %v1891, 32
      %v2207 = vpop.permute.xlu0 %2206
      %2208 = vrot.lane.b32.xlu0 %v1892, 32
      %v2209 = vpop.permute.xlu0 %2208
      %2210 = vrot.lane.b32.xlu0 %v1893, 32
      %v2211 = vpop.permute.xlu0 %2210
      %2212 = vrot.lane.b32.xlu0 %v1894, 32
      %v2213 = vpop.permute.xlu0 %2212
      %2214 = vrot.lane.b32.xlu0 %v1895, 32
      %v2215 = vpop.permute.xlu0 %2214
      %2216 = vrot.lane.b32.xlu0 %v1896, 32
      %v2217 = vpop.permute.xlu0 %2216
      %2218 = vrot.lane.b32.xlu0 %v1897, 32
      %v2219 = vpop.permute.xlu0 %2218
      %2220 = vrot.lane.b32.xlu0 %v1898, 32
      %v2221 = vpop.permute.xlu0 %2220
      %2222 = vrot.lane.b32.xlu0 %v1899, 32
      %v2223 = vpop.permute.xlu0 %2222
      %2224 = vrot.lane.b32.xlu0 %v1900, 32
      %v2225 = vpop.permute.xlu0 %2224
      %2226 = vrot.lane.b32.xlu0 %v1901, 32
      %v2227 = vpop.permute.xlu0 %2226
      %2228 = vrot.lane.b32.xlu0 %v1902, 32
      %v2229 = vpop.permute.xlu0 %2228
      %2230 = vrot.lane.b32.xlu0 %v1903, 32
      %v2231 = vpop.permute.xlu0 %2230
      %2296 = vrot.lane.b32.xlu0 %v1911, 48
      %v2297 = vpop.permute.xlu0 %2296
      %2298 = vrot.lane.b32.xlu0 %v1912, 48
      %v2299 = vpop.permute.xlu0 %2298
      %2300 = vrot.lane.b32.xlu0 %v1913, 48
      %v2301 = vpop.permute.xlu0 %2300
      %2302 = vrot.lane.b32.xlu0 %v1914, 48
      %v2303 = vpop.permute.xlu0 %2302
      %2304 = vrot.lane.b32.xlu0 %v1915, 48
      %v2305 = vpop.permute.xlu0 %2304
      %2306 = vrot.lane.b32.xlu0 %v1916, 48
      %v2307 = vpop.permute.xlu0 %2306
      %2308 = vrot.lane.b32.xlu0 %v1917, 48
      %v2309 = vpop.permute.xlu0 %2308
      %2310 = vrot.lane.b32.xlu0 %v1918, 48
      %v2311 = vpop.permute.xlu0 %2310
      %2312 = vrot.lane.b32.xlu0 %v1919, 48
      %v2313 = vpop.permute.xlu0 %2312
      %2314 = vrot.lane.b32.xlu0 %v1920, 48
      %v2315 = vpop.permute.xlu0 %2314
      %2316 = vrot.lane.b32.xlu0 %v1921, 48
      %v2317 = vpop.permute.xlu0 %2316
      %2318 = vrot.lane.b32.xlu0 %v1922, 48
      %v2319 = vpop.permute.xlu0 %2318
      %2320 = vrot.lane.b32.xlu0 %v1923, 48
      %v2321 = vpop.permute.xlu0 %2320
      %2322 = vrot.lane.b32.xlu0 %v1924, 48
      %v2323 = vpop.permute.xlu0 %2322
      %2324 = vrot.lane.b32.xlu0 %v1925, 48
      %v2325 = vpop.permute.xlu0 %2324
      %2326 = vrot.lane.b32.xlu0 %v1926, 48
      %v2327 = vpop.permute.xlu0 %2326
      %2328 = vrot.lane.b32.xlu0 %v1927, 48
      %v2329 = vpop.permute.xlu0 %2328
      %2330 = vrot.lane.b32.xlu0 %v1928, 48
      %v2331 = vpop.permute.xlu0 %2330
      %2332 = vrot.lane.b32.xlu0 %v1929, 48
      %v2333 = vpop.permute.xlu0 %2332
      %2334 = vrot.lane.b32.xlu0 %v1930, 48
      %v2335 = vpop.permute.xlu0 %2334
      %2336 = vrot.lane.b32.xlu0 %v1931, 48
      %v2337 = vpop.permute.xlu0 %2336
      %2338 = vrot.lane.b32.xlu0 %v1932, 48
      %v2339 = vpop.permute.xlu0 %2338
      %2340 = vrot.lane.b32.xlu0 %v1933, 48
      %v2341 = vpop.permute.xlu0 %2340
      %2342 = vrot.lane.b32.xlu0 %v1934, 48
      %v2343 = vpop.permute.xlu0 %2342
      %2344 = vrot.lane.b32.xlu0 %v1935, 48
      %v2345 = vpop.permute.xlu0 %2344
      %2346 = vrot.lane.b32.xlu0 %v1936, 48
      %v2347 = vpop.permute.xlu0 %2346
      %2348 = vrot.lane.b32.xlu0 %v1937, 48
      %v2349 = vpop.permute.xlu0 %2348
      %2350 = vrot.lane.b32.xlu0 %v1938, 48
      %v2351 = vpop.permute.xlu0 %2350
      %2352 = vrot.lane.b32.xlu0 %v1939, 48
      %v2353 = vpop.permute.xlu0 %2352
      %2354 = vrot.lane.b32.xlu0 %v1940, 48
      %v2355 = vpop.permute.xlu0 %2354
      %2356 = vrot.lane.b32.xlu0 %v1941, 48
      %v2357 = vpop.permute.xlu0 %2356
      %2358 = vrot.lane.b32.xlu0 %v1942, 48
      %v2359 = vpop.permute.xlu0 %2358
      %2392 = vrot.lane.b32.xlu0 %v1467, 64
      %v2393 = vpop.permute.xlu0 %2392
      %2394 = vrot.lane.b32.xlu0 %v1468, 64
      %v2395 = vpop.permute.xlu0 %2394
      %2396 = vrot.lane.b32.xlu0 %v1469, 64
      %v2397 = vpop.permute.xlu0 %2396
      %2398 = vrot.lane.b32.xlu0 %v1470, 64
      %v2399 = vpop.permute.xlu0 %2398
      %2400 = vrot.lane.b32.xlu0 %v1471, 64
      %v2401 = vpop.permute.xlu0 %2400
      %2402 = vrot.lane.b32.xlu0 %v1472, 64
      %v2403 = vpop.permute.xlu0 %2402
      %2404 = vrot.lane.b32.xlu0 %v1473, 64
      %v2405 = vpop.permute.xlu0 %2404
      %2406 = vrot.lane.b32.xlu0 %v1474, 64
      %v2407 = vpop.permute.xlu0 %2406
      %2408 = vrot.lane.b32.xlu0 %v1475, 64
      %v2409 = vpop.permute.xlu0 %2408
      %2410 = vrot.lane.b32.xlu0 %v1476, 64
      %v2411 = vpop.permute.xlu0 %2410
      %2412 = vrot.lane.b32.xlu0 %v1477, 64
      %v2413 = vpop.permute.xlu0 %2412
      %2414 = vrot.lane.b32.xlu0 %v1478, 64
      %v2415 = vpop.permute.xlu0 %2414
      %2416 = vrot.lane.b32.xlu0 %v1479, 64
      %v2417 = vpop.permute.xlu0 %2416
      %2418 = vrot.lane.b32.xlu0 %v1480, 64
      %v2419 = vpop.permute.xlu0 %2418
      %2420 = vrot.lane.b32.xlu0 %v1481, 64
      %v2421 = vpop.permute.xlu0 %2420
      %2422 = vrot.lane.b32.xlu0 %v1482, 64
      %v2423 = vpop.permute.xlu0 %2422
      %2424 = vrot.lane.b32.xlu0 %v1483, 64
      %v2425 = vpop.permute.xlu0 %2424
      %2426 = vrot.lane.b32.xlu0 %v1484, 64
      %v2427 = vpop.permute.xlu0 %2426
      %2428 = vrot.lane.b32.xlu0 %v1485, 64
      %v2429 = vpop.permute.xlu0 %2428
      %2430 = vrot.lane.b32.xlu0 %v1486, 64
      %v2431 = vpop.permute.xlu0 %2430
      %2432 = vrot.lane.b32.xlu0 %v1487, 64
      %v2433 = vpop.permute.xlu0 %2432
      %2434 = vrot.lane.b32.xlu0 %v1488, 64
      %v2435 = vpop.permute.xlu0 %2434
      %2436 = vrot.lane.b32.xlu0 %v1489, 64
      %v2437 = vpop.permute.xlu0 %2436
      %2438 = vrot.lane.b32.xlu0 %v1490, 64
      %v2439 = vpop.permute.xlu0 %2438
      %2440 = vrot.lane.b32.xlu0 %v1491, 64
      %v2441 = vpop.permute.xlu0 %2440
      %2442 = vrot.lane.b32.xlu0 %v1492, 64
      %v2443 = vpop.permute.xlu0 %2442
      %2444 = vrot.lane.b32.xlu0 %v1493, 64
      %v2445 = vpop.permute.xlu0 %2444
      %2446 = vrot.lane.b32.xlu0 %v1494, 64
      %v2447 = vpop.permute.xlu0 %2446
      %2448 = vrot.lane.b32.xlu0 %v1495, 64
      %v2449 = vpop.permute.xlu0 %2448
      %2450 = vrot.lane.b32.xlu0 %v1496, 64
      %v2451 = vpop.permute.xlu0 %2450
      %2452 = vrot.lane.b32.xlu0 %v1497, 64
      %v2453 = vpop.permute.xlu0 %2452
      %2454 = vrot.lane.b32.xlu0 %v1498, 64
      %v2455 = vpop.permute.xlu0 %2454
      %2520 = vrot.lane.b32.xlu0 %v1948, 80
      %v2521 = vpop.permute.xlu0 %2520
      %2522 = vrot.lane.b32.xlu0 %v1949, 80
      %v2523 = vpop.permute.xlu0 %2522
      %2524 = vrot.lane.b32.xlu0 %v1950, 80
      %v2525 = vpop.permute.xlu0 %2524
      %2526 = vrot.lane.b32.xlu0 %v1951, 80
      %v2527 = vpop.permute.xlu0 %2526
      %2528 = vrot.lane.b32.xlu0 %v1952, 80
      %v2529 = vpop.permute.xlu0 %2528
      %2530 = vrot.lane.b32.xlu0 %v1953, 80
      %v2531 = vpop.permute.xlu0 %2530
      %2532 = vrot.lane.b32.xlu0 %v1954, 80
      %v2533 = vpop.permute.xlu0 %2532
      %2534 = vrot.lane.b32.xlu0 %v1955, 80
      %v2535 = vpop.permute.xlu0 %2534
      %2536 = vrot.lane.b32.xlu0 %v1956, 80
      %v2537 = vpop.permute.xlu0 %2536
      %2538 = vrot.lane.b32.xlu0 %v1957, 80
      %v2539 = vpop.permute.xlu0 %2538
      %2540 = vrot.lane.b32.xlu0 %v1958, 80
      %v2541 = vpop.permute.xlu0 %2540
      %2542 = vrot.lane.b32.xlu0 %v1959, 80
      %v2543 = vpop.permute.xlu0 %2542
      %2544 = vrot.lane.b32.xlu0 %v1960, 80
      %v2545 = vpop.permute.xlu0 %2544
      %2546 = vrot.lane.b32.xlu0 %v1961, 80
      %v2547 = vpop.permute.xlu0 %2546
      %2548 = vrot.lane.b32.xlu0 %v1962, 80
      %v2549 = vpop.permute.xlu0 %2548
      %2550 = vrot.lane.b32.xlu0 %v1963, 80
      %v2551 = vpop.permute.xlu0 %2550
      %2552 = vrot.lane.b32.xlu0 %v1964, 80
      %v2553 = vpop.permute.xlu0 %2552
      %2554 = vrot.lane.b32.xlu0 %v1965, 80
      %v2555 = vpop.permute.xlu0 %2554
      %2556 = vrot.lane.b32.xlu0 %v1966, 80
      %v2557 = vpop.permute.xlu0 %2556
      %2558 = vrot.lane.b32.xlu0 %v1967, 80
      %v2559 = vpop.permute.xlu0 %2558
      %2560 = vrot.lane.b32.xlu0 %v1968, 80
      %v2561 = vpop.permute.xlu0 %2560
      %2562 = vrot.lane.b32.xlu0 %v1969, 80
      %v2563 = vpop.permute.xlu0 %2562
      %2564 = vrot.lane.b32.xlu0 %v1970, 80
      %v2565 = vpop.permute.xlu0 %2564
      %2566 = vrot.lane.b32.xlu0 %v1971, 80
      %v2567 = vpop.permute.xlu0 %2566
      %2568 = vrot.lane.b32.xlu0 %v1972, 80
      %v2569 = vpop.permute.xlu0 %2568
      %2570 = vrot.lane.b32.xlu0 %v1973, 80
      %v2571 = vpop.permute.xlu0 %2570
      %2572 = vrot.lane.b32.xlu0 %v1974, 80
      %v2573 = vpop.permute.xlu0 %2572
      %2574 = vrot.lane.b32.xlu0 %v1975, 80
      %v2575 = vpop.permute.xlu0 %2574
      %2576 = vrot.lane.b32.xlu0 %v1976, 80
      %v2577 = vpop.permute.xlu0 %2576
      %2578 = vrot.lane.b32.xlu0 %v1977, 80
      %v2579 = vpop.permute.xlu0 %2578
      %2580 = vrot.lane.b32.xlu0 %v1978, 80
      %v2581 = vpop.permute.xlu0 %2580
      %2582 = vrot.lane.b32.xlu0 %v1979, 80
      %v2583 = vpop.permute.xlu0 %2582
      %2647 = vrot.lane.b32.xlu0 %v1982, 96
      %v2648 = vpop.permute.xlu0 %2647
      %2649 = vrot.lane.b32.xlu0 %v1983, 96
      %v2650 = vpop.permute.xlu0 %2649
      %2651 = vrot.lane.b32.xlu0 %v1984, 96
      %v2652 = vpop.permute.xlu0 %2651
      %2653 = vrot.lane.b32.xlu0 %v1985, 96
      %v2654 = vpop.permute.xlu0 %2653
      %2655 = vrot.lane.b32.xlu0 %v1986, 96
      %v2656 = vpop.permute.xlu0 %2655
      %2657 = vrot.lane.b32.xlu0 %v1987, 96
      %v2658 = vpop.permute.xlu0 %2657
      %2659 = vrot.lane.b32.xlu0 %v1988, 96
      %v2660 = vpop.permute.xlu0 %2659
      %2661 = vrot.lane.b32.xlu0 %v1989, 96
      %v2662 = vpop.permute.xlu0 %2661
      %2663 = vrot.lane.b32.xlu0 %v1990, 96
      %v2664 = vpop.permute.xlu0 %2663
      %2665 = vrot.lane.b32.xlu0 %v1991, 96
      %v2666 = vpop.permute.xlu0 %2665
      %2667 = vrot.lane.b32.xlu0 %v1992, 96
      %v2668 = vpop.permute.xlu0 %2667
      %2669 = vrot.lane.b32.xlu0 %v1993, 96
      %v2670 = vpop.permute.xlu0 %2669
      %2671 = vrot.lane.b32.xlu0 %v1994, 96
      %v2672 = vpop.permute.xlu0 %2671
      %2673 = vrot.lane.b32.xlu0 %v1995, 96
      %v2674 = vpop.permute.xlu0 %2673
      %2675 = vrot.lane.b32.xlu0 %v1996, 96
      %v2676 = vpop.permute.xlu0 %2675
      %2677 = vrot.lane.b32.xlu0 %v1997, 96
      %v2678 = vpop.permute.xlu0 %2677
      %2679 = vrot.lane.b32.xlu0 %v1998, 96
      %v2680 = vpop.permute.xlu0 %2679
      %2681 = vrot.lane.b32.xlu0 %v1999, 96
      %v2682 = vpop.permute.xlu0 %2681
      %2683 = vrot.lane.b32.xlu0 %v2000, 96
      %v2684 = vpop.permute.xlu0 %2683
      %2685 = vrot.lane.b32.xlu0 %v2001, 96
      %v2686 = vpop.permute.xlu0 %2685
      %2687 = vrot.lane.b32.xlu0 %v2002, 96
      %v2688 = vpop.permute.xlu0 %2687
      %2689 = vrot.lane.b32.xlu0 %v2003, 96
      %v2690 = vpop.permute.xlu0 %2689
      %2691 = vrot.lane.b32.xlu0 %v2004, 96
      %v2692 = vpop.permute.xlu0 %2691
      %2693 = vrot.lane.b32.xlu0 %v2005, 96
      %v2694 = vpop.permute.xlu0 %2693
      %2695 = vrot.lane.b32.xlu0 %v2006, 96
      %v2696 = vpop.permute.xlu0 %2695
      %2697 = vrot.lane.b32.xlu0 %v2007, 96
      %v2698 = vpop.permute.xlu0 %2697
      %2699 = vrot.lane.b32.xlu0 %v2008, 96
      %v2700 = vpop.permute.xlu0 %2699
      %2701 = vrot.lane.b32.xlu0 %v2009, 96
      %v2702 = vpop.permute.xlu0 %2701
      %2703 = vrot.lane.b32.xlu0 %v2010, 96
      %v2704 = vpop.permute.xlu0 %2703
      %2705 = vrot.lane.b32.xlu0 %v2011, 96
      %v2706 = vpop.permute.xlu0 %2705
      %2707 = vrot.lane.b32.xlu0 %v2012, 96
      %v2708 = vpop.permute.xlu0 %2707
      %2709 = vrot.lane.b32.xlu0 0.0, 96
      %v2710 = vpop.permute.xlu0 %2709
      %2743 = vrot.lane.b32.xlu0 %v1469, 112
      %v2744 = vpop.permute.xlu0 %2743
      %2745 = vrot.lane.b32.xlu0 %v1470, 112
      %v2746 = vpop.permute.xlu0 %2745
      %2747 = vrot.lane.b32.xlu0 %v1471, 112
      %v2748 = vpop.permute.xlu0 %2747
      %2749 = vrot.lane.b32.xlu0 %v1472, 112
      %v2750 = vpop.permute.xlu0 %2749
      %2751 = vrot.lane.b32.xlu0 %v1473, 112
      %v2752 = vpop.permute.xlu0 %2751
      %2753 = vrot.lane.b32.xlu0 %v1474, 112
      %v2754 = vpop.permute.xlu0 %2753
      %2755 = vrot.lane.b32.xlu0 %v1475, 112
      %v2756 = vpop.permute.xlu0 %2755
      %2757 = vrot.lane.b32.xlu0 %v1476, 112
      %v2758 = vpop.permute.xlu0 %2757
      %2759 = vrot.lane.b32.xlu0 %v1477, 112
      %v2760 = vpop.permute.xlu0 %2759
      %2761 = vrot.lane.b32.xlu0 %v1478, 112
      %v2762 = vpop.permute.xlu0 %2761
      %2763 = vrot.lane.b32.xlu0 %v1479, 112
      %v2764 = vpop.permute.xlu0 %2763
      %2765 = vrot.lane.b32.xlu0 %v1480, 112
      %v2766 = vpop.permute.xlu0 %2765
      %2767 = vrot.lane.b32.xlu0 %v1481, 112
      %v2768 = vpop.permute.xlu0 %2767
      %2769 = vrot.lane.b32.xlu0 %v1482, 112
      %v2770 = vpop.permute.xlu0 %2769
      %2771 = vrot.lane.b32.xlu0 %v1483, 112
      %v2772 = vpop.permute.xlu0 %2771
      %2773 = vrot.lane.b32.xlu0 %v1484, 112
      %v2774 = vpop.permute.xlu0 %2773
      %2775 = vrot.lane.b32.xlu0 %v1485, 112
      %v2776 = vpop.permute.xlu0 %2775
      %2777 = vrot.lane.b32.xlu0 %v1486, 112
      %v2778 = vpop.permute.xlu0 %2777
      %2779 = vrot.lane.b32.xlu0 %v1487, 112
      %v2780 = vpop.permute.xlu0 %2779
      %2781 = vrot.lane.b32.xlu0 %v1488, 112
      %v2782 = vpop.permute.xlu0 %2781
      %2783 = vrot.lane.b32.xlu0 %v1489, 112
      %v2784 = vpop.permute.xlu0 %2783
      %2785 = vrot.lane.b32.xlu0 %v1490, 112
      %v2786 = vpop.permute.xlu0 %2785
      %2787 = vrot.lane.b32.xlu0 %v1491, 112
      %v2788 = vpop.permute.xlu0 %2787
      %2789 = vrot.lane.b32.xlu0 %v1492, 112
      %v2790 = vpop.permute.xlu0 %2789
      %2791 = vrot.lane.b32.xlu0 %v1493, 112
      %v2792 = vpop.permute.xlu0 %2791
      %2793 = vrot.lane.b32.xlu0 %v1494, 112
      %v2794 = vpop.permute.xlu0 %2793
      %2795 = vrot.lane.b32.xlu0 %v1495, 112
      %v2796 = vpop.permute.xlu0 %2795
      %2797 = vrot.lane.b32.xlu0 %v1496, 112
      %v2798 = vpop.permute.xlu0 %2797
      %2799 = vrot.lane.b32.xlu0 %v1497, 112
      %v2800 = vpop.permute.xlu0 %2799
      %2801 = vrot.lane.b32.xlu0 %v1498, 112
      %v2802 = vpop.permute.xlu0 %2801
      %2803 = vrot.lane.b32.xlu0 0.0, 112
      %v2804 = vpop.permute.xlu0 %2803
      %vm2836 = vcmask 130048
      %v2837 = vsel %vm2836, 0.0, %v2045
      %v2838 = vsel %vm2836, %v1684, %v2047
      %v2839 = vsel %vm2836, %v1685, %v2049
      %v2840 = vsel %vm2836, %v1686, %v2051
      %v2841 = vsel %vm2836, %v1687, %v2053
      %v2842 = vsel %vm2836, %v1688, %v2055
      %v2843 = vsel %vm2836, %v1689, %v2057
      %v2844 = vsel %vm2836, %v1690, %v2059
      %v2845 = vsel %vm2836, %v1691, %v2061
      %v2846 = vsel %vm2836, %v1692, %v2063
      %v2847 = vsel %vm2836, %v1693, %v2065
      %v2848 = vsel %vm2836, %v1694, %v2067
      %v2849 = vsel %vm2836, %v1695, %v2069
      %v2850 = vsel %vm2836, %v1696, %v2071
      %v2851 = vsel %vm2836, %v1697, %v2073
      %v2852 = vsel %vm2836, %v1698, %v2075
      %v2853 = vsel %vm2836, %v1699, %v2077
      %v2854 = vsel %vm2836, %v1700, %v2079
      %v2855 = vsel %vm2836, %v1701, %v2081
      %v2856 = vsel %vm2836, %v1702, %v2083
      %v2857 = vsel %vm2836, %v1703, %v2085
      %v2858 = vsel %vm2836, %v1704, %v2087
      %v2859 = vsel %vm2836, %v1705, %v2089
      %v2860 = vsel %vm2836, %v1706, %v2091
      %v2861 = vsel %vm2836, %v1707, %v2093
      %v2862 = vsel %vm2836, %v1708, %v2095
      %v2863 = vsel %vm2836, %v1709, %v2097
      %v2864 = vsel %vm2836, %v1710, %v2099
      %v2865 = vsel %vm2836, %v1711, %v2101
      %v2866 = vsel %vm2836, %v1712, %v2103
      %v2867 = vsel %vm2836, %v1713, %v2105
      %v2868 = vsel %vm1017, %v2837, %v2169
      %v2869 = vsel %vm1017, %v2837, %v2171
      %v2870 = vsel %vm1017, %v2838, %v2173
      %v2871 = vsel %vm1017, %v2839, %v2175
      %v2872 = vsel %vm1017, %v2840, %v2177
      %v2873 = vsel %vm1017, %v2841, %v2179
      %v2874 = vsel %vm1017, %v2842, %v2181
      %v2875 = vsel %vm1017, %v2843, %v2183
      %v2876 = vsel %vm1017, %v2844, %v2185
      %v2877 = vsel %vm1017, %v2845, %v2187
      %v2878 = vsel %vm1017, %v2846, %v2189
      %v2879 = vsel %vm1017, %v2847, %v2191
      %v2880 = vsel %vm1017, %v2848, %v2193
      %v2881 = vsel %vm1017, %v2849, %v2195
      %v2882 = vsel %vm1017, %v2850, %v2197
      %v2883 = vsel %vm1017, %v2851, %v2199
      %v2884 = vsel %vm1017, %v2852, %v2201
      %v2885 = vsel %vm1017, %v2853, %v2203
      %v2886 = vsel %vm1017, %v2854, %v2205
      %v2887 = vsel %vm1017, %v2855, %v2207
      %v2888 = vsel %vm1017, %v2856, %v2209
      %v2889 = vsel %vm1017, %v2857, %v2211
      %v2890 = vsel %vm1017, %v2858, %v2213
      %v2891 = vsel %vm1017, %v2859, %v2215
      %v2892 = vsel %vm1017, %v2860, %v2217
      %v2893 = vsel %vm1017, %v2861, %v2219
      %v2894 = vsel %vm1017, %v2862, %v2221
      %v2895 = vsel %vm1017, %v2863, %v2223
      %v2896 = vsel %vm1017, %v2864, %v2225
      %v2897 = vsel %vm1017, %v2865, %v2227
      %v2898 = vsel %vm1017, %v2866, %v2229
      %v2899 = vsel %vm1017, %v2867, %v2231
      %vm2900 = vcmask 392192
      %v2901 = vsel %vm2900, %v2868, %v2297
      %v2902 = vsel %vm2900, %v2869, %v2299
      %v2903 = vsel %vm2900, %v2870, %v2301
      %v2904 = vsel %vm2900, %v2871, %v2303
      %v2905 = vsel %vm2900, %v2872, %v2305
      %v2906 = vsel %vm2900, %v2873, %v2307
      %v2907 = vsel %vm2900, %v2874, %v2309
      %v2908 = vsel %vm2900, %v2875, %v2311
      %v2909 = vsel %vm2900, %v2876, %v2313
      %v2910 = vsel %vm2900, %v2877, %v2315
      %v2911 = vsel %vm2900, %v2878, %v2317
      %v2912 = vsel %vm2900, %v2879, %v2319
      %v2913 = vsel %vm2900, %v2880, %v2321
      %v2914 = vsel %vm2900, %v2881, %v2323
      %v2915 = vsel %vm2900, %v2882, %v2325
      %v2916 = vsel %vm2900, %v2883, %v2327
      %v2917 = vsel %vm2900, %v2884, %v2329
      %v2918 = vsel %vm2900, %v2885, %v2331
      %v2919 = vsel %vm2900, %v2886, %v2333
      %v2920 = vsel %vm2900, %v2887, %v2335
      %v2921 = vsel %vm2900, %v2888, %v2337
      %v2922 = vsel %vm2900, %v2889, %v2339
      %v2923 = vsel %vm2900, %v2890, %v2341
      %v2924 = vsel %vm2900, %v2891, %v2343
      %v2925 = vsel %vm2900, %v2892, %v2345
      %v2926 = vsel %vm2900, %v2893, %v2347
      %v2927 = vsel %vm2900, %v2894, %v2349
      %v2928 = vsel %vm2900, %v2895, %v2351
      %v2929 = vsel %vm2900, %v2896, %v2353
      %v2930 = vsel %vm2900, %v2897, %v2355
      %v2931 = vsel %vm2900, %v2898, %v2357
      %v2932 = vsel %vm2900, %v2899, %v2359
      %vm2933 = vcmask 523264
      %v2934 = vsel %vm2933, %v2901, %v2393
      %v2935 = vsel %vm2933, %v2902, %v2395
      %v2936 = vsel %vm2933, %v2903, %v2397
      %v2937 = vsel %vm2933, %v2904, %v2399
      %v2938 = vsel %vm2933, %v2905, %v2401
      %v2939 = vsel %vm2933, %v2906, %v2403
      %v2940 = vsel %vm2933, %v2907, %v2405
      %v2941 = vsel %vm2933, %v2908, %v2407
      %v2942 = vsel %vm2933, %v2909, %v2409
      %v2943 = vsel %vm2933, %v2910, %v2411
      %v2944 = vsel %vm2933, %v2911, %v2413
      %v2945 = vsel %vm2933, %v2912, %v2415
      %v2946 = vsel %vm2933, %v2913, %v2417
      %v2947 = vsel %vm2933, %v2914, %v2419
      %v2948 = vsel %vm2933, %v2915, %v2421
      %v2949 = vsel %vm2933, %v2916, %v2423
      %v2950 = vsel %vm2933, %v2917, %v2425
      %v2951 = vsel %vm2933, %v2918, %v2427
      %v2952 = vsel %vm2933, %v2919, %v2429
      %v2953 = vsel %vm2933, %v2920, %v2431
      %v2954 = vsel %vm2933, %v2921, %v2433
      %v2955 = vsel %vm2933, %v2922, %v2435
      %v2956 = vsel %vm2933, %v2923, %v2437
      %v2957 = vsel %vm2933, %v2924, %v2439
      %v2958 = vsel %vm2933, %v2925, %v2441
      %v2959 = vsel %vm2933, %v2926, %v2443
      %v2960 = vsel %vm2933, %v2927, %v2445
      %v2961 = vsel %vm2933, %v2928, %v2447
      %v2962 = vsel %vm2933, %v2929, %v2449
      %v2963 = vsel %vm2933, %v2930, %v2451
      %v2964 = vsel %vm2933, %v2931, %v2453
      %v2965 = vsel %vm2933, %v2932, %v2455
      %vm2966 = vcmask 654336
      %v2967 = vsel %vm2966, %v2934, %v2521
      %v2968 = vsel %vm2966, %v2935, %v2523
      %v2969 = vsel %vm2966, %v2936, %v2525
      %v2970 = vsel %vm2966, %v2937, %v2527
      %v2971 = vsel %vm2966, %v2938, %v2529
      %v2972 = vsel %vm2966, %v2939, %v2531
      %v2973 = vsel %vm2966, %v2940, %v2533
      %v2974 = vsel %vm2966, %v2941, %v2535
      %v2975 = vsel %vm2966, %v2942, %v2537
      %v2976 = vsel %vm2966, %v2943, %v2539
      %v2977 = vsel %vm2966, %v2944, %v2541
      %v2978 = vsel %vm2966, %v2945, %v2543
      %v2979 = vsel %vm2966, %v2946, %v2545
      %v2980 = vsel %vm2966, %v2947, %v2547
      %v2981 = vsel %vm2966, %v2948, %v2549
      %v2982 = vsel %vm2966, %v2949, %v2551
      %v2983 = vsel %vm2966, %v2950, %v2553
      %v2984 = vsel %vm2966, %v2951, %v2555
      %v2985 = vsel %vm2966, %v2952, %v2557
      %v2986 = vsel %vm2966, %v2953, %v2559
      %v2987 = vsel %vm2966, %v2954, %v2561
      %v2988 = vsel %vm2966, %v2955, %v2563
      %v2989 = vsel %vm2966, %v2956, %v2565
      %v2990 = vsel %vm2966, %v2957, %v2567
      %v2991 = vsel %vm2966, %v2958, %v2569
      %v2992 = vsel %vm2966, %v2959, %v2571
      %v2993 = vsel %vm2966, %v2960, %v2573
      %v2994 = vsel %vm2966, %v2961, %v2575
      %v2995 = vsel %vm2966, %v2962, %v2577
      %v2996 = vsel %vm2966, %v2963, %v2579
      %v2997 = vsel %vm2966, %v2964, %v2581
      %v2998 = vsel %vm2966, %v2965, %v2583
      %vm2999 = vcmask 785408
      %v3000 = vsel %vm2999, %v2967, %v2648
      %v3001 = vsel %vm2999, %v2968, %v2650
      %v3002 = vsel %vm2999, %v2969, %v2652
      %v3003 = vsel %vm2999, %v2970, %v2654
      %v3004 = vsel %vm2999, %v2971, %v2656
      %v3005 = vsel %vm2999, %v2972, %v2658
      %v3006 = vsel %vm2999, %v2973, %v2660
      %v3007 = vsel %vm2999, %v2974, %v2662
      %v3008 = vsel %vm2999, %v2975, %v2664
      %v3009 = vsel %vm2999, %v2976, %v2666
      %v3010 = vsel %vm2999, %v2977, %v2668
      %v3011 = vsel %vm2999, %v2978, %v2670
      %v3012 = vsel %vm2999, %v2979, %v2672
      %v3013 = vsel %vm2999, %v2980, %v2674
      %v3014 = vsel %vm2999, %v2981, %v2676
      %v3015 = vsel %vm2999, %v2982, %v2678
      %v3016 = vsel %vm2999, %v2983, %v2680
      %v3017 = vsel %vm2999, %v2984, %v2682
      %v3018 = vsel %vm2999, %v2985, %v2684
      %v3019 = vsel %vm2999, %v2986, %v2686
      %v3020 = vsel %vm2999, %v2987, %v2688
      %v3021 = vsel %vm2999, %v2988, %v2690
      %v3022 = vsel %vm2999, %v2989, %v2692
      %v3023 = vsel %vm2999, %v2990, %v2694
      %v3024 = vsel %vm2999, %v2991, %v2696
      %v3025 = vsel %vm2999, %v2992, %v2698
      %v3026 = vsel %vm2999, %v2993, %v2700
      %v3027 = vsel %vm2999, %v2994, %v2702
      %v3028 = vsel %vm2999, %v2995, %v2704
      %v3029 = vsel %vm2999, %v2996, %v2706
      %v3030 = vsel %vm2999, %v2997, %v2708
      %v3031 = vsel %vm2999, %v2998, %v2710
      %vm3032 = vcmask 916480
      %v3033 = vsel %vm3032, %v3000, %v2744
      %v3034 = vsel %vm3032, %v3001, %v2746
      %v3035 = vsel %vm3032, %v3002, %v2748
      %v3036 = vsel %vm3032, %v3003, %v2750
      %v3037 = vsel %vm3032, %v3004, %v2752
      %v3038 = vsel %vm3032, %v3005, %v2754
      %v3039 = vsel %vm3032, %v3006, %v2756
      %v3040 = vsel %vm3032, %v3007, %v2758
      %v3041 = vsel %vm3032, %v3008, %v2760
      %v3042 = vsel %vm3032, %v3009, %v2762
      %v3043 = vsel %vm3032, %v3010, %v2764
      %v3044 = vsel %vm3032, %v3011, %v2766
      %v3045 = vsel %vm3032, %v3012, %v2768
      %v3046 = vsel %vm3032, %v3013, %v2770
      %v3047 = vsel %vm3032, %v3014, %v2772
      %v3048 = vsel %vm3032, %v3015, %v2774
      %v3049 = vsel %vm3032, %v3016, %v2776
      %v3050 = vsel %vm3032, %v3017, %v2778
      %v3051 = vsel %vm3032, %v3018, %v2780
      %v3052 = vsel %vm3032, %v3019, %v2782
      %v3053 = vsel %vm3032, %v3020, %v2784
      %v3054 = vsel %vm3032, %v3021, %v2786
      %v3055 = vsel %vm3032, %v3022, %v2788
      %v3056 = vsel %vm3032, %v3023, %v2790
      %v3057 = vsel %vm3032, %v3024, %v2792
      %v3058 = vsel %vm3032, %v3025, %v2794
      %v3059 = vsel %vm3032, %v3026, %v2796
      %v3060 = vsel %vm3032, %v3027, %v2798
      %v3061 = vsel %vm3032, %v3028, %v2800
      %v3062 = vsel %vm3032, %v3029, %v2802
      %v3063 = vsel %vm3032, %v3030, %v2804
      %v3064 = vsel %vm3032, %v3031, %v2804
      %v3065 = vld [vmem:[%s3] sm:$0xff]
      %v3066 = vld [vmem:[%s3 + $0x8] sm:$0xff]
      %v3067 = vld [vmem:[%s3 + $0x10] sm:$0xff]
      %v3068 = vld [vmem:[%s3 + $0x18] sm:$0xff]
      %v3069 = vld [vmem:[%s3 + $0x20] sm:$0xff]
      %v3070 = vld [vmem:[%s3 + $0x28] sm:$0xff]
      %v3071 = vld [vmem:[%s3 + $0x30] sm:$0xff]
      %v3072 = vld [vmem:[%s3 + $0x38] sm:$0xff]
      %v3073 = vld [vmem:[%s3 + $0x40] sm:$0xff]
      %v3074 = vld [vmem:[%s3 + $0x48] sm:$0xff]
      %v3075 = vld [vmem:[%s3 + $0x50] sm:$0xff]
      %v3076 = vld [vmem:[%s3 + $0x58] sm:$0xff]
      %v3077 = vld [vmem:[%s3 + $0x60] sm:$0xff]
      %v3078 = vld [vmem:[%s3 + $0x68] sm:$0xff]
      %v3079 = vld [vmem:[%s3 + $0x70] sm:$0xff]
      %v3080 = vld [vmem:[%s3 + $0x78] sm:$0xff]
      %v3081 = vld [vmem:[%s3 + $0x80] sm:$0xff]
      %v3082 = vld [vmem:[%s3 + $0x88] sm:$0xff]
      %v3083 = vld [vmem:[%s4] sm:$0x1]
      %v3085 = vlaneseq
      %v3086 = vshrl.u32 %v3085, 7
      %v3087 = vsub.s32 0, %v3086
      %v3088 = vrot.slane %v3083, %v3087
      %v3091 = vsel %vm2836, %v2013, 0
      %v3094 = vsel %vm2836, %v2014, 0
      %v3097 = vsel %vm2836, %v2015, 0
      %v3100 = vsel %vm2836, %v2016, 0
      %v3103 = vsel %vm2836, %v2017, 0
      %v3106 = vsel %vm2836, %v2018, 0
      %v3109 = vsel %vm2836, %v2019, 0
      %v3112 = vsel %vm2836, %v2020, 0
      %v3115 = vsel %vm2836, %v2021, 0
      %v3118 = vsel %vm2836, %v2022, 0
      %v3121 = vsel %vm2836, %v2023, 0
      %v3124 = vsel %vm2836, %v2024, 0
      %v3127 = vsel %vm2836, %v2025, 0
      %v3130 = vsel %vm2836, %v2026, 0
      %v3133 = vsel %vm2836, %v2027, 0
      %v3136 = vsel %vm2836, %v2028, 0
      %v3139 = vsel %vm2836, %v2029, 0
      %v3142 = vsel %vm2836, %v2030, 0
      %v3145 = vsel %vm2836, %v2031, 0
      %v3148 = vsel %vm2836, %v2032, 0
      %v3151 = vsel %vm2836, %v2033, 0
      %v3154 = vsel %vm2836, %v2034, 0
      %v3157 = vsel %vm2836, %v2035, 0
      %v3160 = vsel %vm2836, %v2036, 0
      %v3163 = vsel %vm2836, %v2037, 0
      %v3166 = vsel %vm2836, %v2038, 0
      %v3169 = vsel %vm2836, %v2039, 0
      %v3172 = vsel %vm2836, %v2040, 0
      %v3175 = vsel %vm2836, %v2041, 0
      %v3178 = vsel %vm2836, %v2042, 0
      %v3180 = vsel %vm2836, 0.0, 0
      %3182 = vmatprep.subr.mxu0 0.0
      %3183 = vmatpush1.msra.mxu0 %v3080
      %3184 = vmatprep.subr.mxu0 0.0
      %3185 = vmatpush1.msra.mxu0 %v3079
      %3186 = vmatprep.subr.mxu0 0.0
      %3187 = vmatpush1.msra.mxu0 %v3078
      %3188 = vmatprep.subr.mxu0 0.0
      %3189 = vmatpush1.msra.mxu0 %v3077
      %3190 = vmatprep.subr.mxu0 0.0
      %3191 = vmatpush1.msra.mxu0 %v3076
      %3192 = vmatprep.subr.mxu0 0.0
      %3193 = vmatpush1.msra.mxu0 %v3075
      %3194 = vmatprep.subr.mxu0 0.0
      %3195 = vmatpush1.msra.mxu0 %v3074
      %3196 = vmatprep.subr.mxu0 0.0
      %3197 = vmatpush1.msra.mxu0 %v3073
      %3198 = vmatprep.subr.mxu0 0.0
      %3199 = vmatpush1.msra.mxu0 %v3072
      %3200 = vmatprep.subr.mxu0 0.0
      %3201 = vmatpush1.msra.mxu0 %v3071
      %3202 = vmatprep.subr.mxu0 0.0
      %3203 = vmatpush1.msra.mxu0 %v3070
      %3204 = vmatprep.subr.mxu0 0.0
      %3205 = vmatpush1.msra.mxu0 %v3069
      %3206 = vmatprep.subr.mxu0 0.0
      %3207 = vmatpush1.msra.mxu0 %v3068
      %3208 = vmatprep.subr.mxu0 0.0
      %3209 = vmatpush1.msra.mxu0 %v3067
      %3210 = vmatprep.subr.mxu0 0.0
      %3211 = vmatpush1.msra.mxu0 %v3066
      %3212 = vmatprep.subr.mxu0 0.0
      %3213 = vmatpush1.msra.mxu0 %v3065
      %3214 = vmatprep.subr.mxu0 0.0
      %3215 = vmatpush2.msra.mxu0 0.0
      %3216 = vmatprep.subr.mxu0 0.0
      %3217 = vmatpush2.msra.mxu0 0.0
      %3218 = vmatprep.subr.mxu0 0.0
      %3219 = vmatpush2.msra.mxu0 0.0
      %3220 = vmatprep.subr.mxu0 0.0
      %3221 = vmatpush2.msra.mxu0 0.0
      %3222 = vmatprep.subr.mxu0 0.0
      %3223 = vmatpush2.msra.mxu0 0.0
      %3224 = vmatprep.subr.mxu0 0.0
      %3225 = vmatpush2.msra.mxu0 0.0
      %3226 = vmatprep.subr.mxu0 0.0
      %3227 = vmatpush2.msra.mxu0 0.0
      %3228 = vmatprep.subr.mxu0 0.0
      %3229 = vmatpush2.msra.mxu0 0.0
      %3230 = vmatprep.subr.mxu0 0.0
      %3231 = vmatpush2.msra.mxu0 0.0
      %3232 = vmatprep.subr.mxu0 0.0
      %3233 = vmatpush2.msra.mxu0 0.0
      %3234 = vmatprep.subr.mxu0 0.0
      %3235 = vmatpush2.msra.mxu0 0.0
      %3236 = vmatprep.subr.mxu0 0.0
      %3237 = vmatpush2.msra.mxu0 0.0
      %3238 = vmatprep.subr.mxu0 0.0
      %3239 = vmatpush2.msra.mxu0 0.0
      %3240 = vmatprep.subr.mxu0 0.0
      %3241 = vmatpush2.msra.mxu0 0.0
      %3242 = vmatprep.subr.mxu0 0.0
      %3243 = vmatpush2.msra.mxu0 %v3082
      %3244 = vmatprep.subr.mxu0 0.0
      %3245 = vmatpush2.msra.mxu0 %v3081
      %3246 = vmatprep.mubr.f32.mxu0 %v3091
      %3247 = vmatmul.mubr.f32.gmra.mxu0 %v3033
      %v3248 = vpop.f32.mrf.mxu0
      %v3249 = vadd.f32 %v3088, %v3248
      %v3250 = vpop.f32.mrf.mxu0
      %3251 = vmatprep.mubr.f32.mxu0 %v3094
      %3252 = vmatmul.mubr.f32.gmra.mxu0 %v3034
      %v3253 = vpop.f32.mrf.mxu0
      %v3254 = vadd.f32 %v3088, %v3253
      %v3255 = vpop.f32.mrf.mxu0
      %3256 = vmatprep.mubr.f32.mxu0 %v3097
      %3257 = vmatmul.mubr.f32.gmra.mxu0 %v3035
      %v3258 = vpop.f32.mrf.mxu0
      %v3259 = vadd.f32 %v3088, %v3258
      %v3260 = vpop.f32.mrf.mxu0
      %3261 = vmatprep.mubr.f32.mxu0 %v3100
      %3262 = vmatmul.mubr.f32.gmra.mxu0 %v3036
      %v3263 = vpop.f32.mrf.mxu0
      %v3264 = vadd.f32 %v3088, %v3263
      %v3265 = vpop.f32.mrf.mxu0
      %3266 = vmatprep.mubr.f32.mxu0 %v3103
      %3267 = vmatmul.mubr.f32.gmra.mxu0 %v3037
      %v3268 = vpop.f32.mrf.mxu0
      %v3269 = vadd.f32 %v3088, %v3268
      %v3270 = vpop.f32.mrf.mxu0
      %3271 = vmatprep.mubr.f32.mxu0 %v3106
      %3272 = vmatmul.mubr.f32.gmra.mxu0 %v3038
      %v3273 = vpop.f32.mrf.mxu0
      %v3274 = vadd.f32 %v3088, %v3273
      %v3275 = vpop.f32.mrf.mxu0
      %3276 = vmatprep.mubr.f32.mxu0 %v3109
      %3277 = vmatmul.mubr.f32.gmra.mxu0 %v3039
      %v3278 = vpop.f32.mrf.mxu0
      %v3279 = vadd.f32 %v3088, %v3278
      %v3280 = vpop.f32.mrf.mxu0
      %3281 = vmatprep.mubr.f32.mxu0 %v3112
      %3282 = vmatmul.mubr.f32.gmra.mxu0 %v3040
      %v3283 = vpop.f32.mrf.mxu0
      %v3284 = vadd.f32 %v3088, %v3283
      %v3285 = vpop.f32.mrf.mxu0
      %3286 = vmatprep.mubr.f32.mxu0 %v3115
      %3287 = vmatmul.mubr.f32.gmra.mxu0 %v3041
      %v3288 = vpop.f32.mrf.mxu0
      %v3289 = vadd.f32 %v3088, %v3288
      %v3290 = vpop.f32.mrf.mxu0
      %3291 = vmatprep.mubr.f32.mxu0 %v3118
      %3292 = vmatmul.mubr.f32.gmra.mxu0 %v3042
      %v3293 = vpop.f32.mrf.mxu0
      %v3294 = vadd.f32 %v3088, %v3293
      %v3295 = vpop.f32.mrf.mxu0
      %3296 = vmatprep.mubr.f32.mxu0 %v3121
      %3297 = vmatmul.mubr.f32.gmra.mxu0 %v3043
      %v3298 = vpop.f32.mrf.mxu0
      %v3299 = vadd.f32 %v3088, %v3298
      %v3300 = vpop.f32.mrf.mxu0
      %3301 = vmatprep.mubr.f32.mxu0 %v3124
      %3302 = vmatmul.mubr.f32.gmra.mxu0 %v3044
      %v3303 = vpop.f32.mrf.mxu0
      %v3304 = vadd.f32 %v3088, %v3303
      %v3305 = vpop.f32.mrf.mxu0
      %3306 = vmatprep.mubr.f32.mxu0 %v3127
      %3307 = vmatmul.mubr.f32.gmra.mxu0 %v3045
      %v3308 = vpop.f32.mrf.mxu0
      %v3309 = vadd.f32 %v3088, %v3308
      %v3310 = vpop.f32.mrf.mxu0
      %3311 = vmatprep.mubr.f32.mxu0 %v3130
      %3312 = vmatmul.mubr.f32.gmra.mxu0 %v3046
      %v3313 = vpop.f32.mrf.mxu0
      %v3314 = vadd.f32 %v3088, %v3313
      %v3315 = vpop.f32.mrf.mxu0
      %3316 = vmatprep.mubr.f32.mxu0 %v3133
      %3317 = vmatmul.mubr.f32.gmra.mxu0 %v3047
      %v3318 = vpop.f32.mrf.mxu0
      %v3319 = vadd.f32 %v3088, %v3318
      %v3320 = vpop.f32.mrf.mxu0
      %3321 = vmatprep.mubr.f32.mxu0 %v3136
      %3322 = vmatmul.mubr.f32.gmra.mxu0 %v3048
      %v3323 = vpop.f32.mrf.mxu0
      %v3324 = vadd.f32 %v3088, %v3323
      %v3325 = vpop.f32.mrf.mxu0
      %3326 = vmatprep.mubr.f32.mxu0 %v3139
      %3327 = vmatmul.mubr.f32.gmra.mxu0 %v3049
      %v3328 = vpop.f32.mrf.mxu0
      %v3329 = vadd.f32 %v3088, %v3328
      %v3330 = vpop.f32.mrf.mxu0
      %3331 = vmatprep.mubr.f32.mxu0 %v3142
      %3332 = vmatmul.mubr.f32.gmra.mxu0 %v3050
      %v3333 = vpop.f32.mrf.mxu0
      %v3334 = vadd.f32 %v3088, %v3333
      %v3335 = vpop.f32.mrf.mxu0
      %3336 = vmatprep.mubr.f32.mxu0 %v3145
      %3337 = vmatmul.mubr.f32.gmra.mxu0 %v3051
      %v3338 = vpop.f32.mrf.mxu0
      %v3339 = vadd.f32 %v3088, %v3338
      %v3340 = vpop.f32.mrf.mxu0
      %3341 = vmatprep.mubr.f32.mxu0 %v3148
      %3342 = vmatmul.mubr.f32.gmra.mxu0 %v3052
      %v3343 = vpop.f32.mrf.mxu0
      %v3344 = vadd.f32 %v3088, %v3343
      %v3345 = vpop.f32.mrf.mxu0
      %3346 = vmatprep.mubr.f32.mxu0 %v3151
      %3347 = vmatmul.mubr.f32.gmra.mxu0 %v3053
      %v3348 = vpop.f32.mrf.mxu0
      %v3349 = vadd.f32 %v3088, %v3348
      %v3350 = vpop.f32.mrf.mxu0
      %3351 = vmatprep.mubr.f32.mxu0 %v3154
      %3352 = vmatmul.mubr.f32.gmra.mxu0 %v3054
      %v3353 = vpop.f32.mrf.mxu0
      %v3354 = vadd.f32 %v3088, %v3353
      %v3355 = vpop.f32.mrf.mxu0
      %3356 = vmatprep.mubr.f32.mxu0 %v3157
      %3357 = vmatmul.mubr.f32.gmra.mxu0 %v3055
      %v3358 = vpop.f32.mrf.mxu0
      %v3359 = vadd.f32 %v3088, %v3358
      %v3360 = vpop.f32.mrf.mxu0
      %3361 = vmatprep.mubr.f32.mxu0 %v3160
      %3362 = vmatmul.mubr.f32.gmra.mxu0 %v3056
      %v3363 = vpop.f32.mrf.mxu0
      %v3364 = vadd.f32 %v3088, %v3363
      %v3365 = vpop.f32.mrf.mxu0
      %3366 = vmatprep.mubr.f32.mxu0 %v3163
      %3367 = vmatmul.mubr.f32.gmra.mxu0 %v3057
      %v3368 = vpop.f32.mrf.mxu0
      %v3369 = vadd.f32 %v3088, %v3368
      %v3370 = vpop.f32.mrf.mxu0
      %3371 = vmatprep.mubr.f32.mxu0 %v3166
      %3372 = vmatmul.mubr.f32.gmra.mxu0 %v3058
      %v3373 = vpop.f32.mrf.mxu0
      %v3374 = vadd.f32 %v3088, %v3373
      %v3375 = vpop.f32.mrf.mxu0
      %3376 = vmatprep.mubr.f32.mxu0 %v3169
      %3377 = vmatmul.mubr.f32.gmra.mxu0 %v3059
      %v3378 = vpop.f32.mrf.mxu0
      %v3379 = vadd.f32 %v3088, %v3378
      %v3380 = vpop.f32.mrf.mxu0
      %3381 = vmatprep.mubr.f32.mxu0 %v3172
      %3382 = vmatmul.mubr.f32.gmra.mxu0 %v3060
      %v3383 = vpop.f32.mrf.mxu0
      %v3384 = vadd.f32 %v3088, %v3383
      %v3385 = vpop.f32.mrf.mxu0
      %3386 = vmatprep.mubr.f32.mxu0 %v3175
      %3387 = vmatmul.mubr.f32.gmra.mxu0 %v3061
      %v3388 = vpop.f32.mrf.mxu0
      %v3389 = vadd.f32 %v3088, %v3388
      %v3390 = vpop.f32.mrf.mxu0
      %3391 = vmatprep.mubr.f32.mxu0 %v3178
      %3392 = vmatmul.mubr.f32.gmra.mxu0 %v3062
      %v3393 = vpop.f32.mrf.mxu0
      %v3394 = vadd.f32 %v3088, %v3393
      %v3395 = vpop.f32.mrf.mxu0
      %3396 = vmatprep.mubr.f32.mxu0 %v3180
      %3397 = vmatmul.mubr.f32.gmra.mxu0 %v3063
      %v3398 = vpop.f32.mrf.mxu0
      %v3399 = vadd.f32 %v3088, %v3398
      %v3400 = vpop.f32.mrf.mxu0
      %3401 = vmatprep.mubr.f32.mxu0 %v3180
      %3402 = vmatmul.mubr.f32.gmra.mxu0 %v3064
      %v3403 = vpop.f32.mrf.mxu0
      %v3404 = vadd.f32 %v3088, %v3403
      %v3405 = vpop.f32.mrf.mxu0
      %3406 = vdwg.mxu0
      %v3407 = vmul.f32 %v3249, 0.5
      %v3408 = vmul.f32 %v3254, 0.5
      %v3409 = vmul.f32 %v3259, 0.5
      %v3410 = vmul.f32 %v3264, 0.5
      %v3411 = vmul.f32 %v3269, 0.5
      %v3412 = vmul.f32 %v3274, 0.5
      %v3413 = vmul.f32 %v3279, 0.5
      %v3414 = vmul.f32 %v3284, 0.5
      %v3415 = vmul.f32 %v3289, 0.5
      %v3416 = vmul.f32 %v3294, 0.5
      %v3417 = vmul.f32 %v3299, 0.5
      %v3418 = vmul.f32 %v3304, 0.5
      %v3419 = vmul.f32 %v3309, 0.5
      %v3420 = vmul.f32 %v3314, 0.5
      %v3421 = vmul.f32 %v3319, 0.5
      %v3422 = vmul.f32 %v3324, 0.5
      %v3423 = vmul.f32 %v3329, 0.5
      %v3424 = vmul.f32 %v3334, 0.5
      %v3425 = vmul.f32 %v3339, 0.5
      %v3426 = vmul.f32 %v3344, 0.5
      %v3427 = vmul.f32 %v3349, 0.5
      %v3428 = vmul.f32 %v3354, 0.5
      %v3429 = vmul.f32 %v3359, 0.5
      %v3430 = vmul.f32 %v3364, 0.5
      %v3431 = vmul.f32 %v3369, 0.5
      %v3432 = vmul.f32 %v3374, 0.5
      %v3433 = vmul.f32 %v3379, 0.5
      %v3434 = vmul.f32 %v3384, 0.5
      %v3435 = vmul.f32 %v3389, 0.5
      %v3436 = vmul.f32 %v3394, 0.5
      %v3437 = vmul.f32 %v3399, 0.5
      %v3438 = vmul.f32 %v3404, 0.5
      %v3439 = vmul.f32 %v3249, 0.70710677
      %v3440 = vmul.f32 %v3254, 0.70710677
      %v3441 = vmul.f32 %v3259, 0.70710677
      %v3442 = vmul.f32 %v3264, 0.70710677
      %v3443 = vmul.f32 %v3269, 0.70710677
      %v3444 = vmul.f32 %v3274, 0.70710677
      %v3445 = vmul.f32 %v3279, 0.70710677
      %v3446 = vmul.f32 %v3284, 0.70710677
      %v3447 = vmul.f32 %v3289, 0.70710677
      %v3448 = vmul.f32 %v3294, 0.70710677
      %v3449 = vmul.f32 %v3299, 0.70710677
      %v3450 = vmul.f32 %v3304, 0.70710677
      %v3451 = vmul.f32 %v3309, 0.70710677
      %v3452 = vmul.f32 %v3314, 0.70710677
      %v3453 = vmul.f32 %v3319, 0.70710677
      %v3454 = vmul.f32 %v3324, 0.70710677
      %v3455 = vmul.f32 %v3329, 0.70710677
      %v3456 = vmul.f32 %v3334, 0.70710677
      %v3457 = vmul.f32 %v3339, 0.70710677
      %v3458 = vmul.f32 %v3344, 0.70710677
      %v3459 = vmul.f32 %v3349, 0.70710677
      %v3460 = vmul.f32 %v3354, 0.70710677
      %v3461 = vmul.f32 %v3359, 0.70710677
      %v3462 = vmul.f32 %v3364, 0.70710677
      %v3463 = vmul.f32 %v3369, 0.70710677
      %v3464 = vmul.f32 %v3374, 0.70710677
      %v3465 = vmul.f32 %v3379, 0.70710677
      %v3466 = vmul.f32 %v3384, 0.70710677
      %v3467 = vmul.f32 %v3389, 0.70710677
      %v3468 = vmul.f32 %v3394, 0.70710677
      %v3469 = vmul.f32 %v3399, 0.70710677
      %v3470 = vmul.f32 %v3404, 0.70710677
      %v3471 = verf.f32.pop %v3439
      %v3472 = verf.f32.pop %v3440
      %v3473 = verf.f32.pop %v3441
      %v3474 = verf.f32.pop %v3442
      %v3475 = verf.f32.pop %v3443
      %v3476 = verf.f32.pop %v3444
      %v3477 = verf.f32.pop %v3445
      %v3478 = verf.f32.pop %v3446
      %v3479 = verf.f32.pop %v3447
      %v3480 = verf.f32.pop %v3448
      %v3481 = verf.f32.pop %v3449
      %v3482 = verf.f32.pop %v3450
      %v3483 = verf.f32.pop %v3451
      %v3484 = verf.f32.pop %v3452
      %v3485 = verf.f32.pop %v3453
      %v3486 = verf.f32.pop %v3454
      %v3487 = verf.f32.pop %v3455
      %v3488 = verf.f32.pop %v3456
      %v3489 = verf.f32.pop %v3457
      %v3490 = verf.f32.pop %v3458
      %v3491 = verf.f32.pop %v3459
      %v3492 = verf.f32.pop %v3460
      %v3493 = verf.f32.pop %v3461
      %v3494 = verf.f32.pop %v3462
      %v3495 = verf.f32.pop %v3463
      %v3496 = verf.f32.pop %v3464
      %v3497 = verf.f32.pop %v3465
      %v3498 = verf.f32.pop %v3466
      %v3499 = verf.f32.pop %v3467
      %v3500 = verf.f32.pop %v3468
      %v3501 = verf.f32.pop %v3469
      %v3502 = verf.f32.pop %v3470
      %v3503 = vadd.f32 %v3471, 1.0
      %v3504 = vadd.f32 %v3472, 1.0
      %v3505 = vadd.f32 %v3473, 1.0
      %v3506 = vadd.f32 %v3474, 1.0
      %v3507 = vadd.f32 %v3475, 1.0
      %v3508 = vadd.f32 %v3476, 1.0
      %v3509 = vadd.f32 %v3477, 1.0
      %v3510 = vadd.f32 %v3478, 1.0
      %v3511 = vadd.f32 %v3479, 1.0
      %v3512 = vadd.f32 %v3480, 1.0
      %v3513 = vadd.f32 %v3481, 1.0
      %v3514 = vadd.f32 %v3482, 1.0
      %v3515 = vadd.f32 %v3483, 1.0
      %v3516 = vadd.f32 %v3484, 1.0
      %v3517 = vadd.f32 %v3485, 1.0
      %v3518 = vadd.f32 %v3486, 1.0
      %v3519 = vadd.f32 %v3487, 1.0
      %v3520 = vadd.f32 %v3488, 1.0
      %v3521 = vadd.f32 %v3489, 1.0
      %v3522 = vadd.f32 %v3490, 1.0
      %v3523 = vadd.f32 %v3491, 1.0
      %v3524 = vadd.f32 %v3492, 1.0
      %v3525 = vadd.f32 %v3493, 1.0
      %v3526 = vadd.f32 %v3494, 1.0
      %v3527 = vadd.f32 %v3495, 1.0
      %v3528 = vadd.f32 %v3496, 1.0
      %v3529 = vadd.f32 %v3497, 1.0
      %v3530 = vadd.f32 %v3498, 1.0
      %v3531 = vadd.f32 %v3499, 1.0
      %v3532 = vadd.f32 %v3500, 1.0
      %v3533 = vadd.f32 %v3501, 1.0
      %v3534 = vadd.f32 %v3502, 1.0
      %v3535 = vmul.f32 %v3407, %v3503
      %v3536 = vmul.f32 %v3408, %v3504
      %v3537 = vmul.f32 %v3409, %v3505
      %v3538 = vmul.f32 %v3410, %v3506
      %v3539 = vmul.f32 %v3411, %v3507
      %v3540 = vmul.f32 %v3412, %v3508
      %v3541 = vmul.f32 %v3413, %v3509
      %v3542 = vmul.f32 %v3414, %v3510
      %v3543 = vmul.f32 %v3415, %v3511
      %v3544 = vmul.f32 %v3416, %v3512
      %v3545 = vmul.f32 %v3417, %v3513
      %v3546 = vmul.f32 %v3418, %v3514
      %v3547 = vmul.f32 %v3419, %v3515
      %v3548 = vmul.f32 %v3420, %v3516
      %v3549 = vmul.f32 %v3421, %v3517
      %v3550 = vmul.f32 %v3422, %v3518
      %v3551 = vmul.f32 %v3423, %v3519
      %v3552 = vmul.f32 %v3424, %v3520
      %v3553 = vmul.f32 %v3425, %v3521
      %v3554 = vmul.f32 %v3426, %v3522
      %v3555 = vmul.f32 %v3427, %v3523
      %v3556 = vmul.f32 %v3428, %v3524
      %v3557 = vmul.f32 %v3429, %v3525
      %v3558 = vmul.f32 %v3430, %v3526
      %v3559 = vmul.f32 %v3431, %v3527
      %v3560 = vmul.f32 %v3432, %v3528
      %v3561 = vmul.f32 %v3433, %v3529
      %v3562 = vmul.f32 %v3434, %v3530
      %v3563 = vmul.f32 %v3435, %v3531
      %v3564 = vmul.f32 %v3436, %v3532
      %v3565 = vmul.f32 %v3437, %v3533
      %v3566 = vmul.f32 %v3438, %v3534
      %v3597 = vrot.slane %v3535, 7
      %v3598 = vrot.slane %v3536, 7
      %v3599 = vsel %vm1529, %v3597, %v3598
      %v3600 = vrot.slane %v3537, 7
      %v3601 = vsel %vm1529, %v3598, %v3600
      %v3602 = vrot.slane %v3538, 7
      %v3603 = vsel %vm1529, %v3600, %v3602
      %v3604 = vrot.slane %v3539, 7
      %v3605 = vsel %vm1529, %v3602, %v3604
      %v3606 = vrot.slane %v3540, 7
      %v3607 = vsel %vm1529, %v3604, %v3606
      %v3608 = vrot.slane %v3541, 7
      %v3609 = vsel %vm1529, %v3606, %v3608
      %v3610 = vrot.slane %v3542, 7
      %v3611 = vsel %vm1529, %v3608, %v3610
      %v3612 = vrot.slane %v3543, 7
      %v3613 = vsel %vm1529, %v3610, %v3612
      %v3614 = vrot.slane %v3544, 7
      %v3615 = vsel %vm1529, %v3612, %v3614
      %v3616 = vrot.slane %v3545, 7
      %v3617 = vsel %vm1529, %v3614, %v3616
      %v3618 = vrot.slane %v3546, 7
      %v3619 = vsel %vm1529, %v3616, %v3618
      %v3620 = vrot.slane %v3547, 7
      %v3621 = vsel %vm1529, %v3618, %v3620
      %v3622 = vrot.slane %v3548, 7
      %v3623 = vsel %vm1529, %v3620, %v3622
      %v3624 = vrot.slane %v3549, 7
      %v3625 = vsel %vm1529, %v3622, %v3624
      %v3626 = vrot.slane %v3550, 7
      %v3627 = vsel %vm1529, %v3624, %v3626
      %v3628 = vrot.slane %v3551, 7
      %v3629 = vsel %vm1529, %v3626, %v3628
      %v3630 = vrot.slane %v3552, 7
      %v3631 = vsel %vm1529, %v3628, %v3630
      %v3632 = vrot.slane %v3553, 7
      %v3633 = vsel %vm1529, %v3630, %v3632
      %v3634 = vrot.slane %v3554, 7
      %v3635 = vsel %vm1529, %v3632, %v3634
      %v3636 = vrot.slane %v3555, 7
      %v3637 = vsel %vm1529, %v3634, %v3636
      %v3638 = vrot.slane %v3556, 7
      %v3639 = vsel %vm1529, %v3636, %v3638
      %v3640 = vrot.slane %v3557, 7
      %v3641 = vsel %vm1529, %v3638, %v3640
      %v3642 = vrot.slane %v3558, 7
      %v3643 = vsel %vm1529, %v3640, %v3642
      %v3644 = vrot.slane %v3559, 7
      %v3645 = vsel %vm1529, %v3642, %v3644
      %v3646 = vrot.slane %v3560, 7
      %v3647 = vsel %vm1529, %v3644, %v3646
      %v3648 = vrot.slane %v3561, 7
      %v3649 = vsel %vm1529, %v3646, %v3648
      %v3650 = vrot.slane %v3562, 7
      %v3651 = vsel %vm1529, %v3648, %v3650
      %v3652 = vrot.slane %v3563, 7
      %v3653 = vsel %vm1529, %v3650, %v3652
      %v3654 = vrot.slane %v3564, 7
      %v3655 = vsel %vm1529, %v3652, %v3654
      %v3686 = vsel %vm1529, 0.0, %v3597
      %v3687 = vsel %vm1654, %v3686, 0.0
      %v3688 = vsel %vm1655, %v3599, 0.0
      %v3689 = vsel %vm1656, %v3601, 0.0
      %v3690 = vsel %vm1657, %v3603, 0.0
      %v3691 = vsel %vm1658, %v3605, 0.0
      %v3692 = vsel %vm1659, %v3607, 0.0
      %v3693 = vsel %vm1660, %v3609, 0.0
      %v3694 = vsel %vm1661, %v3611, 0.0
      %v3695 = vsel %vm1662, %v3613, 0.0
      %v3696 = vsel %vm1663, %v3615, 0.0
      %v3697 = vsel %vm1664, %v3617, 0.0
      %v3698 = vsel %vm1665, %v3619, 0.0
      %v3699 = vsel %vm1666, %v3621, 0.0
      %v3700 = vsel %vm1667, %v3623, 0.0
      %v3701 = vsel %vm1668, %v3625, 0.0
      %v3702 = vsel %vm1669, %v3627, 0.0
      %v3703 = vsel %vm1670, %v3629, 0.0
      %v3704 = vsel %vm1671, %v3631, 0.0
      %v3705 = vsel %vm1672, %v3633, 0.0
      %v3706 = vsel %vm1673, %v3635, 0.0
      %v3707 = vsel %vm1674, %v3637, 0.0
      %v3708 = vsel %vm1675, %v3639, 0.0
      %v3709 = vsel %vm1676, %v3641, 0.0
      %v3710 = vsel %vm1677, %v3643, 0.0
      %v3711 = vsel %vm1678, %v3645, 0.0
      %v3712 = vsel %vm1679, %v3647, 0.0
      %v3713 = vsel %vm1680, %v3649, 0.0
      %v3714 = vsel %vm1681, %v3651, 0.0
      %v3715 = vsel %vm1682, %v3653, 0.0
      %v3716 = vsel %vm1683, %v3655, 0.0
      %v3718 = vrot.slane %v3535, 1
      %v3719 = vrot.slane %v3536, 1
      %v3720 = vsel %vm1715, %v3718, %v3719
      %v3721 = vrot.slane %v3537, 1
      %v3722 = vsel %vm1715, %v3719, %v3721
      %v3723 = vrot.slane %v3538, 1
      %v3724 = vsel %vm1715, %v3721, %v3723
      %v3725 = vrot.slane %v3539, 1
      %v3726 = vsel %vm1715, %v3723, %v3725
      %v3727 = vrot.slane %v3540, 1
      %v3728 = vsel %vm1715, %v3725, %v3727
      %v3729 = vrot.slane %v3541, 1
      %v3730 = vsel %vm1715, %v3727, %v3729
      %v3731 = vrot.slane %v3542, 1
      %v3732 = vsel %vm1715, %v3729, %v3731
      %v3733 = vrot.slane %v3543, 1
      %v3734 = vsel %vm1715, %v3731, %v3733
      %v3735 = vrot.slane %v3544, 1
      %v3736 = vsel %vm1715, %v3733, %v3735
      %v3737 = vrot.slane %v3545, 1
      %v3738 = vsel %vm1715, %v3735, %v3737
      %v3739 = vrot.slane %v3546, 1
      %v3740 = vsel %vm1715, %v3737, %v3739
      %v3741 = vrot.slane %v3547, 1
      %v3742 = vsel %vm1715, %v3739, %v3741
      %v3743 = vrot.slane %v3548, 1
      %v3744 = vsel %vm1715, %v3741, %v3743
      %v3745 = vrot.slane %v3549, 1
      %v3746 = vsel %vm1715, %v3743, %v3745
      %v3747 = vrot.slane %v3550, 1
      %v3748 = vsel %vm1715, %v3745, %v3747
      %v3749 = vrot.slane %v3551, 1
      %v3750 = vsel %vm1715, %v3747, %v3749
      %v3751 = vrot.slane %v3552, 1
      %v3752 = vsel %vm1715, %v3749, %v3751
      %v3753 = vrot.slane %v3553, 1
      %v3754 = vsel %vm1715, %v3751, %v3753
      %v3755 = vrot.slane %v3554, 1
      %v3756 = vsel %vm1715, %v3753, %v3755
      %v3757 = vrot.slane %v3555, 1
      %v3758 = vsel %vm1715, %v3755, %v3757
      %v3759 = vrot.slane %v3556, 1
      %v3760 = vsel %vm1715, %v3757, %v3759
      %v3761 = vrot.slane %v3557, 1
      %v3762 = vsel %vm1715, %v3759, %v3761
      %v3763 = vrot.slane %v3558, 1
      %v3764 = vsel %vm1715, %v3761, %v3763
      %v3765 = vrot.slane %v3559, 1
      %v3766 = vsel %vm1715, %v3763, %v3765
      %v3767 = vrot.slane %v3560, 1
      %v3768 = vsel %vm1715, %v3765, %v3767
      %v3769 = vrot.slane %v3561, 1
      %v3770 = vsel %vm1715, %v3767, %v3769
      %v3771 = vrot.slane %v3562, 1
      %v3772 = vsel %vm1715, %v3769, %v3771
      %v3773 = vrot.slane %v3563, 1
      %v3774 = vsel %vm1715, %v3771, %v3773
      %v3775 = vrot.slane %v3564, 1
      %v3776 = vsel %vm1715, %v3773, %v3775
      %v3777 = vrot.slane %v3565, 1
      %v3778 = vsel %vm1715, %v3775, %v3777
      %v3810 = vsel %vm1715, 0.0, %v3718
      %v3811 = vsel %vm1842, %v3810, 0.0
      %v3812 = vsel %vm1843, %v3720, 0.0
      %v3813 = vsel %vm1844, %v3722, 0.0
      %v3814 = vsel %vm1845, %v3724, 0.0
      %v3815 = vsel %vm1846, %v3726, 0.0
      %v3816 = vsel %vm1847, %v3728, 0.0
      %v3817 = vsel %vm1848, %v3730, 0.0
      %v3818 = vsel %vm1849, %v3732, 0.0
      %v3819 = vsel %vm1850, %v3734, 0.0
      %v3820 = vsel %vm1851, %v3736, 0.0
      %v3821 = vsel %vm1852, %v3738, 0.0
      %v3822 = vsel %vm1853, %v3740, 0.0
      %v3823 = vsel %vm1854, %v3742, 0.0
      %v3824 = vsel %vm1855, %v3744, 0.0
      %v3825 = vsel %vm1856, %v3746, 0.0
      %v3826 = vsel %vm1857, %v3748, 0.0
      %v3827 = vsel %vm1858, %v3750, 0.0
      %v3828 = vsel %vm1859, %v3752, 0.0
      %v3829 = vsel %vm1860, %v3754, 0.0
      %v3830 = vsel %vm1861, %v3756, 0.0
      %v3831 = vsel %vm1862, %v3758, 0.0
      %v3832 = vsel %vm1863, %v3760, 0.0
      %v3833 = vsel %vm1864, %v3762, 0.0
      %v3834 = vsel %vm1865, %v3764, 0.0
      %v3835 = vsel %vm1866, %v3766, 0.0
      %v3836 = vsel %vm1867, %v3768, 0.0
      %v3837 = vsel %vm1868, %v3770, 0.0
      %v3838 = vsel %vm1869, %v3772, 0.0
      %v3839 = vsel %vm1870, %v3774, 0.0
      %v3840 = vsel %vm1871, %v3776, 0.0
      %v3841 = vsel %vm1872, %v3778, 0.0
      %v3843 = vrot.slane %v3565, 7
      %v3844 = vsel %vm1529, %v3654, %v3843
      %v3845 = vrot.slane %v3566, 7
      %v3846 = vsel %vm1529, %v3843, %v3845
      %v3849 = vsel %vm1652, %v3686, 0.0
      %v3850 = vsel %vm1653, %v3599, 0.0
      %v3851 = vsel %vm1654, %v3601, 0.0
      %v3852 = vsel %vm1655, %v3603, 0.0
      %v3853 = vsel %vm1656, %v3605, 0.0
      %v3854 = vsel %vm1657, %v3607, 0.0
      %v3855 = vsel %vm1658, %v3609, 0.0
      %v3856 = vsel %vm1659, %v3611, 0.0
      %v3857 = vsel %vm1660, %v3613, 0.0
      %v3858 = vsel %vm1661, %v3615, 0.0
      %v3859 = vsel %vm1662, %v3617, 0.0
      %v3860 = vsel %vm1663, %v3619, 0.0
      %v3861 = vsel %vm1664, %v3621, 0.0
      %v3862 = vsel %vm1665, %v3623, 0.0
      %v3863 = vsel %vm1666, %v3625, 0.0
      %v3864 = vsel %vm1667, %v3627, 0.0
      %v3865 = vsel %vm1668, %v3629, 0.0
      %v3866 = vsel %vm1669, %v3631, 0.0
      %v3867 = vsel %vm1670, %v3633, 0.0
      %v3868 = vsel %vm1671, %v3635, 0.0
      %v3869 = vsel %vm1672, %v3637, 0.0
      %v3870 = vsel %vm1673, %v3639, 0.0
      %v3871 = vsel %vm1674, %v3641, 0.0
      %v3872 = vsel %vm1675, %v3643, 0.0
      %v3873 = vsel %vm1676, %v3645, 0.0
      %v3874 = vsel %vm1677, %v3647, 0.0
      %v3875 = vsel %vm1678, %v3649, 0.0
      %v3876 = vsel %vm1679, %v3651, 0.0
      %v3877 = vsel %vm1680, %v3653, 0.0
      %v3878 = vsel %vm1681, %v3655, 0.0
      %v3879 = vsel %vm1682, %v3844, 0.0
      %v3880 = vsel %vm1683, %v3846, 0.0
      %v3881 = vrot.slane %v3566, 1
      %v3882 = vsel %vm1715, %v3777, %v3881
      %v3885 = vsel %vm1715, %v3881, 0.0
      %v3886 = vsel %vm1841, %v3720, 0.0
      %v3887 = vsel %vm1842, %v3722, 0.0
      %v3888 = vsel %vm1843, %v3724, 0.0
      %v3889 = vsel %vm1844, %v3726, 0.0
      %v3890 = vsel %vm1845, %v3728, 0.0
      %v3891 = vsel %vm1846, %v3730, 0.0
      %v3892 = vsel %vm1847, %v3732, 0.0
      %v3893 = vsel %vm1848, %v3734, 0.0
      %v3894 = vsel %vm1849, %v3736, 0.0
      %v3895 = vsel %vm1850, %v3738, 0.0
      %v3896 = vsel %vm1851, %v3740, 0.0
      %v3897 = vsel %vm1852, %v3742, 0.0
      %v3898 = vsel %vm1853, %v3744, 0.0
      %v3899 = vsel %vm1854, %v3746, 0.0
      %v3900 = vsel %vm1855, %v3748, 0.0
      %v3901 = vsel %vm1856, %v3750, 0.0
      %v3902 = vsel %vm1857, %v3752, 0.0
      %v3903 = vsel %vm1858, %v3754, 0.0
      %v3904 = vsel %vm1859, %v3756, 0.0
      %v3905 = vsel %vm1860, %v3758, 0.0
      %v3906 = vsel %vm1861, %v3760, 0.0
      %v3907 = vsel %vm1862, %v3762, 0.0
      %v3908 = vsel %vm1863, %v3764, 0.0
      %v3909 = vsel %vm1864, %v3766, 0.0
      %v3910 = vsel %vm1865, %v3768, 0.0
      %v3911 = vsel %vm1866, %v3770, 0.0
      %v3912 = vsel %vm1867, %v3772, 0.0
      %v3913 = vsel %vm1868, %v3774, 0.0
      %v3914 = vsel %vm1869, %v3776, 0.0
      %v3915 = vsel %vm1870, %v3778, 0.0
      %v3916 = vsel %vm1871, %v3882, 0.0
      %v3917 = vsel %vm1872, %v3885, 0.0
      %v3919 = vsel %vm1529, %v3845, 0.0
      %v3920 = vsel %vm1652, %v3601, 0.0
      %v3921 = vsel %vm1653, %v3603, 0.0
      %v3922 = vsel %vm1654, %v3605, 0.0
      %v3923 = vsel %vm1655, %v3607, 0.0
      %v3924 = vsel %vm1656, %v3609, 0.0
      %v3925 = vsel %vm1657, %v3611, 0.0
      %v3926 = vsel %vm1658, %v3613, 0.0
      %v3927 = vsel %vm1659, %v3615, 0.0
      %v3928 = vsel %vm1660, %v3617, 0.0
      %v3929 = vsel %vm1661, %v3619, 0.0
      %v3930 = vsel %vm1662, %v3621, 0.0
      %v3931 = vsel %vm1663, %v3623, 0.0
      %v3932 = vsel %vm1664, %v3625, 0.0
      %v3933 = vsel %vm1665, %v3627, 0.0
      %v3934 = vsel %vm1666, %v3629, 0.0
      %v3935 = vsel %vm1667, %v3631, 0.0
      %v3936 = vsel %vm1668, %v3633, 0.0
      %v3937 = vsel %vm1669, %v3635, 0.0
      %v3938 = vsel %vm1670, %v3637, 0.0
      %v3939 = vsel %vm1671, %v3639, 0.0
      %v3940 = vsel %vm1672, %v3641, 0.0
      %v3941 = vsel %vm1673, %v3643, 0.0
      %v3942 = vsel %vm1674, %v3645, 0.0
      %v3943 = vsel %vm1675, %v3647, 0.0
      %v3944 = vsel %vm1676, %v3649, 0.0
      %v3945 = vsel %vm1677, %v3651, 0.0
      %v3946 = vsel %vm1678, %v3653, 0.0
      %v3947 = vsel %vm1679, %v3655, 0.0
      %v3948 = vsel %vm1680, %v3844, 0.0
      %v3949 = vsel %vm1681, %v3846, 0.0
      %v3950 = vsel %vm1682, %v3919, 0.0
      %v3951 = vsel %vm1841, %v3724, 0.0
      %v3952 = vsel %vm1842, %v3726, 0.0
      %v3953 = vsel %vm1843, %v3728, 0.0
      %v3954 = vsel %vm1844, %v3730, 0.0
      %v3955 = vsel %vm1845, %v3732, 0.0
      %v3956 = vsel %vm1846, %v3734, 0.0
      %v3957 = vsel %vm1847, %v3736, 0.0
      %v3958 = vsel %vm1848, %v3738, 0.0
      %v3959 = vsel %vm1849, %v3740, 0.0
      %v3960 = vsel %vm1850, %v3742, 0.0
      %v3961 = vsel %vm1851, %v3744, 0.0
      %v3962 = vsel %vm1852, %v3746, 0.0
      %v3963 = vsel %vm1853, %v3748, 0.0
      %v3964 = vsel %vm1854, %v3750, 0.0
      %v3965 = vsel %vm1855, %v3752, 0.0
      %v3966 = vsel %vm1856, %v3754, 0.0
      %v3967 = vsel %vm1857, %v3756, 0.0
      %v3968 = vsel %vm1858, %v3758, 0.0
      %v3969 = vsel %vm1859, %v3760, 0.0
      %v3970 = vsel %vm1860, %v3762, 0.0
      %v3971 = vsel %vm1861, %v3764, 0.0
      %v3972 = vsel %vm1862, %v3766, 0.0
      %v3973 = vsel %vm1863, %v3768, 0.0
      %v3974 = vsel %vm1864, %v3770, 0.0
      %v3975 = vsel %vm1865, %v3772, 0.0
      %v3976 = vsel %vm1866, %v3774, 0.0
      %v3977 = vsel %vm1867, %v3776, 0.0
      %v3978 = vsel %vm1868, %v3778, 0.0
      %v3979 = vsel %vm1869, %v3882, 0.0
      %v3980 = vsel %vm1870, %v3885, 0.0
      %3981 = vrot.lane.b32.xlu0 %v3535, 16
      %v3982 = vpop.permute.xlu0 %3981
      %3983 = vrot.lane.b32.xlu0 %v3536, 16
      %v3984 = vpop.permute.xlu0 %3983
      %3985 = vrot.lane.b32.xlu0 %v3537, 16
      %v3986 = vpop.permute.xlu0 %3985
      %3987 = vrot.lane.b32.xlu0 %v3538, 16
      %v3988 = vpop.permute.xlu0 %3987
      %3989 = vrot.lane.b32.xlu0 %v3539, 16
      %v3990 = vpop.permute.xlu0 %3989
      %3991 = vrot.lane.b32.xlu0 %v3540, 16
      %v3992 = vpop.permute.xlu0 %3991
      %3993 = vrot.lane.b32.xlu0 %v3541, 16
      %v3994 = vpop.permute.xlu0 %3993
      %3995 = vrot.lane.b32.xlu0 %v3542, 16
      %v3996 = vpop.permute.xlu0 %3995
      %3997 = vrot.lane.b32.xlu0 %v3543, 16
      %v3998 = vpop.permute.xlu0 %3997
      %3999 = vrot.lane.b32.xlu0 %v3544, 16
      %v4000 = vpop.permute.xlu0 %3999
      %4001 = vrot.lane.b32.xlu0 %v3545, 16
      %v4002 = vpop.permute.xlu0 %4001
      %4003 = vrot.lane.b32.xlu0 %v3546, 16
      %v4004 = vpop.permute.xlu0 %4003
      %4005 = vrot.lane.b32.xlu0 %v3547, 16
      %v4006 = vpop.permute.xlu0 %4005
      %4007 = vrot.lane.b32.xlu0 %v3548, 16
      %v4008 = vpop.permute.xlu0 %4007
      %4009 = vrot.lane.b32.xlu0 %v3549, 16
      %v4010 = vpop.permute.xlu0 %4009
      %4011 = vrot.lane.b32.xlu0 %v3550, 16
      %v4012 = vpop.permute.xlu0 %4011
      %4013 = vrot.lane.b32.xlu0 %v3551, 16
      %v4014 = vpop.permute.xlu0 %4013
      %4015 = vrot.lane.b32.xlu0 %v3552, 16
      %v4016 = vpop.permute.xlu0 %4015
      %4017 = vrot.lane.b32.xlu0 %v3553, 16
      %v4018 = vpop.permute.xlu0 %4017
      %4019 = vrot.lane.b32.xlu0 %v3554, 16
      %v4020 = vpop.permute.xlu0 %4019
      %4021 = vrot.lane.b32.xlu0 %v3555, 16
      %v4022 = vpop.permute.xlu0 %4021
      %4023 = vrot.lane.b32.xlu0 %v3556, 16
      %v4024 = vpop.permute.xlu0 %4023
      %4025 = vrot.lane.b32.xlu0 %v3557, 16
      %v4026 = vpop.permute.xlu0 %4025
      %4027 = vrot.lane.b32.xlu0 %v3558, 16
      %v4028 = vpop.permute.xlu0 %4027
      %4029 = vrot.lane.b32.xlu0 %v3559, 16
      %v4030 = vpop.permute.xlu0 %4029
      %4031 = vrot.lane.b32.xlu0 %v3560, 16
      %v4032 = vpop.permute.xlu0 %4031
      %4033 = vrot.lane.b32.xlu0 %v3561, 16
      %v4034 = vpop.permute.xlu0 %4033
      %4035 = vrot.lane.b32.xlu0 %v3562, 16
      %v4036 = vpop.permute.xlu0 %4035
      %4037 = vrot.lane.b32.xlu0 %v3563, 16
      %v4038 = vpop.permute.xlu0 %4037
      %4039 = vrot.lane.b32.xlu0 %v3564, 16
      %v4040 = vpop.permute.xlu0 %4039
      %4102 = vrot.lane.b32.xlu0 %v3811, 32
      %v4103 = vpop.permute.xlu0 %4102
      %4104 = vrot.lane.b32.xlu0 %v3812, 32
      %v4105 = vpop.permute.xlu0 %4104
      %4106 = vrot.lane.b32.xlu0 %v3813, 32
      %v4107 = vpop.permute.xlu0 %4106
      %4108 = vrot.lane.b32.xlu0 %v3814, 32
      %v4109 = vpop.permute.xlu0 %4108
      %4110 = vrot.lane.b32.xlu0 %v3815, 32
      %v4111 = vpop.permute.xlu0 %4110
      %4112 = vrot.lane.b32.xlu0 %v3816, 32
      %v4113 = vpop.permute.xlu0 %4112
      %4114 = vrot.lane.b32.xlu0 %v3817, 32
      %v4115 = vpop.permute.xlu0 %4114
      %4116 = vrot.lane.b32.xlu0 %v3818, 32
      %v4117 = vpop.permute.xlu0 %4116
      %4118 = vrot.lane.b32.xlu0 %v3819, 32
      %v4119 = vpop.permute.xlu0 %4118
      %4120 = vrot.lane.b32.xlu0 %v3820, 32
      %v4121 = vpop.permute.xlu0 %4120
      %4122 = vrot.lane.b32.xlu0 %v3821, 32
      %v4123 = vpop.permute.xlu0 %4122
      %4124 = vrot.lane.b32.xlu0 %v3822, 32
      %v4125 = vpop.permute.xlu0 %4124
      %4126 = vrot.lane.b32.xlu0 %v3823, 32
      %v4127 = vpop.permute.xlu0 %4126
      %4128 = vrot.lane.b32.xlu0 %v3824, 32
      %v4129 = vpop.permute.xlu0 %4128
      %4130 = vrot.lane.b32.xlu0 %v3825, 32
      %v4131 = vpop.permute.xlu0 %4130
      %4132 = vrot.lane.b32.xlu0 %v3826, 32
      %v4133 = vpop.permute.xlu0 %4132
      %4134 = vrot.lane.b32.xlu0 %v3827, 32
      %v4135 = vpop.permute.xlu0 %4134
      %4136 = vrot.lane.b32.xlu0 %v3828, 32
      %v4137 = vpop.permute.xlu0 %4136
      %4138 = vrot.lane.b32.xlu0 %v3829, 32
      %v4139 = vpop.permute.xlu0 %4138
      %4140 = vrot.lane.b32.xlu0 %v3830, 32
      %v4141 = vpop.permute.xlu0 %4140
      %4142 = vrot.lane.b32.xlu0 %v3831, 32
      %v4143 = vpop.permute.xlu0 %4142
      %4144 = vrot.lane.b32.xlu0 %v3832, 32
      %v4145 = vpop.permute.xlu0 %4144
      %4146 = vrot.lane.b32.xlu0 %v3833, 32
      %v4147 = vpop.permute.xlu0 %4146
      %4148 = vrot.lane.b32.xlu0 %v3834, 32
      %v4149 = vpop.permute.xlu0 %4148
      %4150 = vrot.lane.b32.xlu0 %v3835, 32
      %v4151 = vpop.permute.xlu0 %4150
      %4152 = vrot.lane.b32.xlu0 %v3836, 32
      %v4153 = vpop.permute.xlu0 %4152
      %4154 = vrot.lane.b32.xlu0 %v3837, 32
      %v4155 = vpop.permute.xlu0 %4154
      %4156 = vrot.lane.b32.xlu0 %v3838, 32
      %v4157 = vpop.permute.xlu0 %4156
      %4158 = vrot.lane.b32.xlu0 %v3839, 32
      %v4159 = vpop.permute.xlu0 %4158
      %4160 = vrot.lane.b32.xlu0 %v3840, 32
      %v4161 = vpop.permute.xlu0 %4160
      %4162 = vrot.lane.b32.xlu0 %v3841, 32
      %v4163 = vpop.permute.xlu0 %4162
      %4227 = vrot.lane.b32.xlu0 %v3849, 48
      %v4228 = vpop.permute.xlu0 %4227
      %4229 = vrot.lane.b32.xlu0 %v3850, 48
      %v4230 = vpop.permute.xlu0 %4229
      %4231 = vrot.lane.b32.xlu0 %v3851, 48
      %v4232 = vpop.permute.xlu0 %4231
      %4233 = vrot.lane.b32.xlu0 %v3852, 48
      %v4234 = vpop.permute.xlu0 %4233
      %4235 = vrot.lane.b32.xlu0 %v3853, 48
      %v4236 = vpop.permute.xlu0 %4235
      %4237 = vrot.lane.b32.xlu0 %v3854, 48
      %v4238 = vpop.permute.xlu0 %4237
      %4239 = vrot.lane.b32.xlu0 %v3855, 48
      %v4240 = vpop.permute.xlu0 %4239
      %4241 = vrot.lane.b32.xlu0 %v3856, 48
      %v4242 = vpop.permute.xlu0 %4241
      %4243 = vrot.lane.b32.xlu0 %v3857, 48
      %v4244 = vpop.permute.xlu0 %4243
      %4245 = vrot.lane.b32.xlu0 %v3858, 48
      %v4246 = vpop.permute.xlu0 %4245
      %4247 = vrot.lane.b32.xlu0 %v3859, 48
      %v4248 = vpop.permute.xlu0 %4247
      %4249 = vrot.lane.b32.xlu0 %v3860, 48
      %v4250 = vpop.permute.xlu0 %4249
      %4251 = vrot.lane.b32.xlu0 %v3861, 48
      %v4252 = vpop.permute.xlu0 %4251
      %4253 = vrot.lane.b32.xlu0 %v3862, 48
      %v4254 = vpop.permute.xlu0 %4253
      %4255 = vrot.lane.b32.xlu0 %v3863, 48
      %v4256 = vpop.permute.xlu0 %4255
      %4257 = vrot.lane.b32.xlu0 %v3864, 48
      %v4258 = vpop.permute.xlu0 %4257
      %4259 = vrot.lane.b32.xlu0 %v3865, 48
      %v4260 = vpop.permute.xlu0 %4259
      %4261 = vrot.lane.b32.xlu0 %v3866, 48
      %v4262 = vpop.permute.xlu0 %4261
      %4263 = vrot.lane.b32.xlu0 %v3867, 48
      %v4264 = vpop.permute.xlu0 %4263
      %4265 = vrot.lane.b32.xlu0 %v3868, 48
      %v4266 = vpop.permute.xlu0 %4265
      %4267 = vrot.lane.b32.xlu0 %v3869, 48
      %v4268 = vpop.permute.xlu0 %4267
      %4269 = vrot.lane.b32.xlu0 %v3870, 48
      %v4270 = vpop.permute.xlu0 %4269
      %4271 = vrot.lane.b32.xlu0 %v3871, 48
      %v4272 = vpop.permute.xlu0 %4271
      %4273 = vrot.lane.b32.xlu0 %v3872, 48
      %v4274 = vpop.permute.xlu0 %4273
      %4275 = vrot.lane.b32.xlu0 %v3873, 48
      %v4276 = vpop.permute.xlu0 %4275
      %4277 = vrot.lane.b32.xlu0 %v3874, 48
      %v4278 = vpop.permute.xlu0 %4277
      %4279 = vrot.lane.b32.xlu0 %v3875, 48
      %v4280 = vpop.permute.xlu0 %4279
      %4281 = vrot.lane.b32.xlu0 %v3876, 48
      %v4282 = vpop.permute.xlu0 %4281
      %4283 = vrot.lane.b32.xlu0 %v3877, 48
      %v4284 = vpop.permute.xlu0 %4283
      %4285 = vrot.lane.b32.xlu0 %v3878, 48
      %v4286 = vpop.permute.xlu0 %4285
      %4287 = vrot.lane.b32.xlu0 %v3879, 48
      %v4288 = vpop.permute.xlu0 %4287
      %4289 = vrot.lane.b32.xlu0 %v3880, 48
      %v4290 = vpop.permute.xlu0 %4289
      %4323 = vrot.lane.b32.xlu0 %v3535, 64
      %v4324 = vpop.permute.xlu0 %4323
      %4325 = vrot.lane.b32.xlu0 %v3536, 64
      %v4326 = vpop.permute.xlu0 %4325
      %4327 = vrot.lane.b32.xlu0 %v3537, 64
      %v4328 = vpop.permute.xlu0 %4327
      %4329 = vrot.lane.b32.xlu0 %v3538, 64
      %v4330 = vpop.permute.xlu0 %4329
      %4331 = vrot.lane.b32.xlu0 %v3539, 64
      %v4332 = vpop.permute.xlu0 %4331
      %4333 = vrot.lane.b32.xlu0 %v3540, 64
      %v4334 = vpop.permute.xlu0 %4333
      %4335 = vrot.lane.b32.xlu0 %v3541, 64
      %v4336 = vpop.permute.xlu0 %4335
      %4337 = vrot.lane.b32.xlu0 %v3542, 64
      %v4338 = vpop.permute.xlu0 %4337
      %4339 = vrot.lane.b32.xlu0 %v3543, 64
      %v4340 = vpop.permute.xlu0 %4339
      %4341 = vrot.lane.b32.xlu0 %v3544, 64
      %v4342 = vpop.permute.xlu0 %4341
      %4343 = vrot.lane.b32.xlu0 %v3545, 64
      %v4344 = vpop.permute.xlu0 %4343
      %4345 = vrot.lane.b32.xlu0 %v3546, 64
      %v4346 = vpop.permute.xlu0 %4345
      %4347 = vrot.lane.b32.xlu0 %v3547, 64
      %v4348 = vpop.permute.xlu0 %4347
      %4349 = vrot.lane.b32.xlu0 %v3548, 64
      %v4350 = vpop.permute.xlu0 %4349
      %4351 = vrot.lane.b32.xlu0 %v3549, 64
      %v4352 = vpop.permute.xlu0 %4351
      %4353 = vrot.lane.b32.xlu0 %v3550, 64
      %v4354 = vpop.permute.xlu0 %4353
      %4355 = vrot.lane.b32.xlu0 %v3551, 64
      %v4356 = vpop.permute.xlu0 %4355
      %4357 = vrot.lane.b32.xlu0 %v3552, 64
      %v4358 = vpop.permute.xlu0 %4357
      %4359 = vrot.lane.b32.xlu0 %v3553, 64
      %v4360 = vpop.permute.xlu0 %4359
      %4361 = vrot.lane.b32.xlu0 %v3554, 64
      %v4362 = vpop.permute.xlu0 %4361
      %4363 = vrot.lane.b32.xlu0 %v3555, 64
      %v4364 = vpop.permute.xlu0 %4363
      %4365 = vrot.lane.b32.xlu0 %v3556, 64
      %v4366 = vpop.permute.xlu0 %4365
      %4367 = vrot.lane.b32.xlu0 %v3557, 64
      %v4368 = vpop.permute.xlu0 %4367
      %4369 = vrot.lane.b32.xlu0 %v3558, 64
      %v4370 = vpop.permute.xlu0 %4369
      %4371 = vrot.lane.b32.xlu0 %v3559, 64
      %v4372 = vpop.permute.xlu0 %4371
      %4373 = vrot.lane.b32.xlu0 %v3560, 64
      %v4374 = vpop.permute.xlu0 %4373
      %4375 = vrot.lane.b32.xlu0 %v3561, 64
      %v4376 = vpop.permute.xlu0 %4375
      %4377 = vrot.lane.b32.xlu0 %v3562, 64
      %v4378 = vpop.permute.xlu0 %4377
      %4379 = vrot.lane.b32.xlu0 %v3563, 64
      %v4380 = vpop.permute.xlu0 %4379
      %4381 = vrot.lane.b32.xlu0 %v3564, 64
      %v4382 = vpop.permute.xlu0 %4381
      %4383 = vrot.lane.b32.xlu0 %v3565, 64
      %v4384 = vpop.permute.xlu0 %4383
      %4385 = vrot.lane.b32.xlu0 %v3566, 64
      %v4386 = vpop.permute.xlu0 %4385
      %4451 = vrot.lane.b32.xlu0 %v3886, 80
      %v4452 = vpop.permute.xlu0 %4451
      %4453 = vrot.lane.b32.xlu0 %v3887, 80
      %v4454 = vpop.permute.xlu0 %4453
      %4455 = vrot.lane.b32.xlu0 %v3888, 80
      %v4456 = vpop.permute.xlu0 %4455
      %4457 = vrot.lane.b32.xlu0 %v3889, 80
      %v4458 = vpop.permute.xlu0 %4457
      %4459 = vrot.lane.b32.xlu0 %v3890, 80
      %v4460 = vpop.permute.xlu0 %4459
      %4461 = vrot.lane.b32.xlu0 %v3891, 80
      %v4462 = vpop.permute.xlu0 %4461
      %4463 = vrot.lane.b32.xlu0 %v3892, 80
      %v4464 = vpop.permute.xlu0 %4463
      %4465 = vrot.lane.b32.xlu0 %v3893, 80
      %v4466 = vpop.permute.xlu0 %4465
      %4467 = vrot.lane.b32.xlu0 %v3894, 80
      %v4468 = vpop.permute.xlu0 %4467
      %4469 = vrot.lane.b32.xlu0 %v3895, 80
      %v4470 = vpop.permute.xlu0 %4469
      %4471 = vrot.lane.b32.xlu0 %v3896, 80
      %v4472 = vpop.permute.xlu0 %4471
      %4473 = vrot.lane.b32.xlu0 %v3897, 80
      %v4474 = vpop.permute.xlu0 %4473
      %4475 = vrot.lane.b32.xlu0 %v3898, 80
      %v4476 = vpop.permute.xlu0 %4475
      %4477 = vrot.lane.b32.xlu0 %v3899, 80
      %v4478 = vpop.permute.xlu0 %4477
      %4479 = vrot.lane.b32.xlu0 %v3900, 80
      %v4480 = vpop.permute.xlu0 %4479
      %4481 = vrot.lane.b32.xlu0 %v3901, 80
      %v4482 = vpop.permute.xlu0 %4481
      %4483 = vrot.lane.b32.xlu0 %v3902, 80
      %v4484 = vpop.permute.xlu0 %4483
      %4485 = vrot.lane.b32.xlu0 %v3903, 80
      %v4486 = vpop.permute.xlu0 %4485
      %4487 = vrot.lane.b32.xlu0 %v3904, 80
      %v4488 = vpop.permute.xlu0 %4487
      %4489 = vrot.lane.b32.xlu0 %v3905, 80
      %v4490 = vpop.permute.xlu0 %4489
      %4491 = vrot.lane.b32.xlu0 %v3906, 80
      %v4492 = vpop.permute.xlu0 %4491
      %4493 = vrot.lane.b32.xlu0 %v3907, 80
      %v4494 = vpop.permute.xlu0 %4493
      %4495 = vrot.lane.b32.xlu0 %v3908, 80
      %v4496 = vpop.permute.xlu0 %4495
      %4497 = vrot.lane.b32.xlu0 %v3909, 80
      %v4498 = vpop.permute.xlu0 %4497
      %4499 = vrot.lane.b32.xlu0 %v3910, 80
      %v4500 = vpop.permute.xlu0 %4499
      %4501 = vrot.lane.b32.xlu0 %v3911, 80
      %v4502 = vpop.permute.xlu0 %4501
      %4503 = vrot.lane.b32.xlu0 %v3912, 80
      %v4504 = vpop.permute.xlu0 %4503
      %4505 = vrot.lane.b32.xlu0 %v3913, 80
      %v4506 = vpop.permute.xlu0 %4505
      %4507 = vrot.lane.b32.xlu0 %v3914, 80
      %v4508 = vpop.permute.xlu0 %4507
      %4509 = vrot.lane.b32.xlu0 %v3915, 80
      %v4510 = vpop.permute.xlu0 %4509
      %4511 = vrot.lane.b32.xlu0 %v3916, 80
      %v4512 = vpop.permute.xlu0 %4511
      %4513 = vrot.lane.b32.xlu0 %v3917, 80
      %v4514 = vpop.permute.xlu0 %4513
      %4578 = vrot.lane.b32.xlu0 %v3920, 96
      %v4579 = vpop.permute.xlu0 %4578
      %4580 = vrot.lane.b32.xlu0 %v3921, 96
      %v4581 = vpop.permute.xlu0 %4580
      %4582 = vrot.lane.b32.xlu0 %v3922, 96
      %v4583 = vpop.permute.xlu0 %4582
      %4584 = vrot.lane.b32.xlu0 %v3923, 96
      %v4585 = vpop.permute.xlu0 %4584
      %4586 = vrot.lane.b32.xlu0 %v3924, 96
      %v4587 = vpop.permute.xlu0 %4586
      %4588 = vrot.lane.b32.xlu0 %v3925, 96
      %v4589 = vpop.permute.xlu0 %4588
      %4590 = vrot.lane.b32.xlu0 %v3926, 96
      %v4591 = vpop.permute.xlu0 %4590
      %4592 = vrot.lane.b32.xlu0 %v3927, 96
      %v4593 = vpop.permute.xlu0 %4592
      %4594 = vrot.lane.b32.xlu0 %v3928, 96
      %v4595 = vpop.permute.xlu0 %4594
      %4596 = vrot.lane.b32.xlu0 %v3929, 96
      %v4597 = vpop.permute.xlu0 %4596
      %4598 = vrot.lane.b32.xlu0 %v3930, 96
      %v4599 = vpop.permute.xlu0 %4598
      %4600 = vrot.lane.b32.xlu0 %v3931, 96
      %v4601 = vpop.permute.xlu0 %4600
      %4602 = vrot.lane.b32.xlu0 %v3932, 96
      %v4603 = vpop.permute.xlu0 %4602
      %4604 = vrot.lane.b32.xlu0 %v3933, 96
      %v4605 = vpop.permute.xlu0 %4604
      %4606 = vrot.lane.b32.xlu0 %v3934, 96
      %v4607 = vpop.permute.xlu0 %4606
      %4608 = vrot.lane.b32.xlu0 %v3935, 96
      %v4609 = vpop.permute.xlu0 %4608
      %4610 = vrot.lane.b32.xlu0 %v3936, 96
      %v4611 = vpop.permute.xlu0 %4610
      %4612 = vrot.lane.b32.xlu0 %v3937, 96
      %v4613 = vpop.permute.xlu0 %4612
      %4614 = vrot.lane.b32.xlu0 %v3938, 96
      %v4615 = vpop.permute.xlu0 %4614
      %4616 = vrot.lane.b32.xlu0 %v3939, 96
      %v4617 = vpop.permute.xlu0 %4616
      %4618 = vrot.lane.b32.xlu0 %v3940, 96
      %v4619 = vpop.permute.xlu0 %4618
      %4620 = vrot.lane.b32.xlu0 %v3941, 96
      %v4621 = vpop.permute.xlu0 %4620
      %4622 = vrot.lane.b32.xlu0 %v3942, 96
      %v4623 = vpop.permute.xlu0 %4622
      %4624 = vrot.lane.b32.xlu0 %v3943, 96
      %v4625 = vpop.permute.xlu0 %4624
      %4626 = vrot.lane.b32.xlu0 %v3944, 96
      %v4627 = vpop.permute.xlu0 %4626
      %4628 = vrot.lane.b32.xlu0 %v3945, 96
      %v4629 = vpop.permute.xlu0 %4628
      %4630 = vrot.lane.b32.xlu0 %v3946, 96
      %v4631 = vpop.permute.xlu0 %4630
      %4632 = vrot.lane.b32.xlu0 %v3947, 96
      %v4633 = vpop.permute.xlu0 %4632
      %4634 = vrot.lane.b32.xlu0 %v3948, 96
      %v4635 = vpop.permute.xlu0 %4634
      %4636 = vrot.lane.b32.xlu0 %v3949, 96
      %v4637 = vpop.permute.xlu0 %4636
      %4638 = vrot.lane.b32.xlu0 %v3950, 96
      %v4639 = vpop.permute.xlu0 %4638
      %4671 = vrot.lane.b32.xlu0 %v3537, 112
      %v4672 = vpop.permute.xlu0 %4671
      %4673 = vrot.lane.b32.xlu0 %v3538, 112
      %v4674 = vpop.permute.xlu0 %4673
      %4675 = vrot.lane.b32.xlu0 %v3539, 112
      %v4676 = vpop.permute.xlu0 %4675
      %4677 = vrot.lane.b32.xlu0 %v3540, 112
      %v4678 = vpop.permute.xlu0 %4677
      %4679 = vrot.lane.b32.xlu0 %v3541, 112
      %v4680 = vpop.permute.xlu0 %4679
      %4681 = vrot.lane.b32.xlu0 %v3542, 112
      %v4682 = vpop.permute.xlu0 %4681
      %4683 = vrot.lane.b32.xlu0 %v3543, 112
      %v4684 = vpop.permute.xlu0 %4683
      %4685 = vrot.lane.b32.xlu0 %v3544, 112
      %v4686 = vpop.permute.xlu0 %4685
      %4687 = vrot.lane.b32.xlu0 %v3545, 112
      %v4688 = vpop.permute.xlu0 %4687
      %4689 = vrot.lane.b32.xlu0 %v3546, 112
      %v4690 = vpop.permute.xlu0 %4689
      %4691 = vrot.lane.b32.xlu0 %v3547, 112
      %v4692 = vpop.permute.xlu0 %4691
      %4693 = vrot.lane.b32.xlu0 %v3548, 112
      %v4694 = vpop.permute.xlu0 %4693
      %4695 = vrot.lane.b32.xlu0 %v3549, 112
      %v4696 = vpop.permute.xlu0 %4695
      %4697 = vrot.lane.b32.xlu0 %v3550, 112
      %v4698 = vpop.permute.xlu0 %4697
      %4699 = vrot.lane.b32.xlu0 %v3551, 112
      %v4700 = vpop.permute.xlu0 %4699
      %4701 = vrot.lane.b32.xlu0 %v3552, 112
      %v4702 = vpop.permute.xlu0 %4701
      %4703 = vrot.lane.b32.xlu0 %v3553, 112
      %v4704 = vpop.permute.xlu0 %4703
      %4705 = vrot.lane.b32.xlu0 %v3554, 112
      %v4706 = vpop.permute.xlu0 %4705
      %4707 = vrot.lane.b32.xlu0 %v3555, 112
      %v4708 = vpop.permute.xlu0 %4707
      %4709 = vrot.lane.b32.xlu0 %v3556, 112
      %v4710 = vpop.permute.xlu0 %4709
      %4711 = vrot.lane.b32.xlu0 %v3557, 112
      %v4712 = vpop.permute.xlu0 %4711
      %4713 = vrot.lane.b32.xlu0 %v3558, 112
      %v4714 = vpop.permute.xlu0 %4713
      %4715 = vrot.lane.b32.xlu0 %v3559, 112
      %v4716 = vpop.permute.xlu0 %4715
      %4717 = vrot.lane.b32.xlu0 %v3560, 112
      %v4718 = vpop.permute.xlu0 %4717
      %4719 = vrot.lane.b32.xlu0 %v3561, 112
      %v4720 = vpop.permute.xlu0 %4719
      %4721 = vrot.lane.b32.xlu0 %v3562, 112
      %v4722 = vpop.permute.xlu0 %4721
      %4723 = vrot.lane.b32.xlu0 %v3563, 112
      %v4724 = vpop.permute.xlu0 %4723
      %4725 = vrot.lane.b32.xlu0 %v3564, 112
      %v4726 = vpop.permute.xlu0 %4725
      %4727 = vrot.lane.b32.xlu0 %v3565, 112
      %v4728 = vpop.permute.xlu0 %4727
      %4729 = vrot.lane.b32.xlu0 %v3566, 112
      %v4730 = vpop.permute.xlu0 %4729
      %v4761 = vsel %vm2836, %v3687, %v3982
      %v4762 = vsel %vm2836, %v3688, %v3984
      %v4763 = vsel %vm2836, %v3689, %v3986
      %v4764 = vsel %vm2836, %v3690, %v3988
      %v4765 = vsel %vm2836, %v3691, %v3990
      %v4766 = vsel %vm2836, %v3692, %v3992
      %v4767 = vsel %vm2836, %v3693, %v3994
      %v4768 = vsel %vm2836, %v3694, %v3996
      %v4769 = vsel %vm2836, %v3695, %v3998
      %v4770 = vsel %vm2836, %v3696, %v4000
      %v4771 = vsel %vm2836, %v3697, %v4002
      %v4772 = vsel %vm2836, %v3698, %v4004
      %v4773 = vsel %vm2836, %v3699, %v4006
      %v4774 = vsel %vm2836, %v3700, %v4008
      %v4775 = vsel %vm2836, %v3701, %v4010
      %v4776 = vsel %vm2836, %v3702, %v4012
      %v4777 = vsel %vm2836, %v3703, %v4014
      %v4778 = vsel %vm2836, %v3704, %v4016
      %v4779 = vsel %vm2836, %v3705, %v4018
      %v4780 = vsel %vm2836, %v3706, %v4020
      %v4781 = vsel %vm2836, %v3707, %v4022
      %v4782 = vsel %vm2836, %v3708, %v4024
      %v4783 = vsel %vm2836, %v3709, %v4026
      %v4784 = vsel %vm2836, %v3710, %v4028
      %v4785 = vsel %vm2836, %v3711, %v4030
      %v4786 = vsel %vm2836, %v3712, %v4032
      %v4787 = vsel %vm2836, %v3713, %v4034
      %v4788 = vsel %vm2836, %v3714, %v4036
      %v4789 = vsel %vm2836, %v3715, %v4038
      %v4790 = vsel %vm2836, %v3716, %v4040
      %v4791 = vsel %vm1017, %v2837, %v4103
      %v4792 = vsel %vm1017, %v4761, %v4105
      %v4793 = vsel %vm1017, %v4762, %v4107
      %v4794 = vsel %vm1017, %v4763, %v4109
      %v4795 = vsel %vm1017, %v4764, %v4111
      %v4796 = vsel %vm1017, %v4765, %v4113
      %v4797 = vsel %vm1017, %v4766, %v4115
      %v4798 = vsel %vm1017, %v4767, %v4117
      %v4799 = vsel %vm1017, %v4768, %v4119
      %v4800 = vsel %vm1017, %v4769, %v4121
      %v4801 = vsel %vm1017, %v4770, %v4123
      %v4802 = vsel %vm1017, %v4771, %v4125
      %v4803 = vsel %vm1017, %v4772, %v4127
      %v4804 = vsel %vm1017, %v4773, %v4129
      %v4805 = vsel %vm1017, %v4774, %v4131
      %v4806 = vsel %vm1017, %v4775, %v4133
      %v4807 = vsel %vm1017, %v4776, %v4135
      %v4808 = vsel %vm1017, %v4777, %v4137
      %v4809 = vsel %vm1017, %v4778, %v4139
      %v4810 = vsel %vm1017, %v4779, %v4141
      %v4811 = vsel %vm1017, %v4780, %v4143
      %v4812 = vsel %vm1017, %v4781, %v4145
      %v4813 = vsel %vm1017, %v4782, %v4147
      %v4814 = vsel %vm1017, %v4783, %v4149
      %v4815 = vsel %vm1017, %v4784, %v4151
      %v4816 = vsel %vm1017, %v4785, %v4153
      %v4817 = vsel %vm1017, %v4786, %v4155
      %v4818 = vsel %vm1017, %v4787, %v4157
      %v4819 = vsel %vm1017, %v4788, %v4159
      %v4820 = vsel %vm1017, %v4789, %v4161
      %v4821 = vsel %vm1017, %v4790, %v4163
      %v4822 = vsel %vm2900, %v2868, %v4228
      %v4823 = vsel %vm2900, %v4791, %v4230
      %v4824 = vsel %vm2900, %v4792, %v4232
      %v4825 = vsel %vm2900, %v4793, %v4234
      %v4826 = vsel %vm2900, %v4794, %v4236
      %v4827 = vsel %vm2900, %v4795, %v4238
      %v4828 = vsel %vm2900, %v4796, %v4240
      %v4829 = vsel %vm2900, %v4797, %v4242
      %v4830 = vsel %vm2900, %v4798, %v4244
      %v4831 = vsel %vm2900, %v4799, %v4246
      %v4832 = vsel %vm2900, %v4800, %v4248
      %v4833 = vsel %vm2900, %v4801, %v4250
      %v4834 = vsel %vm2900, %v4802, %v4252
      %v4835 = vsel %vm2900, %v4803, %v4254
      %v4836 = vsel %vm2900, %v4804, %v4256
      %v4837 = vsel %vm2900, %v4805, %v4258
      %v4838 = vsel %vm2900, %v4806, %v4260
      %v4839 = vsel %vm2900, %v4807, %v4262
      %v4840 = vsel %vm2900, %v4808, %v4264
      %v4841 = vsel %vm2900, %v4809, %v4266
      %v4842 = vsel %vm2900, %v4810, %v4268
      %v4843 = vsel %vm2900, %v4811, %v4270
      %v4844 = vsel %vm2900, %v4812, %v4272
      %v4845 = vsel %vm2900, %v4813, %v4274
      %v4846 = vsel %vm2900, %v4814, %v4276
      %v4847 = vsel %vm2900, %v4815, %v4278
      %v4848 = vsel %vm2900, %v4816, %v4280
      %v4849 = vsel %vm2900, %v4817, %v4282
      %v4850 = vsel %vm2900, %v4818, %v4284
      %v4851 = vsel %vm2900, %v4819, %v4286
      %v4852 = vsel %vm2900, %v4820, %v4288
      %v4853 = vsel %vm2900, %v4821, %v4290
      %v4854 = vsel %vm2933, %v4822, %v4324
      %v4855 = vsel %vm2933, %v4823, %v4326
      %v4856 = vsel %vm2933, %v4824, %v4328
      %v4857 = vsel %vm2933, %v4825, %v4330
      %v4858 = vsel %vm2933, %v4826, %v4332
      %v4859 = vsel %vm2933, %v4827, %v4334
      %v4860 = vsel %vm2933, %v4828, %v4336
      %v4861 = vsel %vm2933, %v4829, %v4338
      %v4862 = vsel %vm2933, %v4830, %v4340
      %v4863 = vsel %vm2933, %v4831, %v4342
      %v4864 = vsel %vm2933, %v4832, %v4344
      %v4865 = vsel %vm2933, %v4833, %v4346
      %v4866 = vsel %vm2933, %v4834, %v4348
      %v4867 = vsel %vm2933, %v4835, %v4350
      %v4868 = vsel %vm2933, %v4836, %v4352
      %v4869 = vsel %vm2933, %v4837, %v4354
      %v4870 = vsel %vm2933, %v4838, %v4356
      %v4871 = vsel %vm2933, %v4839, %v4358
      %v4872 = vsel %vm2933, %v4840, %v4360
      %v4873 = vsel %vm2933, %v4841, %v4362
      %v4874 = vsel %vm2933, %v4842, %v4364
      %v4875 = vsel %vm2933, %v4843, %v4366
      %v4876 = vsel %vm2933, %v4844, %v4368
      %v4877 = vsel %vm2933, %v4845, %v4370
      %v4878 = vsel %vm2933, %v4846, %v4372
      %v4879 = vsel %vm2933, %v4847, %v4374
      %v4880 = vsel %vm2933, %v4848, %v4376
      %v4881 = vsel %vm2933, %v4849, %v4378
      %v4882 = vsel %vm2933, %v4850, %v4380
      %v4883 = vsel %vm2933, %v4851, %v4382
      %v4884 = vsel %vm2933, %v4852, %v4384
      %v4885 = vsel %vm2933, %v4853, %v4386
      %v4886 = vsel %vm2966, %v4854, %v4452
      %v4887 = vsel %vm2966, %v4855, %v4454
      %v4888 = vsel %vm2966, %v4856, %v4456
      %v4889 = vsel %vm2966, %v4857, %v4458
      %v4890 = vsel %vm2966, %v4858, %v4460
      %v4891 = vsel %vm2966, %v4859, %v4462
      %v4892 = vsel %vm2966, %v4860, %v4464
      %v4893 = vsel %vm2966, %v4861, %v4466
      %v4894 = vsel %vm2966, %v4862, %v4468
      %v4895 = vsel %vm2966, %v4863, %v4470
      %v4896 = vsel %vm2966, %v4864, %v4472
      %v4897 = vsel %vm2966, %v4865, %v4474
      %v4898 = vsel %vm2966, %v4866, %v4476
      %v4899 = vsel %vm2966, %v4867, %v4478
      %v4900 = vsel %vm2966, %v4868, %v4480
      %v4901 = vsel %vm2966, %v4869, %v4482
      %v4902 = vsel %vm2966, %v4870, %v4484
      %v4903 = vsel %vm2966, %v4871, %v4486
      %v4904 = vsel %vm2966, %v4872, %v4488
      %v4905 = vsel %vm2966, %v4873, %v4490
      %v4906 = vsel %vm2966, %v4874, %v4492
      %v4907 = vsel %vm2966, %v4875, %v4494
      %v4908 = vsel %vm2966, %v4876, %v4496
      %v4909 = vsel %vm2966, %v4877, %v4498
      %v4910 = vsel %vm2966, %v4878, %v4500
      %v4911 = vsel %vm2966, %v4879, %v4502
      %v4912 = vsel %vm2966, %v4880, %v4504
      %v4913 = vsel %vm2966, %v4881, %v4506
      %v4914 = vsel %vm2966, %v4882, %v4508
      %v4915 = vsel %vm2966, %v4883, %v4510
      %v4916 = vsel %vm2966, %v4884, %v4512
      %v4917 = vsel %vm2966, %v4885, %v4514
      %v4918 = vsel %vm2999, %v4886, %v4579
      %v4919 = vsel %vm2999, %v4887, %v4581
      %v4920 = vsel %vm2999, %v4888, %v4583
      %v4921 = vsel %vm2999, %v4889, %v4585
      %v4922 = vsel %vm2999, %v4890, %v4587
      %v4923 = vsel %vm2999, %v4891, %v4589
      %v4924 = vsel %vm2999, %v4892, %v4591
      %v4925 = vsel %vm2999, %v4893, %v4593
      %v4926 = vsel %vm2999, %v4894, %v4595
      %v4927 = vsel %vm2999, %v4895, %v4597
      %v4928 = vsel %vm2999, %v4896, %v4599
      %v4929 = vsel %vm2999, %v4897, %v4601
      %v4930 = vsel %vm2999, %v4898, %v4603
      %v4931 = vsel %vm2999, %v4899, %v4605
      %v4932 = vsel %vm2999, %v4900, %v4607
      %v4933 = vsel %vm2999, %v4901, %v4609
      %v4934 = vsel %vm2999, %v4902, %v4611
      %v4935 = vsel %vm2999, %v4903, %v4613
      %v4936 = vsel %vm2999, %v4904, %v4615
      %v4937 = vsel %vm2999, %v4905, %v4617
      %v4938 = vsel %vm2999, %v4906, %v4619
      %v4939 = vsel %vm2999, %v4907, %v4621
      %v4940 = vsel %vm2999, %v4908, %v4623
      %v4941 = vsel %vm2999, %v4909, %v4625
      %v4942 = vsel %vm2999, %v4910, %v4627
      %v4943 = vsel %vm2999, %v4911, %v4629
      %v4944 = vsel %vm2999, %v4912, %v4631
      %v4945 = vsel %vm2999, %v4913, %v4633
      %v4946 = vsel %vm2999, %v4914, %v4635
      %v4947 = vsel %vm2999, %v4915, %v4637
      %v4948 = vsel %vm2999, %v4916, %v4639
      %v4949 = vsel %vm2999, %v4917, %v2710
      %v4950 = vsel %vm3032, %v4918, %v4672
      %v4951 = vsel %vm3032, %v4919, %v4674
      %v4952 = vsel %vm3032, %v4920, %v4676
      %v4953 = vsel %vm3032, %v4921, %v4678
      %v4954 = vsel %vm3032, %v4922, %v4680
      %v4955 = vsel %vm3032, %v4923, %v4682
      %v4956 = vsel %vm3032, %v4924, %v4684
      %v4957 = vsel %vm3032, %v4925, %v4686
      %v4958 = vsel %vm3032, %v4926, %v4688
      %v4959 = vsel %vm3032, %v4927, %v4690
      %v4960 = vsel %vm3032, %v4928, %v4692
      %v4961 = vsel %vm3032, %v4929, %v4694
      %v4962 = vsel %vm3032, %v4930, %v4696
      %v4963 = vsel %vm3032, %v4931, %v4698
      %v4964 = vsel %vm3032, %v4932, %v4700
      %v4965 = vsel %vm3032, %v4933, %v4702
      %v4966 = vsel %vm3032, %v4934, %v4704
      %v4967 = vsel %vm3032, %v4935, %v4706
      %v4968 = vsel %vm3032, %v4936, %v4708
      %v4969 = vsel %vm3032, %v4937, %v4710
      %v4970 = vsel %vm3032, %v4938, %v4712
      %v4971 = vsel %vm3032, %v4939, %v4714
      %v4972 = vsel %vm3032, %v4940, %v4716
      %v4973 = vsel %vm3032, %v4941, %v4718
      %v4974 = vsel %vm3032, %v4942, %v4720
      %v4975 = vsel %vm3032, %v4943, %v4722
      %v4976 = vsel %vm3032, %v4944, %v4724
      %v4977 = vsel %vm3032, %v4945, %v4726
      %v4978 = vsel %vm3032, %v4946, %v4728
      %v4979 = vsel %vm3032, %v4947, %v4730
      %v4980 = vsel %vm3032, %v4948, %v2804
      %v4981 = vsel %vm3032, %v4949, %v2804
      %v4982 = vld [vmem:[%s5] sm:$0xff]
      %v4983 = vld [vmem:[%s5 + $0x8] sm:$0xff]
      %v4984 = vld [vmem:[%s5 + $0x10] sm:$0xff]
      %v4985 = vld [vmem:[%s5 + $0x18] sm:$0xff]
      %v4986 = vld [vmem:[%s5 + $0x20] sm:$0xff]
      %v4987 = vld [vmem:[%s5 + $0x28] sm:$0xff]
      %v4988 = vld [vmem:[%s5 + $0x30] sm:$0xff]
      %v4989 = vld [vmem:[%s5 + $0x38] sm:$0xff]
      %v4990 = vld [vmem:[%s5 + $0x40] sm:$0xff]
      %v4991 = vld [vmem:[%s5 + $0x48] sm:$0xff]
      %v4992 = vld [vmem:[%s5 + $0x50] sm:$0xff]
      %v4993 = vld [vmem:[%s5 + $0x58] sm:$0xff]
      %v4994 = vld [vmem:[%s5 + $0x60] sm:$0xff]
      %v4995 = vld [vmem:[%s5 + $0x68] sm:$0xff]
      %v4996 = vld [vmem:[%s5 + $0x70] sm:$0xff]
      %v4997 = vld [vmem:[%s5 + $0x78] sm:$0xff]
      %v4998 = vld [vmem:[%s5 + $0x80] sm:$0xff]
      %v4999 = vld [vmem:[%s5 + $0x88] sm:$0xff]
      %v5000 = vld [vmem:[%s6] sm:$0x1]
      %v5002 = vlaneseq
      %v5003 = vshrl.u32 %v5002, 7
      %v5004 = vsub.s32 0, %v5003
      %v5005 = vrot.slane %v5000, %v5004
      %v5008 = vsel %vm2836, %v3951, 0
      %v5011 = vsel %vm2836, %v3952, 0
      %v5014 = vsel %vm2836, %v3953, 0
      %v5017 = vsel %vm2836, %v3954, 0
      %v5020 = vsel %vm2836, %v3955, 0
      %v5023 = vsel %vm2836, %v3956, 0
      %v5026 = vsel %vm2836, %v3957, 0
      %v5029 = vsel %vm2836, %v3958, 0
      %v5032 = vsel %vm2836, %v3959, 0
      %v5035 = vsel %vm2836, %v3960, 0
      %v5038 = vsel %vm2836, %v3961, 0
      %v5041 = vsel %vm2836, %v3962, 0
      %v5044 = vsel %vm2836, %v3963, 0
      %v5047 = vsel %vm2836, %v3964, 0
      %v5050 = vsel %vm2836, %v3965, 0
      %v5053 = vsel %vm2836, %v3966, 0
      %v5056 = vsel %vm2836, %v3967, 0
      %v5059 = vsel %vm2836, %v3968, 0
      %v5062 = vsel %vm2836, %v3969, 0
      %v5065 = vsel %vm2836, %v3970, 0
      %v5068 = vsel %vm2836, %v3971, 0
      %v5071 = vsel %vm2836, %v3972, 0
      %v5074 = vsel %vm2836, %v3973, 0
      %v5077 = vsel %vm2836, %v3974, 0
      %v5080 = vsel %vm2836, %v3975, 0
      %v5083 = vsel %vm2836, %v3976, 0
      %v5086 = vsel %vm2836, %v3977, 0
      %v5089 = vsel %vm2836, %v3978, 0
      %v5092 = vsel %vm2836, %v3979, 0
      %v5095 = vsel %vm2836, %v3980, 0
      %5097 = vmatprep.subr.mxu0 0.0
      %5098 = vmatpush1.msra.mxu0 %v4997
      %5099 = vmatprep.subr.mxu0 0.0
      %5100 = vmatpush1.msra.mxu0 %v4996
      %5101 = vmatprep.subr.mxu0 0.0
      %5102 = vmatpush1.msra.mxu0 %v4995
      %5103 = vmatprep.subr.mxu0 0.0
      %5104 = vmatpush1.msra.mxu0 %v4994
      %5105 = vmatprep.subr.mxu0 0.0
      %5106 = vmatpush1.msra.mxu0 %v4993
      %5107 = vmatprep.subr.mxu0 0.0
      %5108 = vmatpush1.msra.mxu0 %v4992
      %5109 = vmatprep.subr.mxu0 0.0
      %5110 = vmatpush1.msra.mxu0 %v4991
      %5111 = vmatprep.subr.mxu0 0.0
      %5112 = vmatpush1.msra.mxu0 %v4990
      %5113 = vmatprep.subr.mxu0 0.0
      %5114 = vmatpush1.msra.mxu0 %v4989
      %5115 = vmatprep.subr.mxu0 0.0
      %5116 = vmatpush1.msra.mxu0 %v4988
      %5117 = vmatprep.subr.mxu0 0.0
      %5118 = vmatpush1.msra.mxu0 %v4987
      %5119 = vmatprep.subr.mxu0 0.0
      %5120 = vmatpush1.msra.mxu0 %v4986
      %5121 = vmatprep.subr.mxu0 0.0
      %5122 = vmatpush1.msra.mxu0 %v4985
      %5123 = vmatprep.subr.mxu0 0.0
      %5124 = vmatpush1.msra.mxu0 %v4984
      %5125 = vmatprep.subr.mxu0 0.0
      %5126 = vmatpush1.msra.mxu0 %v4983
      %5127 = vmatprep.subr.mxu0 0.0
      %5128 = vmatpush1.msra.mxu0 %v4982
      %5129 = vmatprep.subr.mxu0 0.0
      %5130 = vmatpush2.msra.mxu0 0.0
      %5131 = vmatprep.subr.mxu0 0.0
      %5132 = vmatpush2.msra.mxu0 0.0
      %5133 = vmatprep.subr.mxu0 0.0
      %5134 = vmatpush2.msra.mxu0 0.0
      %5135 = vmatprep.subr.mxu0 0.0
      %5136 = vmatpush2.msra.mxu0 0.0
      %5137 = vmatprep.subr.mxu0 0.0
      %5138 = vmatpush2.msra.mxu0 0.0
      %5139 = vmatprep.subr.mxu0 0.0
      %5140 = vmatpush2.msra.mxu0 0.0
      %5141 = vmatprep.subr.mxu0 0.0
      %5142 = vmatpush2.msra.mxu0 0.0
      %5143 = vmatprep.subr.mxu0 0.0
      %5144 = vmatpush2.msra.mxu0 0.0
      %5145 = vmatprep.subr.mxu0 0.0
      %5146 = vmatpush2.msra.mxu0 0.0
      %5147 = vmatprep.subr.mxu0 0.0
      %5148 = vmatpush2.msra.mxu0 0.0
      %5149 = vmatprep.subr.mxu0 0.0
      %5150 = vmatpush2.msra.mxu0 0.0
      %5151 = vmatprep.subr.mxu0 0.0
      %5152 = vmatpush2.msra.mxu0 0.0
      %5153 = vmatprep.subr.mxu0 0.0
      %5154 = vmatpush2.msra.mxu0 0.0
      %5155 = vmatprep.subr.mxu0 0.0
      %5156 = vmatpush2.msra.mxu0 0.0
      %5157 = vmatprep.subr.mxu0 0.0
      %5158 = vmatpush2.msra.mxu0 %v4999
      %5159 = vmatprep.subr.mxu0 0.0
      %5160 = vmatpush2.msra.mxu0 %v4998
      %5161 = vmatprep.mubr.f32.mxu0 %v5008
      %5162 = vmatmul.mubr.f32.gmra.mxu0 %v4950
      %v5163 = vpop.f32.mrf.mxu0
      %v5164 = vadd.f32 %v5005, %v5163
      %v5165 = vpop.f32.mrf.mxu0
      %5166 = vmatprep.mubr.f32.mxu0 %v5011
      %5167 = vmatmul.mubr.f32.gmra.mxu0 %v4951
      %v5168 = vpop.f32.mrf.mxu0
      %v5169 = vadd.f32 %v5005, %v5168
      %v5170 = vpop.f32.mrf.mxu0
      %5171 = vmatprep.mubr.f32.mxu0 %v5014
      %5172 = vmatmul.mubr.f32.gmra.mxu0 %v4952
      %v5173 = vpop.f32.mrf.mxu0
      %v5174 = vadd.f32 %v5005, %v5173
      %v5175 = vpop.f32.mrf.mxu0
      %5176 = vmatprep.mubr.f32.mxu0 %v5017
      %5177 = vmatmul.mubr.f32.gmra.mxu0 %v4953
      %v5178 = vpop.f32.mrf.mxu0
      %v5179 = vadd.f32 %v5005, %v5178
      %v5180 = vpop.f32.mrf.mxu0
      %5181 = vmatprep.mubr.f32.mxu0 %v5020
      %5182 = vmatmul.mubr.f32.gmra.mxu0 %v4954
      %v5183 = vpop.f32.mrf.mxu0
      %v5184 = vadd.f32 %v5005, %v5183
      %v5185 = vpop.f32.mrf.mxu0
      %5186 = vmatprep.mubr.f32.mxu0 %v5023
      %5187 = vmatmul.mubr.f32.gmra.mxu0 %v4955
      %v5188 = vpop.f32.mrf.mxu0
      %v5189 = vadd.f32 %v5005, %v5188
      %v5190 = vpop.f32.mrf.mxu0
      %5191 = vmatprep.mubr.f32.mxu0 %v5026
      %5192 = vmatmul.mubr.f32.gmra.mxu0 %v4956
      %v5193 = vpop.f32.mrf.mxu0
      %v5194 = vadd.f32 %v5005, %v5193
      %v5195 = vpop.f32.mrf.mxu0
      %5196 = vmatprep.mubr.f32.mxu0 %v5029
      %5197 = vmatmul.mubr.f32.gmra.mxu0 %v4957
      %v5198 = vpop.f32.mrf.mxu0
      %v5199 = vadd.f32 %v5005, %v5198
      %v5200 = vpop.f32.mrf.mxu0
      %5201 = vmatprep.mubr.f32.mxu0 %v5032
      %5202 = vmatmul.mubr.f32.gmra.mxu0 %v4958
      %v5203 = vpop.f32.mrf.mxu0
      %v5204 = vadd.f32 %v5005, %v5203
      %v5205 = vpop.f32.mrf.mxu0
      %5206 = vmatprep.mubr.f32.mxu0 %v5035
      %5207 = vmatmul.mubr.f32.gmra.mxu0 %v4959
      %v5208 = vpop.f32.mrf.mxu0
      %v5209 = vadd.f32 %v5005, %v5208
      %v5210 = vpop.f32.mrf.mxu0
      %5211 = vmatprep.mubr.f32.mxu0 %v5038
      %5212 = vmatmul.mubr.f32.gmra.mxu0 %v4960
      %v5213 = vpop.f32.mrf.mxu0
      %v5214 = vadd.f32 %v5005, %v5213
      %v5215 = vpop.f32.mrf.mxu0
      %5216 = vmatprep.mubr.f32.mxu0 %v5041
      %5217 = vmatmul.mubr.f32.gmra.mxu0 %v4961
      %v5218 = vpop.f32.mrf.mxu0
      %v5219 = vadd.f32 %v5005, %v5218
      %v5220 = vpop.f32.mrf.mxu0
      %5221 = vmatprep.mubr.f32.mxu0 %v5044
      %5222 = vmatmul.mubr.f32.gmra.mxu0 %v4962
      %v5223 = vpop.f32.mrf.mxu0
      %v5224 = vadd.f32 %v5005, %v5223
      %v5225 = vpop.f32.mrf.mxu0
      %5226 = vmatprep.mubr.f32.mxu0 %v5047
      %5227 = vmatmul.mubr.f32.gmra.mxu0 %v4963
      %v5228 = vpop.f32.mrf.mxu0
      %v5229 = vadd.f32 %v5005, %v5228
      %v5230 = vpop.f32.mrf.mxu0
      %5231 = vmatprep.mubr.f32.mxu0 %v5050
      %5232 = vmatmul.mubr.f32.gmra.mxu0 %v4964
      %v5233 = vpop.f32.mrf.mxu0
      %v5234 = vadd.f32 %v5005, %v5233
      %v5235 = vpop.f32.mrf.mxu0
      %5236 = vmatprep.mubr.f32.mxu0 %v5053
      %5237 = vmatmul.mubr.f32.gmra.mxu0 %v4965
      %v5238 = vpop.f32.mrf.mxu0
      %v5239 = vadd.f32 %v5005, %v5238
      %v5240 = vpop.f32.mrf.mxu0
      %5241 = vmatprep.mubr.f32.mxu0 %v5056
      %5242 = vmatmul.mubr.f32.gmra.mxu0 %v4966
      %v5243 = vpop.f32.mrf.mxu0
      %v5244 = vadd.f32 %v5005, %v5243
      %v5245 = vpop.f32.mrf.mxu0
      %5246 = vmatprep.mubr.f32.mxu0 %v5059
      %5247 = vmatmul.mubr.f32.gmra.mxu0 %v4967
      %v5248 = vpop.f32.mrf.mxu0
      %v5249 = vadd.f32 %v5005, %v5248
      %v5250 = vpop.f32.mrf.mxu0
      %5251 = vmatprep.mubr.f32.mxu0 %v5062
      %5252 = vmatmul.mubr.f32.gmra.mxu0 %v4968
      %v5253 = vpop.f32.mrf.mxu0
      %v5254 = vadd.f32 %v5005, %v5253
      %v5255 = vpop.f32.mrf.mxu0
      %5256 = vmatprep.mubr.f32.mxu0 %v5065
      %5257 = vmatmul.mubr.f32.gmra.mxu0 %v4969
      %v5258 = vpop.f32.mrf.mxu0
      %v5259 = vadd.f32 %v5005, %v5258
      %v5260 = vpop.f32.mrf.mxu0
      %5261 = vmatprep.mubr.f32.mxu0 %v5068
      %5262 = vmatmul.mubr.f32.gmra.mxu0 %v4970
      %v5263 = vpop.f32.mrf.mxu0
      %v5264 = vadd.f32 %v5005, %v5263
      %v5265 = vpop.f32.mrf.mxu0
      %5266 = vmatprep.mubr.f32.mxu0 %v5071
      %5267 = vmatmul.mubr.f32.gmra.mxu0 %v4971
      %v5268 = vpop.f32.mrf.mxu0
      %v5269 = vadd.f32 %v5005, %v5268
      %v5270 = vpop.f32.mrf.mxu0
      %5271 = vmatprep.mubr.f32.mxu0 %v5074
      %5272 = vmatmul.mubr.f32.gmra.mxu0 %v4972
      %v5273 = vpop.f32.mrf.mxu0
      %v5274 = vadd.f32 %v5005, %v5273
      %v5275 = vpop.f32.mrf.mxu0
      %5276 = vmatprep.mubr.f32.mxu0 %v5077
      %5277 = vmatmul.mubr.f32.gmra.mxu0 %v4973
      %v5278 = vpop.f32.mrf.mxu0
      %v5279 = vadd.f32 %v5005, %v5278
      %v5280 = vpop.f32.mrf.mxu0
      %5281 = vmatprep.mubr.f32.mxu0 %v5080
      %5282 = vmatmul.mubr.f32.gmra.mxu0 %v4974
      %v5283 = vpop.f32.mrf.mxu0
      %v5284 = vadd.f32 %v5005, %v5283
      %v5285 = vpop.f32.mrf.mxu0
      %5286 = vmatprep.mubr.f32.mxu0 %v5083
      %5287 = vmatmul.mubr.f32.gmra.mxu0 %v4975
      %v5288 = vpop.f32.mrf.mxu0
      %v5289 = vadd.f32 %v5005, %v5288
      %v5290 = vpop.f32.mrf.mxu0
      %5291 = vmatprep.mubr.f32.mxu0 %v5086
      %5292 = vmatmul.mubr.f32.gmra.mxu0 %v4976
      %v5293 = vpop.f32.mrf.mxu0
      %v5294 = vadd.f32 %v5005, %v5293
      %v5295 = vpop.f32.mrf.mxu0
      %5296 = vmatprep.mubr.f32.mxu0 %v5089
      %5297 = vmatmul.mubr.f32.gmra.mxu0 %v4977
      %v5298 = vpop.f32.mrf.mxu0
      %v5299 = vadd.f32 %v5005, %v5298
      %v5300 = vpop.f32.mrf.mxu0
      %5301 = vmatprep.mubr.f32.mxu0 %v5092
      %5302 = vmatmul.mubr.f32.gmra.mxu0 %v4978
      %v5303 = vpop.f32.mrf.mxu0
      %v5304 = vadd.f32 %v5005, %v5303
      %v5305 = vpop.f32.mrf.mxu0
      %5306 = vmatprep.mubr.f32.mxu0 %v5095
      %5307 = vmatmul.mubr.f32.gmra.mxu0 %v4979
      %v5308 = vpop.f32.mrf.mxu0
      %v5309 = vadd.f32 %v5005, %v5308
      %v5310 = vpop.f32.mrf.mxu0
      %5311 = vmatprep.mubr.f32.mxu0 %v3180
      %5312 = vmatmul.mubr.f32.gmra.mxu0 %v4980
      %v5313 = vpop.f32.mrf.mxu0
      %v5314 = vadd.f32 %v5005, %v5313
      %v5315 = vpop.f32.mrf.mxu0
      %5316 = vmatprep.mubr.f32.mxu0 %v3180
      %5317 = vmatmul.mubr.f32.gmra.mxu0 %v4981
      %v5318 = vpop.f32.mrf.mxu0
      %v5319 = vadd.f32 %v5005, %v5318
      %v5320 = vpop.f32.mrf.mxu0
      %5321 = vdwg.mxu0
      %v5322 = vmul.f32 %v5164, 0.5
      %v5323 = vmul.f32 %v5169, 0.5
      %v5324 = vmul.f32 %v5174, 0.5
      %v5325 = vmul.f32 %v5179, 0.5
      %v5326 = vmul.f32 %v5184, 0.5
      %v5327 = vmul.f32 %v5189, 0.5
      %v5328 = vmul.f32 %v5194, 0.5
      %v5329 = vmul.f32 %v5199, 0.5
      %v5330 = vmul.f32 %v5204, 0.5
      %v5331 = vmul.f32 %v5209, 0.5
      %v5332 = vmul.f32 %v5214, 0.5
      %v5333 = vmul.f32 %v5219, 0.5
      %v5334 = vmul.f32 %v5224, 0.5
      %v5335 = vmul.f32 %v5229, 0.5
      %v5336 = vmul.f32 %v5234, 0.5
      %v5337 = vmul.f32 %v5239, 0.5
      %v5338 = vmul.f32 %v5244, 0.5
      %v5339 = vmul.f32 %v5249, 0.5
      %v5340 = vmul.f32 %v5254, 0.5
      %v5341 = vmul.f32 %v5259, 0.5
      %v5342 = vmul.f32 %v5264, 0.5
      %v5343 = vmul.f32 %v5269, 0.5
      %v5344 = vmul.f32 %v5274, 0.5
      %v5345 = vmul.f32 %v5279, 0.5
      %v5346 = vmul.f32 %v5284, 0.5
      %v5347 = vmul.f32 %v5289, 0.5
      %v5348 = vmul.f32 %v5294, 0.5
      %v5349 = vmul.f32 %v5299, 0.5
      %v5350 = vmul.f32 %v5304, 0.5
      %v5351 = vmul.f32 %v5309, 0.5
      %v5352 = vmul.f32 %v5314, 0.5
      %v5353 = vmul.f32 %v5319, 0.5
      %v5354 = vmul.f32 %v5164, 0.70710677
      %v5355 = vmul.f32 %v5169, 0.70710677
      %v5356 = vmul.f32 %v5174, 0.70710677
      %v5357 = vmul.f32 %v5179, 0.70710677
      %v5358 = vmul.f32 %v5184, 0.70710677
      %v5359 = vmul.f32 %v5189, 0.70710677
      %v5360 = vmul.f32 %v5194, 0.70710677
      %v5361 = vmul.f32 %v5199, 0.70710677
      %v5362 = vmul.f32 %v5204, 0.70710677
      %v5363 = vmul.f32 %v5209, 0.70710677
      %v5364 = vmul.f32 %v5214, 0.70710677
      %v5365 = vmul.f32 %v5219, 0.70710677
      %v5366 = vmul.f32 %v5224, 0.70710677
      %v5367 = vmul.f32 %v5229, 0.70710677
      %v5368 = vmul.f32 %v5234, 0.70710677
      %v5369 = vmul.f32 %v5239, 0.70710677
      %v5370 = vmul.f32 %v5244, 0.70710677
      %v5371 = vmul.f32 %v5249, 0.70710677
      %v5372 = vmul.f32 %v5254, 0.70710677
      %v5373 = vmul.f32 %v5259, 0.70710677
      %v5374 = vmul.f32 %v5264, 0.70710677
      %v5375 = vmul.f32 %v5269, 0.70710677
      %v5376 = vmul.f32 %v5274, 0.70710677
      %v5377 = vmul.f32 %v5279, 0.70710677
      %v5378 = vmul.f32 %v5284, 0.70710677
      %v5379 = vmul.f32 %v5289, 0.70710677
      %v5380 = vmul.f32 %v5294, 0.70710677
      %v5381 = vmul.f32 %v5299, 0.70710677
      %v5382 = vmul.f32 %v5304, 0.70710677
      %v5383 = vmul.f32 %v5309, 0.70710677
      %v5384 = vmul.f32 %v5314, 0.70710677
      %v5385 = vmul.f32 %v5319, 0.70710677
      %v5386 = verf.f32.pop %v5354
      %v5387 = verf.f32.pop %v5355
      %v5388 = verf.f32.pop %v5356
      %v5389 = verf.f32.pop %v5357
      %v5390 = verf.f32.pop %v5358
      %v5391 = verf.f32.pop %v5359
      %v5392 = verf.f32.pop %v5360
      %v5393 = verf.f32.pop %v5361
      %v5394 = verf.f32.pop %v5362
      %v5395 = verf.f32.pop %v5363
      %v5396 = verf.f32.pop %v5364
      %v5397 = verf.f32.pop %v5365
      %v5398 = verf.f32.pop %v5366
      %v5399 = verf.f32.pop %v5367
      %v5400 = verf.f32.pop %v5368
      %v5401 = verf.f32.pop %v5369
      %v5402 = verf.f32.pop %v5370
      %v5403 = verf.f32.pop %v5371
      %v5404 = verf.f32.pop %v5372
      %v5405 = verf.f32.pop %v5373
      %v5406 = verf.f32.pop %v5374
      %v5407 = verf.f32.pop %v5375
      %v5408 = verf.f32.pop %v5376
      %v5409 = verf.f32.pop %v5377
      %v5410 = verf.f32.pop %v5378
      %v5411 = verf.f32.pop %v5379
      %v5412 = verf.f32.pop %v5380
      %v5413 = verf.f32.pop %v5381
      %v5414 = verf.f32.pop %v5382
      %v5415 = verf.f32.pop %v5383
      %v5416 = verf.f32.pop %v5384
      %v5417 = verf.f32.pop %v5385
      %v5418 = vadd.f32 %v5386, 1.0
      %v5419 = vadd.f32 %v5387, 1.0
      %v5420 = vadd.f32 %v5388, 1.0
      %v5421 = vadd.f32 %v5389, 1.0
      %v5422 = vadd.f32 %v5390, 1.0
      %v5423 = vadd.f32 %v5391, 1.0
      %v5424 = vadd.f32 %v5392, 1.0
      %v5425 = vadd.f32 %v5393, 1.0
      %v5426 = vadd.f32 %v5394, 1.0
      %v5427 = vadd.f32 %v5395, 1.0
      %v5428 = vadd.f32 %v5396, 1.0
      %v5429 = vadd.f32 %v5397, 1.0
      %v5430 = vadd.f32 %v5398, 1.0
      %v5431 = vadd.f32 %v5399, 1.0
      %v5432 = vadd.f32 %v5400, 1.0
      %v5433 = vadd.f32 %v5401, 1.0
      %v5434 = vadd.f32 %v5402, 1.0
      %v5435 = vadd.f32 %v5403, 1.0
      %v5436 = vadd.f32 %v5404, 1.0
      %v5437 = vadd.f32 %v5405, 1.0
      %v5438 = vadd.f32 %v5406, 1.0
      %v5439 = vadd.f32 %v5407, 1.0
      %v5440 = vadd.f32 %v5408, 1.0
      %v5441 = vadd.f32 %v5409, 1.0
      %v5442 = vadd.f32 %v5410, 1.0
      %v5443 = vadd.f32 %v5411, 1.0
      %v5444 = vadd.f32 %v5412, 1.0
      %v5445 = vadd.f32 %v5413, 1.0
      %v5446 = vadd.f32 %v5414, 1.0
      %v5447 = vadd.f32 %v5415, 1.0
      %v5448 = vadd.f32 %v5416, 1.0
      %v5449 = vadd.f32 %v5417, 1.0
      %v5450 = vmul.f32 %v5322, %v5418
      %v5451 = vmul.f32 %v5323, %v5419
      %v5452 = vmul.f32 %v5324, %v5420
      %v5453 = vmul.f32 %v5325, %v5421
      %v5454 = vmul.f32 %v5326, %v5422
      %v5455 = vmul.f32 %v5327, %v5423
      %v5456 = vmul.f32 %v5328, %v5424
      %v5457 = vmul.f32 %v5329, %v5425
      %v5458 = vmul.f32 %v5330, %v5426
      %v5459 = vmul.f32 %v5331, %v5427
      %v5460 = vmul.f32 %v5332, %v5428
      %v5461 = vmul.f32 %v5333, %v5429
      %v5462 = vmul.f32 %v5334, %v5430
      %v5463 = vmul.f32 %v5335, %v5431
      %v5464 = vmul.f32 %v5336, %v5432
      %v5465 = vmul.f32 %v5337, %v5433
      %v5466 = vmul.f32 %v5338, %v5434
      %v5467 = vmul.f32 %v5339, %v5435
      %v5468 = vmul.f32 %v5340, %v5436
      %v5469 = vmul.f32 %v5341, %v5437
      %v5470 = vmul.f32 %v5342, %v5438
      %v5471 = vmul.f32 %v5343, %v5439
      %v5472 = vmul.f32 %v5344, %v5440
      %v5473 = vmul.f32 %v5345, %v5441
      %v5474 = vmul.f32 %v5346, %v5442
      %v5475 = vmul.f32 %v5347, %v5443
      %v5476 = vmul.f32 %v5348, %v5444
      %v5477 = vmul.f32 %v5349, %v5445
      %v5478 = vmul.f32 %v5350, %v5446
      %v5479 = vmul.f32 %v5351, %v5447
      %v5480 = vmul.f32 %v5352, %v5448
      %v5481 = vmul.f32 %v5353, %v5449
      %v5482 = vld [vmem:[%s7] sm:$0xff]
      %v5483 = vld [vmem:[%s7 + $0x8] sm:$0xff]
      %v5484 = vld [vmem:[%s8] sm:$0x1]
      %v5486 = vlaneseq
      %v5487 = vshrl.u32 %v5486, 7
      %v5488 = vsub.s32 0, %v5487
      %v5489 = vrot.slane %v5484, %v5488
      %v5492 = vsel %vm2836, %v5450, 0
      %v5495 = vsel %vm2836, %v5451, 0
      %v5498 = vsel %vm2836, %v5452, 0
      %v5501 = vsel %vm2836, %v5453, 0
      %v5504 = vsel %vm2836, %v5454, 0
      %v5507 = vsel %vm2836, %v5455, 0
      %v5510 = vsel %vm2836, %v5456, 0
      %v5513 = vsel %vm2836, %v5457, 0
      %v5516 = vsel %vm2836, %v5458, 0
      %v5519 = vsel %vm2836, %v5459, 0
      %v5522 = vsel %vm2836, %v5460, 0
      %v5525 = vsel %vm2836, %v5461, 0
      %v5528 = vsel %vm2836, %v5462, 0
      %v5531 = vsel %vm2836, %v5463, 0
      %v5534 = vsel %vm2836, %v5464, 0
      %v5537 = vsel %vm2836, %v5465, 0
      %v5540 = vsel %vm2836, %v5466, 0
      %v5543 = vsel %vm2836, %v5467, 0
      %v5546 = vsel %vm2836, %v5468, 0
      %v5549 = vsel %vm2836, %v5469, 0
      %v5552 = vsel %vm2836, %v5470, 0
      %v5555 = vsel %vm2836, %v5471, 0
      %v5558 = vsel %vm2836, %v5472, 0
      %v5561 = vsel %vm2836, %v5473, 0
      %v5564 = vsel %vm2836, %v5474, 0
      %v5567 = vsel %vm2836, %v5475, 0
      %v5570 = vsel %vm2836, %v5476, 0
      %v5573 = vsel %vm2836, %v5477, 0
      %v5576 = vsel %vm2836, %v5478, 0
      %v5579 = vsel %vm2836, %v5479, 0
      %v5582 = vsel %vm2836, %v5480, 0
      %v5585 = vsel %vm2836, %v5481, 0
      %5587 = vmatprep.subr.mxu0 0.0
      %5588 = vmatpush1.msra.mxu0 0.0
      %5589 = vmatprep.subr.mxu0 0.0
      %5590 = vmatpush1.msra.mxu0 0.0
      %5591 = vmatprep.subr.mxu0 0.0
      %5592 = vmatpush1.msra.mxu0 0.0
      %5593 = vmatprep.subr.mxu0 0.0
      %5594 = vmatpush1.msra.mxu0 0.0
      %5595 = vmatprep.subr.mxu0 0.0
      %5596 = vmatpush1.msra.mxu0 0.0
      %5597 = vmatprep.subr.mxu0 0.0
      %5598 = vmatpush1.msra.mxu0 0.0
      %5599 = vmatprep.subr.mxu0 0.0
      %5600 = vmatpush1.msra.mxu0 0.0
      %5601 = vmatprep.subr.mxu0 0.0
      %5602 = vmatpush1.msra.mxu0 0.0
      %5603 = vmatprep.subr.mxu0 0.0
      %5604 = vmatpush1.msra.mxu0 0.0
      %5605 = vmatprep.subr.mxu0 0.0
      %5606 = vmatpush1.msra.mxu0 0.0
      %5607 = vmatprep.subr.mxu0 0.0
      %5608 = vmatpush1.msra.mxu0 0.0
      %5609 = vmatprep.subr.mxu0 0.0
      %5610 = vmatpush1.msra.mxu0 0.0
      %5611 = vmatprep.subr.mxu0 0.0
      %5612 = vmatpush1.msra.mxu0 0.0
      %5613 = vmatprep.subr.mxu0 0.0
      %5614 = vmatpush1.msra.mxu0 0.0
      %5615 = vmatprep.subr.mxu0 0.0
      %5616 = vmatpush1.msra.mxu0 %v5483
      %5617 = vmatprep.subr.mxu0 0.0
      %5618 = vmatpush1.msra.mxu0 %v5482
      %5619 = vmatprep.subr.mxu0 0.0
      %5620 = vmatpush2.msra.mxu0 0.0
      %5621 = vmatprep.subr.mxu0 0.0
      %5622 = vmatpush2.msra.mxu0 0.0
      %5623 = vmatprep.subr.mxu0 0.0
      %5624 = vmatpush2.msra.mxu0 0.0
      %5625 = vmatprep.subr.mxu0 0.0
      %5626 = vmatpush2.msra.mxu0 0.0
      %5627 = vmatprep.subr.mxu0 0.0
      %5628 = vmatpush2.msra.mxu0 0.0
      %5629 = vmatprep.subr.mxu0 0.0
      %5630 = vmatpush2.msra.mxu0 0.0
      %5631 = vmatprep.subr.mxu0 0.0
      %5632 = vmatpush2.msra.mxu0 0.0
      %5633 = vmatprep.subr.mxu0 0.0
      %5634 = vmatpush2.msra.mxu0 0.0
      %5635 = vmatprep.subr.mxu0 0.0
      %5636 = vmatpush2.msra.mxu0 0.0
      %5637 = vmatprep.subr.mxu0 0.0
      %5638 = vmatpush2.msra.mxu0 0.0
      %5639 = vmatprep.subr.mxu0 0.0
      %5640 = vmatpush2.msra.mxu0 0.0
      %5641 = vmatprep.subr.mxu0 0.0
      %5642 = vmatpush2.msra.mxu0 0.0
      %5643 = vmatprep.subr.mxu0 0.0
      %5644 = vmatpush2.msra.mxu0 0.0
      %5645 = vmatprep.subr.mxu0 0.0
      %5646 = vmatpush2.msra.mxu0 0.0
      %5647 = vmatprep.subr.mxu0 0.0
      %5648 = vmatpush2.msra.mxu0 0.0
      %5649 = vmatprep.subr.mxu0 0.0
      %5650 = vmatpush2.msra.mxu0 0.0
      %5651 = vmatprep.mubr.f32.mxu0 0.0
      %5652 = vmatmul.mubr.f32.gmra.mxu0 %v5492
      %v5653 = vpop.f32.mrf.mxu0
      %v5654 = vadd.f32 %v5489, %v5653
      %v5655 = vpop.f32.mrf.mxu0
      %5656 = vmatprep.mubr.f32.mxu0 0.0
      %5657 = vmatmul.mubr.f32.gmra.mxu0 %v5495
      %v5658 = vpop.f32.mrf.mxu0
      %v5659 = vadd.f32 %v5489, %v5658
      %v5660 = vpop.f32.mrf.mxu0
      %5661 = vmatprep.mubr.f32.mxu0 0.0
      %5662 = vmatmul.mubr.f32.gmra.mxu0 %v5498
      %v5663 = vpop.f32.mrf.mxu0
      %v5664 = vadd.f32 %v5489, %v5663
      %v5665 = vpop.f32.mrf.mxu0
      %5666 = vmatprep.mubr.f32.mxu0 0.0
      %5667 = vmatmul.mubr.f32.gmra.mxu0 %v5501
      %v5668 = vpop.f32.mrf.mxu0
      %v5669 = vadd.f32 %v5489, %v5668
      %v5670 = vpop.f32.mrf.mxu0
      %5671 = vmatprep.mubr.f32.mxu0 0.0
      %5672 = vmatmul.mubr.f32.gmra.mxu0 %v5504
      %v5673 = vpop.f32.mrf.mxu0
      %v5674 = vadd.f32 %v5489, %v5673
      %v5675 = vpop.f32.mrf.mxu0
      %5676 = vmatprep.mubr.f32.mxu0 0.0
      %5677 = vmatmul.mubr.f32.gmra.mxu0 %v5507
      %v5678 = vpop.f32.mrf.mxu0
      %v5679 = vadd.f32 %v5489, %v5678
      %v5680 = vpop.f32.mrf.mxu0
      %5681 = vmatprep.mubr.f32.mxu0 0.0
      %5682 = vmatmul.mubr.f32.gmra.mxu0 %v5510
      %v5683 = vpop.f32.mrf.mxu0
      %v5684 = vadd.f32 %v5489, %v5683
      %v5685 = vpop.f32.mrf.mxu0
      %5686 = vmatprep.mubr.f32.mxu0 0.0
      %5687 = vmatmul.mubr.f32.gmra.mxu0 %v5513
      %v5688 = vpop.f32.mrf.mxu0
      %v5689 = vadd.f32 %v5489, %v5688
      %v5690 = vpop.f32.mrf.mxu0
      %5691 = vmatprep.mubr.f32.mxu0 0.0
      %5692 = vmatmul.mubr.f32.gmra.mxu0 %v5516
      %v5693 = vpop.f32.mrf.mxu0
      %v5694 = vadd.f32 %v5489, %v5693
      %v5695 = vpop.f32.mrf.mxu0
      %5696 = vmatprep.mubr.f32.mxu0 0.0
      %5697 = vmatmul.mubr.f32.gmra.mxu0 %v5519
      %v5698 = vpop.f32.mrf.mxu0
      %v5699 = vadd.f32 %v5489, %v5698
      %v5700 = vpop.f32.mrf.mxu0
      %5701 = vmatprep.mubr.f32.mxu0 0.0
      %5702 = vmatmul.mubr.f32.gmra.mxu0 %v5522
      %v5703 = vpop.f32.mrf.mxu0
      %v5704 = vadd.f32 %v5489, %v5703
      %v5705 = vpop.f32.mrf.mxu0
      %5706 = vmatprep.mubr.f32.mxu0 0.0
      %5707 = vmatmul.mubr.f32.gmra.mxu0 %v5525
      %v5708 = vpop.f32.mrf.mxu0
      %v5709 = vadd.f32 %v5489, %v5708
      %v5710 = vpop.f32.mrf.mxu0
      %5711 = vmatprep.mubr.f32.mxu0 0.0
      %5712 = vmatmul.mubr.f32.gmra.mxu0 %v5528
      %v5713 = vpop.f32.mrf.mxu0
      %v5714 = vadd.f32 %v5489, %v5713
      %v5715 = vpop.f32.mrf.mxu0
      %5716 = vmatprep.mubr.f32.mxu0 0.0
      %5717 = vmatmul.mubr.f32.gmra.mxu0 %v5531
      %v5718 = vpop.f32.mrf.mxu0
      %v5719 = vadd.f32 %v5489, %v5718
      %v5720 = vpop.f32.mrf.mxu0
      %5721 = vmatprep.mubr.f32.mxu0 0.0
      %5722 = vmatmul.mubr.f32.gmra.mxu0 %v5534
      %v5723 = vpop.f32.mrf.mxu0
      %v5724 = vadd.f32 %v5489, %v5723
      %v5725 = vpop.f32.mrf.mxu0
      %5726 = vmatprep.mubr.f32.mxu0 0.0
      %5727 = vmatmul.mubr.f32.gmra.mxu0 %v5537
      %v5728 = vpop.f32.mrf.mxu0
      %v5729 = vadd.f32 %v5489, %v5728
      %v5730 = vpop.f32.mrf.mxu0
      %5731 = vmatprep.mubr.f32.mxu0 0.0
      %5732 = vmatmul.mubr.f32.gmra.mxu0 %v5540
      %v5733 = vpop.f32.mrf.mxu0
      %v5734 = vadd.f32 %v5489, %v5733
      %v5735 = vpop.f32.mrf.mxu0
      %5736 = vmatprep.mubr.f32.mxu0 0.0
      %5737 = vmatmul.mubr.f32.gmra.mxu0 %v5543
      %v5738 = vpop.f32.mrf.mxu0
      %v5739 = vadd.f32 %v5489, %v5738
      %v5740 = vpop.f32.mrf.mxu0
      %5741 = vmatprep.mubr.f32.mxu0 0.0
      %5742 = vmatmul.mubr.f32.gmra.mxu0 %v5546
      %v5743 = vpop.f32.mrf.mxu0
      %v5744 = vadd.f32 %v5489, %v5743
      %v5745 = vpop.f32.mrf.mxu0
      %5746 = vmatprep.mubr.f32.mxu0 0.0
      %5747 = vmatmul.mubr.f32.gmra.mxu0 %v5549
      %v5748 = vpop.f32.mrf.mxu0
      %v5749 = vadd.f32 %v5489, %v5748
      %v5750 = vpop.f32.mrf.mxu0
      %5751 = vmatprep.mubr.f32.mxu0 0.0
      %5752 = vmatmul.mubr.f32.gmra.mxu0 %v5552
      %v5753 = vpop.f32.mrf.mxu0
      %v5754 = vadd.f32 %v5489, %v5753
      %v5755 = vpop.f32.mrf.mxu0
      %5756 = vmatprep.mubr.f32.mxu0 0.0
      %5757 = vmatmul.mubr.f32.gmra.mxu0 %v5555
      %v5758 = vpop.f32.mrf.mxu0
      %v5759 = vadd.f32 %v5489, %v5758
      %v5760 = vpop.f32.mrf.mxu0
      %5761 = vmatprep.mubr.f32.mxu0 0.0
      %5762 = vmatmul.mubr.f32.gmra.mxu0 %v5558
      %v5763 = vpop.f32.mrf.mxu0
      %v5764 = vadd.f32 %v5489, %v5763
      %v5765 = vpop.f32.mrf.mxu0
      %5766 = vmatprep.mubr.f32.mxu0 0.0
      %5767 = vmatmul.mubr.f32.gmra.mxu0 %v5561
      %v5768 = vpop.f32.mrf.mxu0
      %v5769 = vadd.f32 %v5489, %v5768
      %v5770 = vpop.f32.mrf.mxu0
      %5771 = vmatprep.mubr.f32.mxu0 0.0
      %5772 = vmatmul.mubr.f32.gmra.mxu0 %v5564
      %v5773 = vpop.f32.mrf.mxu0
      %v5774 = vadd.f32 %v5489, %v5773
      %v5775 = vpop.f32.mrf.mxu0
      %5776 = vmatprep.mubr.f32.mxu0 0.0
      %5777 = vmatmul.mubr.f32.gmra.mxu0 %v5567
      %v5778 = vpop.f32.mrf.mxu0
      %v5779 = vadd.f32 %v5489, %v5778
      %v5780 = vpop.f32.mrf.mxu0
      %5781 = vmatprep.mubr.f32.mxu0 0.0
      %5782 = vmatmul.mubr.f32.gmra.mxu0 %v5570
      %v5783 = vpop.f32.mrf.mxu0
      %v5784 = vadd.f32 %v5489, %v5783
      %v5785 = vpop.f32.mrf.mxu0
      %5786 = vmatprep.mubr.f32.mxu0 0.0
      %5787 = vmatmul.mubr.f32.gmra.mxu0 %v5573
      %v5788 = vpop.f32.mrf.mxu0
      %v5789 = vadd.f32 %v5489, %v5788
      %v5790 = vpop.f32.mrf.mxu0
      %5791 = vmatprep.mubr.f32.mxu0 0.0
      %5792 = vmatmul.mubr.f32.gmra.mxu0 %v5576
      %v5793 = vpop.f32.mrf.mxu0
      %v5794 = vadd.f32 %v5489, %v5793
      %v5795 = vpop.f32.mrf.mxu0
      %5796 = vmatprep.mubr.f32.mxu0 0.0
      %5797 = vmatmul.mubr.f32.gmra.mxu0 %v5579
      %v5798 = vpop.f32.mrf.mxu0
      %v5799 = vadd.f32 %v5489, %v5798
      %v5800 = vpop.f32.mrf.mxu0
      %5801 = vmatprep.mubr.f32.mxu0 0.0
      %5802 = vmatmul.mubr.f32.gmra.mxu0 %v5582
      %v5803 = vpop.f32.mrf.mxu0
      %v5804 = vadd.f32 %v5489, %v5803
      %v5805 = vpop.f32.mrf.mxu0
      %5806 = vmatprep.mubr.f32.mxu0 0.0
      %5807 = vmatmul.mubr.f32.gmra.mxu0 %v5585
      %v5808 = vpop.f32.mrf.mxu0
      %v5809 = vadd.f32 %v5489, %v5808
      %v5810 = vpop.f32.mrf.mxu0
      %5811 = vdwg.mxu0
      %v5812 = vadd.f32 %v5654, %v333
      %v5813 = vadd.f32 %v5659, %v334
      %v5814 = vadd.f32 %v5664, %v335
      %v5815 = vadd.f32 %v5669, %v336
      %v5816 = vadd.f32 %v5674, %v337
      %v5817 = vadd.f32 %v5679, %v338
      %v5818 = vadd.f32 %v5684, %v339
      %v5819 = vadd.f32 %v5689, %v340
      %v5820 = vadd.f32 %v5694, %v341
      %v5821 = vadd.f32 %v5699, %v342
      %v5822 = vadd.f32 %v5704, %v343
      %v5823 = vadd.f32 %v5709, %v344
      %v5824 = vadd.f32 %v5714, %v345
      %v5825 = vadd.f32 %v5719, %v346
      %v5826 = vadd.f32 %v5724, %v347
      %v5827 = vadd.f32 %v5729, %v348
      %v5828 = vadd.f32 %v5734, %v349
      %v5829 = vadd.f32 %v5739, %v350
      %v5830 = vadd.f32 %v5744, %v351
      %v5831 = vadd.f32 %v5749, %v352
      %v5832 = vadd.f32 %v5754, %v353
      %v5833 = vadd.f32 %v5759, %v354
      %v5834 = vadd.f32 %v5764, %v355
      %v5835 = vadd.f32 %v5769, %v356
      %v5836 = vadd.f32 %v5774, %v357
      %v5837 = vadd.f32 %v5779, %v358
      %v5838 = vadd.f32 %v5784, %v359
      %v5839 = vadd.f32 %v5789, %v360
      %v5840 = vadd.f32 %v5794, %v361
      %v5841 = vadd.f32 %v5799, %v362
      %v5842 = vadd.f32 %v5804, %v363
      %v5843 = vadd.f32 %v5809, %v364
      %v5876 = vrot.slane %v5812, 1
      %v5877 = vrot.slane %v5813, 1
      %v5878 = vsel %vm1715, %v5876, %v5877
      %v5879 = vrot.slane %v5814, 1
      %v5880 = vsel %vm1715, %v5877, %v5879
      %v5881 = vrot.slane %v5815, 1
      %v5882 = vsel %vm1715, %v5879, %v5881
      %v5883 = vrot.slane %v5816, 1
      %v5884 = vsel %vm1715, %v5881, %v5883
      %v5885 = vrot.slane %v5817, 1
      %v5886 = vsel %vm1715, %v5883, %v5885
      %v5887 = vrot.slane %v5818, 1
      %v5888 = vsel %vm1715, %v5885, %v5887
      %v5889 = vrot.slane %v5819, 1
      %v5890 = vsel %vm1715, %v5887, %v5889
      %v5891 = vrot.slane %v5820, 1
      %v5892 = vsel %vm1715, %v5889, %v5891
      %v5893 = vrot.slane %v5821, 1
      %v5894 = vsel %vm1715, %v5891, %v5893
      %v5895 = vrot.slane %v5822, 1
      %v5896 = vsel %vm1715, %v5893, %v5895
      %v5897 = vrot.slane %v5823, 1
      %v5898 = vsel %vm1715, %v5895, %v5897
      %v5899 = vrot.slane %v5824, 1
      %v5900 = vsel %vm1715, %v5897, %v5899
      %v5901 = vrot.slane %v5825, 1
      %v5902 = vsel %vm1715, %v5899, %v5901
      %v5903 = vrot.slane %v5826, 1
      %v5904 = vsel %vm1715, %v5901, %v5903
      %v5905 = vrot.slane %v5827, 1
      %v5906 = vsel %vm1715, %v5903, %v5905
      %v5907 = vrot.slane %v5828, 1
      %v5908 = vsel %vm1715, %v5905, %v5907
      %v5909 = vrot.slane %v5829, 1
      %v5910 = vsel %vm1715, %v5907, %v5909
      %v5911 = vrot.slane %v5830, 1
      %v5912 = vsel %vm1715, %v5909, %v5911
      %v5913 = vrot.slane %v5831, 1
      %v5914 = vsel %vm1715, %v5911, %v5913
      %v5915 = vrot.slane %v5832, 1
      %v5916 = vsel %vm1715, %v5913, %v5915
      %v5917 = vrot.slane %v5833, 1
      %v5918 = vsel %vm1715, %v5915, %v5917
      %v5919 = vrot.slane %v5834, 1
      %v5920 = vsel %vm1715, %v5917, %v5919
      %v5921 = vrot.slane %v5835, 1
      %v5922 = vsel %vm1715, %v5919, %v5921
      %v5923 = vrot.slane %v5836, 1
      %v5924 = vsel %vm1715, %v5921, %v5923
      %v5925 = vrot.slane %v5837, 1
      %v5926 = vsel %vm1715, %v5923, %v5925
      %v5927 = vrot.slane %v5838, 1
      %v5928 = vsel %vm1715, %v5925, %v5927
      %v5929 = vrot.slane %v5839, 1
      %v5930 = vsel %vm1715, %v5927, %v5929
      %v5931 = vrot.slane %v5840, 1
      %v5932 = vsel %vm1715, %v5929, %v5931
      %v5933 = vrot.slane %v5841, 1
      %v5934 = vsel %vm1715, %v5931, %v5933
      %v5935 = vrot.slane %v5842, 1
      %v5936 = vsel %vm1715, %v5933, %v5935
      %v5937 = vrot.slane %v5843, 1
      %v5938 = vsel %vm1715, %v5935, %v5937
      %v5971 = vsel %vm1715, %v5937, 0.0
      %v5972 = vadd.f32 %v5812, %v5878
      %v5973 = vadd.f32 %v5813, %v5880
      %v5974 = vadd.f32 %v5814, %v5882
      %v5975 = vadd.f32 %v5815, %v5884
      %v5976 = vadd.f32 %v5816, %v5886
      %v5977 = vadd.f32 %v5817, %v5888
      %v5978 = vadd.f32 %v5818, %v5890
      %v5979 = vadd.f32 %v5819, %v5892
      %v5980 = vadd.f32 %v5820, %v5894
      %v5981 = vadd.f32 %v5821, %v5896
      %v5982 = vadd.f32 %v5822, %v5898
      %v5983 = vadd.f32 %v5823, %v5900
      %v5984 = vadd.f32 %v5824, %v5902
      %v5985 = vadd.f32 %v5825, %v5904
      %v5986 = vadd.f32 %v5826, %v5906
      %v5987 = vadd.f32 %v5827, %v5908
      %v5988 = vadd.f32 %v5828, %v5910
      %v5989 = vadd.f32 %v5829, %v5912
      %v5990 = vadd.f32 %v5830, %v5914
      %v5991 = vadd.f32 %v5831, %v5916
      %v5992 = vadd.f32 %v5832, %v5918
      %v5993 = vadd.f32 %v5833, %v5920
      %v5994 = vadd.f32 %v5834, %v5922
      %v5995 = vadd.f32 %v5835, %v5924
      %v5996 = vadd.f32 %v5836, %v5926
      %v5997 = vadd.f32 %v5837, %v5928
      %v5998 = vadd.f32 %v5838, %v5930
      %v5999 = vadd.f32 %v5839, %v5932
      %v6000 = vadd.f32 %v5840, %v5934
      %v6001 = vadd.f32 %v5841, %v5936
      %v6002 = vadd.f32 %v5842, %v5938
      %v6003 = vadd.f32 %v5843, %v5971
      %v6004 = vadd.f32 %v5972, %v5974
      %v6005 = vadd.f32 %v5973, %v5975
      %v6006 = vadd.f32 %v5976, %v5978
      %v6007 = vadd.f32 %v5977, %v5979
      %v6008 = vadd.f32 %v5980, %v5982
      %v6009 = vadd.f32 %v5981, %v5983
      %v6010 = vadd.f32 %v5984, %v5986
      %v6011 = vadd.f32 %v5985, %v5987
      %v6012 = vadd.f32 %v5988, %v5990
      %v6013 = vadd.f32 %v5989, %v5991
      %v6014 = vadd.f32 %v5992, %v5994
      %v6015 = vadd.f32 %v5993, %v5995
      %v6016 = vadd.f32 %v5996, %v5998
      %v6017 = vadd.f32 %v5997, %v5999
      %v6018 = vadd.f32 %v6000, %v6002
      %v6019 = vadd.f32 %v6001, %v6003
      %v6036 = vcombine.high %v6004, %v6004
      %v6038 = vunpack.c.l.s4 1983009808
      %v6039 = vunpack.c.0.s8 %v6038
      %v6040 = vlaneseq
      %v6041 = vshrl.u32 %v6040, 7
      %v6042 = vsub.s32 %v6039, %v6041
      %v6043 = vrot.slane %v6004, %v6042
      %v6045 = vunpack.c.l.s4 1983009808
      %v6046 = vunpack.c.0.s8 %v6045
      %v6047 = vlaneseq
      %v6048 = vshrl.u32 %v6047, 7
      %v6049 = vsub.s32 %v6046, %v6048
      %v6050 = vrot.slane %v6036, %v6049
      %v6051 = vcombine.high %v6043, %v6043
      %v6052 = vcombine.high %v6050, %v6050
      %v6053 = vcombine.high %v6005, %v6005
      %v6055 = vunpack.c.l.s4 1983009808
      %v6056 = vunpack.c.0.s8 %v6055
      %v6057 = vlaneseq
      %v6058 = vshrl.u32 %v6057, 7
      %v6059 = vsub.s32 %v6056, %v6058
      %v6060 = vrot.slane %v6005, %v6059
      %v6062 = vunpack.c.l.s4 1983009808
      %v6063 = vunpack.c.0.s8 %v6062
      %v6064 = vlaneseq
      %v6065 = vshrl.u32 %v6064, 7
      %v6066 = vsub.s32 %v6063, %v6065
      %v6067 = vrot.slane %v6053, %v6066
      %v6068 = vcombine.high %v6060, %v6060
      %v6069 = vcombine.high %v6067, %v6067
      %v6070 = vcombine.high %v6006, %v6006
      %v6072 = vunpack.c.l.s4 1983009808
      %v6073 = vunpack.c.0.s8 %v6072
      %v6074 = vlaneseq
      %v6075 = vshrl.u32 %v6074, 7
      %v6076 = vsub.s32 %v6073, %v6075
      %v6077 = vrot.slane %v6006, %v6076
      %v6079 = vunpack.c.l.s4 1983009808
      %v6080 = vunpack.c.0.s8 %v6079
      %v6081 = vlaneseq
      %v6082 = vshrl.u32 %v6081, 7
      %v6083 = vsub.s32 %v6080, %v6082
      %v6084 = vrot.slane %v6070, %v6083
      %v6085 = vcombine.high %v6077, %v6077
      %v6086 = vcombine.high %v6084, %v6084
      %v6087 = vcombine.high %v6007, %v6007
      %v6089 = vunpack.c.l.s4 1983009808
      %v6090 = vunpack.c.0.s8 %v6089
      %v6091 = vlaneseq
      %v6092 = vshrl.u32 %v6091, 7
      %v6093 = vsub.s32 %v6090, %v6092
      %v6094 = vrot.slane %v6007, %v6093
      %v6096 = vunpack.c.l.s4 1983009808
      %v6097 = vunpack.c.0.s8 %v6096
      %v6098 = vlaneseq
      %v6099 = vshrl.u32 %v6098, 7
      %v6100 = vsub.s32 %v6097, %v6099
      %v6101 = vrot.slane %v6087, %v6100
      %v6102 = vcombine.high %v6094, %v6094
      %v6103 = vcombine.high %v6101, %v6101
      %v6104 = vcombine.high %v6008, %v6008
      %v6106 = vunpack.c.l.s4 1983009808
      %v6107 = vunpack.c.0.s8 %v6106
      %v6108 = vlaneseq
      %v6109 = vshrl.u32 %v6108, 7
      %v6110 = vsub.s32 %v6107, %v6109
      %v6111 = vrot.slane %v6008, %v6110
      %v6113 = vunpack.c.l.s4 1983009808
      %v6114 = vunpack.c.0.s8 %v6113
      %v6115 = vlaneseq
      %v6116 = vshrl.u32 %v6115, 7
      %v6117 = vsub.s32 %v6114, %v6116
      %v6118 = vrot.slane %v6104, %v6117
      %v6119 = vcombine.high %v6111, %v6111
      %v6120 = vcombine.high %v6118, %v6118
      %v6121 = vcombine.high %v6009, %v6009
      %v6123 = vunpack.c.l.s4 1983009808
      %v6124 = vunpack.c.0.s8 %v6123
      %v6125 = vlaneseq
      %v6126 = vshrl.u32 %v6125, 7
      %v6127 = vsub.s32 %v6124, %v6126
      %v6128 = vrot.slane %v6009, %v6127
      %v6130 = vunpack.c.l.s4 1983009808
      %v6131 = vunpack.c.0.s8 %v6130
      %v6132 = vlaneseq
      %v6133 = vshrl.u32 %v6132, 7
      %v6134 = vsub.s32 %v6131, %v6133
      %v6135 = vrot.slane %v6121, %v6134
      %v6136 = vcombine.high %v6128, %v6128
      %v6137 = vcombine.high %v6135, %v6135
      %v6138 = vcombine.high %v6010, %v6010
      %v6140 = vunpack.c.l.s4 1983009808
      %v6141 = vunpack.c.0.s8 %v6140
      %v6142 = vlaneseq
      %v6143 = vshrl.u32 %v6142, 7
      %v6144 = vsub.s32 %v6141, %v6143
      %v6145 = vrot.slane %v6010, %v6144
      %v6147 = vunpack.c.l.s4 1983009808
      %v6148 = vunpack.c.0.s8 %v6147
      %v6149 = vlaneseq
      %v6150 = vshrl.u32 %v6149, 7
      %v6151 = vsub.s32 %v6148, %v6150
      %v6152 = vrot.slane %v6138, %v6151
      %v6153 = vcombine.high %v6145, %v6145
      %v6154 = vcombine.high %v6152, %v6152
      %v6155 = vcombine.high %v6011, %v6011
      %v6157 = vunpack.c.l.s4 1983009808
      %v6158 = vunpack.c.0.s8 %v6157
      %v6159 = vlaneseq
      %v6160 = vshrl.u32 %v6159, 7
      %v6161 = vsub.s32 %v6158, %v6160
      %v6162 = vrot.slane %v6011, %v6161
      %v6164 = vunpack.c.l.s4 1983009808
      %v6165 = vunpack.c.0.s8 %v6164
      %v6166 = vlaneseq
      %v6167 = vshrl.u32 %v6166, 7
      %v6168 = vsub.s32 %v6165, %v6167
      %v6169 = vrot.slane %v6155, %v6168
      %v6170 = vcombine.high %v6162, %v6162
      %v6171 = vcombine.high %v6169, %v6169
      %v6172 = vcombine.high %v6012, %v6012
      %v6174 = vunpack.c.l.s4 1983009808
      %v6175 = vunpack.c.0.s8 %v6174
      %v6176 = vlaneseq
      %v6177 = vshrl.u32 %v6176, 7
      %v6178 = vsub.s32 %v6175, %v6177
      %v6179 = vrot.slane %v6012, %v6178
      %v6181 = vunpack.c.l.s4 1983009808
      %v6182 = vunpack.c.0.s8 %v6181
      %v6183 = vlaneseq
      %v6184 = vshrl.u32 %v6183, 7
      %v6185 = vsub.s32 %v6182, %v6184
      %v6186 = vrot.slane %v6172, %v6185
      %v6187 = vcombine.high %v6179, %v6179
      %v6188 = vcombine.high %v6186, %v6186
      %v6189 = vcombine.high %v6013, %v6013
      %v6191 = vunpack.c.l.s4 1983009808
      %v6192 = vunpack.c.0.s8 %v6191
      %v6193 = vlaneseq
      %v6194 = vshrl.u32 %v6193, 7
      %v6195 = vsub.s32 %v6192, %v6194
      %v6196 = vrot.slane %v6013, %v6195
      %v6198 = vunpack.c.l.s4 1983009808
      %v6199 = vunpack.c.0.s8 %v6198
      %v6200 = vlaneseq
      %v6201 = vshrl.u32 %v6200, 7
      %v6202 = vsub.s32 %v6199, %v6201
      %v6203 = vrot.slane %v6189, %v6202
      %v6204 = vcombine.high %v6196, %v6196
      %v6205 = vcombine.high %v6203, %v6203
      %v6206 = vcombine.high %v6014, %v6014
      %v6208 = vunpack.c.l.s4 1983009808
      %v6209 = vunpack.c.0.s8 %v6208
      %v6210 = vlaneseq
      %v6211 = vshrl.u32 %v6210, 7
      %v6212 = vsub.s32 %v6209, %v6211
      %v6213 = vrot.slane %v6014, %v6212
      %v6215 = vunpack.c.l.s4 1983009808
      %v6216 = vunpack.c.0.s8 %v6215
      %v6217 = vlaneseq
      %v6218 = vshrl.u32 %v6217, 7
      %v6219 = vsub.s32 %v6216, %v6218
      %v6220 = vrot.slane %v6206, %v6219
      %v6221 = vcombine.high %v6213, %v6213
      %v6222 = vcombine.high %v6220, %v6220
      %v6223 = vcombine.high %v6015, %v6015
      %v6225 = vunpack.c.l.s4 1983009808
      %v6226 = vunpack.c.0.s8 %v6225
      %v6227 = vlaneseq
      %v6228 = vshrl.u32 %v6227, 7
      %v6229 = vsub.s32 %v6226, %v6228
      %v6230 = vrot.slane %v6015, %v6229
      %v6232 = vunpack.c.l.s4 1983009808
      %v6233 = vunpack.c.0.s8 %v6232
      %v6234 = vlaneseq
      %v6235 = vshrl.u32 %v6234, 7
      %v6236 = vsub.s32 %v6233, %v6235
      %v6237 = vrot.slane %v6223, %v6236
      %v6238 = vcombine.high %v6230, %v6230
      %v6239 = vcombine.high %v6237, %v6237
      %v6240 = vcombine.high %v6016, %v6016
      %v6242 = vunpack.c.l.s4 1983009808
      %v6243 = vunpack.c.0.s8 %v6242
      %v6244 = vlaneseq
      %v6245 = vshrl.u32 %v6244, 7
      %v6246 = vsub.s32 %v6243, %v6245
      %v6247 = vrot.slane %v6016, %v6246
      %v6249 = vunpack.c.l.s4 1983009808
      %v6250 = vunpack.c.0.s8 %v6249
      %v6251 = vlaneseq
      %v6252 = vshrl.u32 %v6251, 7
      %v6253 = vsub.s32 %v6250, %v6252
      %v6254 = vrot.slane %v6240, %v6253
      %v6255 = vcombine.high %v6247, %v6247
      %v6256 = vcombine.high %v6254, %v6254
      %v6257 = vcombine.high %v6017, %v6017
      %v6259 = vunpack.c.l.s4 1983009808
      %v6260 = vunpack.c.0.s8 %v6259
      %v6261 = vlaneseq
      %v6262 = vshrl.u32 %v6261, 7
      %v6263 = vsub.s32 %v6260, %v6262
      %v6264 = vrot.slane %v6017, %v6263
      %v6266 = vunpack.c.l.s4 1983009808
      %v6267 = vunpack.c.0.s8 %v6266
      %v6268 = vlaneseq
      %v6269 = vshrl.u32 %v6268, 7
      %v6270 = vsub.s32 %v6267, %v6269
      %v6271 = vrot.slane %v6257, %v6270
      %v6272 = vcombine.high %v6264, %v6264
      %v6273 = vcombine.high %v6271, %v6271
      %v6274 = vcombine.high %v6018, %v6018
      %v6276 = vunpack.c.l.s4 1983009808
      %v6277 = vunpack.c.0.s8 %v6276
      %v6278 = vlaneseq
      %v6279 = vshrl.u32 %v6278, 7
      %v6280 = vsub.s32 %v6277, %v6279
      %v6281 = vrot.slane %v6018, %v6280
      %v6283 = vunpack.c.l.s4 1983009808
      %v6284 = vunpack.c.0.s8 %v6283
      %v6285 = vlaneseq
      %v6286 = vshrl.u32 %v6285, 7
      %v6287 = vsub.s32 %v6284, %v6286
      %v6288 = vrot.slane %v6274, %v6287
      %v6289 = vcombine.high %v6281, %v6281
      %v6290 = vcombine.high %v6288, %v6288
      %v6291 = vcombine.high %v6019, %v6019
      %v6293 = vunpack.c.l.s4 1983009808
      %v6294 = vunpack.c.0.s8 %v6293
      %v6295 = vlaneseq
      %v6296 = vshrl.u32 %v6295, 7
      %v6297 = vsub.s32 %v6294, %v6296
      %v6298 = vrot.slane %v6019, %v6297
      %v6300 = vunpack.c.l.s4 1983009808
      %v6301 = vunpack.c.0.s8 %v6300
      %v6302 = vlaneseq
      %v6303 = vshrl.u32 %v6302, 7
      %v6304 = vsub.s32 %v6301, %v6303
      %v6305 = vrot.slane %v6291, %v6304
      %v6306 = vcombine.high %v6298, %v6298
      %v6307 = vcombine.high %v6305, %v6305
      %v6372 = vmul.f32 %v6043, 0.25
      %v6373 = vmul.f32 %v6051, 0.25
      %v6374 = vmul.f32 %v6050, 0.25
      %v6375 = vmul.f32 %v6052, 0.25
      %v6376 = vmul.f32 %v6060, 0.25
      %v6377 = vmul.f32 %v6068, 0.25
      %v6378 = vmul.f32 %v6067, 0.25
      %v6379 = vmul.f32 %v6069, 0.25
      %v6380 = vmul.f32 %v6077, 0.25
      %v6381 = vmul.f32 %v6085, 0.25
      %v6382 = vmul.f32 %v6084, 0.25
      %v6383 = vmul.f32 %v6086, 0.25
      %v6384 = vmul.f32 %v6094, 0.25
      %v6385 = vmul.f32 %v6102, 0.25
      %v6386 = vmul.f32 %v6101, 0.25
      %v6387 = vmul.f32 %v6103, 0.25
      %v6388 = vmul.f32 %v6111, 0.25
      %v6389 = vmul.f32 %v6119, 0.25
      %v6390 = vmul.f32 %v6118, 0.25
      %v6391 = vmul.f32 %v6120, 0.25
      %v6392 = vmul.f32 %v6128, 0.25
      %v6393 = vmul.f32 %v6136, 0.25
      %v6394 = vmul.f32 %v6135, 0.25
      %v6395 = vmul.f32 %v6137, 0.25
      %v6396 = vmul.f32 %v6145, 0.25
      %v6397 = vmul.f32 %v6153, 0.25
      %v6398 = vmul.f32 %v6152, 0.25
      %v6399 = vmul.f32 %v6154, 0.25
      %v6400 = vmul.f32 %v6162, 0.25
      %v6401 = vmul.f32 %v6170, 0.25
      %v6402 = vmul.f32 %v6169, 0.25
      %v6403 = vmul.f32 %v6171, 0.25
      %v6404 = vmul.f32 %v6179, 0.25
      %v6405 = vmul.f32 %v6187, 0.25
      %v6406 = vmul.f32 %v6186, 0.25
      %v6407 = vmul.f32 %v6188, 0.25
      %v6408 = vmul.f32 %v6196, 0.25
      %v6409 = vmul.f32 %v6204, 0.25
      %v6410 = vmul.f32 %v6203, 0.25
      %v6411 = vmul.f32 %v6205, 0.25
      %v6412 = vmul.f32 %v6213, 0.25
      %v6413 = vmul.f32 %v6221, 0.25
      %v6414 = vmul.f32 %v6220, 0.25
      %v6415 = vmul.f32 %v6222, 0.25
      %v6416 = vmul.f32 %v6230, 0.25
      %v6417 = vmul.f32 %v6238, 0.25
      %v6418 = vmul.f32 %v6237, 0.25
      %v6419 = vmul.f32 %v6239, 0.25
      %v6420 = vmul.f32 %v6247, 0.25
      %v6421 = vmul.f32 %v6255, 0.25
      %v6422 = vmul.f32 %v6254, 0.25
      %v6423 = vmul.f32 %v6256, 0.25
      %v6424 = vmul.f32 %v6264, 0.25
      %v6425 = vmul.f32 %v6272, 0.25
      %v6426 = vmul.f32 %v6271, 0.25
      %v6427 = vmul.f32 %v6273, 0.25
      %v6428 = vmul.f32 %v6281, 0.25
      %v6429 = vmul.f32 %v6289, 0.25
      %v6430 = vmul.f32 %v6288, 0.25
      %v6431 = vmul.f32 %v6290, 0.25
      %v6432 = vmul.f32 %v6298, 0.25
      %v6433 = vmul.f32 %v6306, 0.25
      %v6434 = vmul.f32 %v6305, 0.25
      %v6435 = vmul.f32 %v6307, 0.25
      %v6500 = vlaneseq
      %v6501 = vshrl.u32 %v6500, 7
      %v6502 = vsub.s32 0, %v6501
      %v6503 = vrot.slane %v6372, %v6502
      %v6504 = vlaneseq
      %v6505 = vshrl.u32 %v6504, 7
      %v6506 = vsub.s32 0, %v6505
      %v6507 = vrot.slane %v6373, %v6506
      %v6508 = vlaneseq
      %v6509 = vshrl.u32 %v6508, 7
      %v6510 = vsub.s32 0, %v6509
      %v6511 = vrot.slane %v6374, %v6510
      %v6512 = vlaneseq
      %v6513 = vshrl.u32 %v6512, 7
      %v6514 = vsub.s32 0, %v6513
      %v6515 = vrot.slane %v6375, %v6514
      %v6516 = vlaneseq
      %v6517 = vshrl.u32 %v6516, 7
      %v6518 = vsub.s32 0, %v6517
      %v6519 = vrot.slane %v6376, %v6518
      %v6520 = vlaneseq
      %v6521 = vshrl.u32 %v6520, 7
      %v6522 = vsub.s32 0, %v6521
      %v6523 = vrot.slane %v6377, %v6522
      %v6524 = vlaneseq
      %v6525 = vshrl.u32 %v6524, 7
      %v6526 = vsub.s32 0, %v6525
      %v6527 = vrot.slane %v6378, %v6526
      %v6528 = vlaneseq
      %v6529 = vshrl.u32 %v6528, 7
      %v6530 = vsub.s32 0, %v6529
      %v6531 = vrot.slane %v6379, %v6530
      %v6532 = vlaneseq
      %v6533 = vshrl.u32 %v6532, 7
      %v6534 = vsub.s32 0, %v6533
      %v6535 = vrot.slane %v6380, %v6534
      %v6536 = vlaneseq
      %v6537 = vshrl.u32 %v6536, 7
      %v6538 = vsub.s32 0, %v6537
      %v6539 = vrot.slane %v6381, %v6538
      %v6540 = vlaneseq
      %v6541 = vshrl.u32 %v6540, 7
      %v6542 = vsub.s32 0, %v6541
      %v6543 = vrot.slane %v6382, %v6542
      %v6544 = vlaneseq
      %v6545 = vshrl.u32 %v6544, 7
      %v6546 = vsub.s32 0, %v6545
      %v6547 = vrot.slane %v6383, %v6546
      %v6548 = vlaneseq
      %v6549 = vshrl.u32 %v6548, 7
      %v6550 = vsub.s32 0, %v6549
      %v6551 = vrot.slane %v6384, %v6550
      %v6552 = vlaneseq
      %v6553 = vshrl.u32 %v6552, 7
      %v6554 = vsub.s32 0, %v6553
      %v6555 = vrot.slane %v6385, %v6554
      %v6556 = vlaneseq
      %v6557 = vshrl.u32 %v6556, 7
      %v6558 = vsub.s32 0, %v6557
      %v6559 = vrot.slane %v6386, %v6558
      %v6560 = vlaneseq
      %v6561 = vshrl.u32 %v6560, 7
      %v6562 = vsub.s32 0, %v6561
      %v6563 = vrot.slane %v6387, %v6562
      %v6564 = vlaneseq
      %v6565 = vshrl.u32 %v6564, 7
      %v6566 = vsub.s32 0, %v6565
      %v6567 = vrot.slane %v6388, %v6566
      %v6568 = vlaneseq
      %v6569 = vshrl.u32 %v6568, 7
      %v6570 = vsub.s32 0, %v6569
      %v6571 = vrot.slane %v6389, %v6570
      %v6572 = vlaneseq
      %v6573 = vshrl.u32 %v6572, 7
      %v6574 = vsub.s32 0, %v6573
      %v6575 = vrot.slane %v6390, %v6574
      %v6576 = vlaneseq
      %v6577 = vshrl.u32 %v6576, 7
      %v6578 = vsub.s32 0, %v6577
      %v6579 = vrot.slane %v6391, %v6578
      %v6580 = vlaneseq
      %v6581 = vshrl.u32 %v6580, 7
      %v6582 = vsub.s32 0, %v6581
      %v6583 = vrot.slane %v6392, %v6582
      %v6584 = vlaneseq
      %v6585 = vshrl.u32 %v6584, 7
      %v6586 = vsub.s32 0, %v6585
      %v6587 = vrot.slane %v6393, %v6586
      %v6588 = vlaneseq
      %v6589 = vshrl.u32 %v6588, 7
      %v6590 = vsub.s32 0, %v6589
      %v6591 = vrot.slane %v6394, %v6590
      %v6592 = vlaneseq
      %v6593 = vshrl.u32 %v6592, 7
      %v6594 = vsub.s32 0, %v6593
      %v6595 = vrot.slane %v6395, %v6594
      %v6596 = vlaneseq
      %v6597 = vshrl.u32 %v6596, 7
      %v6598 = vsub.s32 0, %v6597
      %v6599 = vrot.slane %v6396, %v6598
      %v6600 = vlaneseq
      %v6601 = vshrl.u32 %v6600, 7
      %v6602 = vsub.s32 0, %v6601
      %v6603 = vrot.slane %v6397, %v6602
      %v6604 = vlaneseq
      %v6605 = vshrl.u32 %v6604, 7
      %v6606 = vsub.s32 0, %v6605
      %v6607 = vrot.slane %v6398, %v6606
      %v6608 = vlaneseq
      %v6609 = vshrl.u32 %v6608, 7
      %v6610 = vsub.s32 0, %v6609
      %v6611 = vrot.slane %v6399, %v6610
      %v6612 = vlaneseq
      %v6613 = vshrl.u32 %v6612, 7
      %v6614 = vsub.s32 0, %v6613
      %v6615 = vrot.slane %v6400, %v6614
      %v6616 = vlaneseq
      %v6617 = vshrl.u32 %v6616, 7
      %v6618 = vsub.s32 0, %v6617
      %v6619 = vrot.slane %v6401, %v6618
      %v6620 = vlaneseq
      %v6621 = vshrl.u32 %v6620, 7
      %v6622 = vsub.s32 0, %v6621
      %v6623 = vrot.slane %v6402, %v6622
      %v6624 = vlaneseq
      %v6625 = vshrl.u32 %v6624, 7
      %v6626 = vsub.s32 0, %v6625
      %v6627 = vrot.slane %v6403, %v6626
      %v6628 = vlaneseq
      %v6629 = vshrl.u32 %v6628, 7
      %v6630 = vsub.s32 0, %v6629
      %v6631 = vrot.slane %v6404, %v6630
      %v6632 = vlaneseq
      %v6633 = vshrl.u32 %v6632, 7
      %v6634 = vsub.s32 0, %v6633
      %v6635 = vrot.slane %v6405, %v6634
      %v6636 = vlaneseq
      %v6637 = vshrl.u32 %v6636, 7
      %v6638 = vsub.s32 0, %v6637
      %v6639 = vrot.slane %v6406, %v6638
      %v6640 = vlaneseq
      %v6641 = vshrl.u32 %v6640, 7
      %v6642 = vsub.s32 0, %v6641
      %v6643 = vrot.slane %v6407, %v6642
      %v6644 = vlaneseq
      %v6645 = vshrl.u32 %v6644, 7
      %v6646 = vsub.s32 0, %v6645
      %v6647 = vrot.slane %v6408, %v6646
      %v6648 = vlaneseq
      %v6649 = vshrl.u32 %v6648, 7
      %v6650 = vsub.s32 0, %v6649
      %v6651 = vrot.slane %v6409, %v6650
      %v6652 = vlaneseq
      %v6653 = vshrl.u32 %v6652, 7
      %v6654 = vsub.s32 0, %v6653
      %v6655 = vrot.slane %v6410, %v6654
      %v6656 = vlaneseq
      %v6657 = vshrl.u32 %v6656, 7
      %v6658 = vsub.s32 0, %v6657
      %v6659 = vrot.slane %v6411, %v6658
      %v6660 = vlaneseq
      %v6661 = vshrl.u32 %v6660, 7
      %v6662 = vsub.s32 0, %v6661
      %v6663 = vrot.slane %v6412, %v6662
      %v6664 = vlaneseq
      %v6665 = vshrl.u32 %v6664, 7
      %v6666 = vsub.s32 0, %v6665
      %v6667 = vrot.slane %v6413, %v6666
      %v6668 = vlaneseq
      %v6669 = vshrl.u32 %v6668, 7
      %v6670 = vsub.s32 0, %v6669
      %v6671 = vrot.slane %v6414, %v6670
      %v6672 = vlaneseq
      %v6673 = vshrl.u32 %v6672, 7
      %v6674 = vsub.s32 0, %v6673
      %v6675 = vrot.slane %v6415, %v6674
      %v6676 = vlaneseq
      %v6677 = vshrl.u32 %v6676, 7
      %v6678 = vsub.s32 0, %v6677
      %v6679 = vrot.slane %v6416, %v6678
      %v6680 = vlaneseq
      %v6681 = vshrl.u32 %v6680, 7
      %v6682 = vsub.s32 0, %v6681
      %v6683 = vrot.slane %v6417, %v6682
      %v6684 = vlaneseq
      %v6685 = vshrl.u32 %v6684, 7
      %v6686 = vsub.s32 0, %v6685
      %v6687 = vrot.slane %v6418, %v6686
      %v6688 = vlaneseq
      %v6689 = vshrl.u32 %v6688, 7
      %v6690 = vsub.s32 0, %v6689
      %v6691 = vrot.slane %v6419, %v6690
      %v6692 = vlaneseq
      %v6693 = vshrl.u32 %v6692, 7
      %v6694 = vsub.s32 0, %v6693
      %v6695 = vrot.slane %v6420, %v6694
      %v6696 = vlaneseq
      %v6697 = vshrl.u32 %v6696, 7
      %v6698 = vsub.s32 0, %v6697
      %v6699 = vrot.slane %v6421, %v6698
      %v6700 = vlaneseq
      %v6701 = vshrl.u32 %v6700, 7
      %v6702 = vsub.s32 0, %v6701
      %v6703 = vrot.slane %v6422, %v6702
      %v6704 = vlaneseq
      %v6705 = vshrl.u32 %v6704, 7
      %v6706 = vsub.s32 0, %v6705
      %v6707 = vrot.slane %v6423, %v6706
      %v6708 = vlaneseq
      %v6709 = vshrl.u32 %v6708, 7
      %v6710 = vsub.s32 0, %v6709
      %v6711 = vrot.slane %v6424, %v6710
      %v6712 = vlaneseq
      %v6713 = vshrl.u32 %v6712, 7
      %v6714 = vsub.s32 0, %v6713
      %v6715 = vrot.slane %v6425, %v6714
      %v6716 = vlaneseq
      %v6717 = vshrl.u32 %v6716, 7
      %v6718 = vsub.s32 0, %v6717
      %v6719 = vrot.slane %v6426, %v6718
      %v6720 = vlaneseq
      %v6721 = vshrl.u32 %v6720, 7
      %v6722 = vsub.s32 0, %v6721
      %v6723 = vrot.slane %v6427, %v6722
      %v6724 = vlaneseq
      %v6725 = vshrl.u32 %v6724, 7
      %v6726 = vsub.s32 0, %v6725
      %v6727 = vrot.slane %v6428, %v6726
      %v6728 = vlaneseq
      %v6729 = vshrl.u32 %v6728, 7
      %v6730 = vsub.s32 0, %v6729
      %v6731 = vrot.slane %v6429, %v6730
      %v6732 = vlaneseq
      %v6733 = vshrl.u32 %v6732, 7
      %v6734 = vsub.s32 0, %v6733
      %v6735 = vrot.slane %v6430, %v6734
      %v6736 = vlaneseq
      %v6737 = vshrl.u32 %v6736, 7
      %v6738 = vsub.s32 0, %v6737
      %v6739 = vrot.slane %v6431, %v6738
      %v6740 = vlaneseq
      %v6741 = vshrl.u32 %v6740, 7
      %v6742 = vsub.s32 0, %v6741
      %v6743 = vrot.slane %v6432, %v6742
      %v6744 = vlaneseq
      %v6745 = vshrl.u32 %v6744, 7
      %v6746 = vsub.s32 0, %v6745
      %v6747 = vrot.slane %v6433, %v6746
      %v6748 = vlaneseq
      %v6749 = vshrl.u32 %v6748, 7
      %v6750 = vsub.s32 0, %v6749
      %v6751 = vrot.slane %v6434, %v6750
      %v6752 = vlaneseq
      %v6753 = vshrl.u32 %v6752, 7
      %v6754 = vsub.s32 0, %v6753
      %v6755 = vrot.slane %v6435, %v6754
      %vm6756 = vcmask 1041409
      %v6757 = vsel %vm6756, %v6507, %v6503
      %vm6758 = vcmask 1042434
      %v6759 = vsel %vm6758, %v6511, %v6757
      %vm6760 = vcmask 1043459
      %v6761 = vsel %vm6760, %v6515, %v6759
      %vm6762 = vcmask 1044484
      %v6763 = vsel %vm6762, %v6519, %v6761
      %vm6764 = vcmask 1045509
      %v6765 = vsel %vm6764, %v6523, %v6763
      %vm6766 = vcmask 1046534
      %v6767 = vsel %vm6766, %v6527, %v6765
      %vm6768 = vcmask 1047559
      %v6769 = vsel %vm6768, %v6531, %v6767
      %v6770 = vsel %vm6756, %v6539, %v6535
      %v6771 = vsel %vm6758, %v6543, %v6770
      %v6772 = vsel %vm6760, %v6547, %v6771
      %v6773 = vsel %vm6762, %v6551, %v6772
      %v6774 = vsel %vm6764, %v6555, %v6773
      %v6775 = vsel %vm6766, %v6559, %v6774
      %v6776 = vsel %vm6768, %v6563, %v6775
      %v6777 = vsel %vm6756, %v6571, %v6567
      %v6778 = vsel %vm6758, %v6575, %v6777
      %v6779 = vsel %vm6760, %v6579, %v6778
      %v6780 = vsel %vm6762, %v6583, %v6779
      %v6781 = vsel %vm6764, %v6587, %v6780
      %v6782 = vsel %vm6766, %v6591, %v6781
      %v6783 = vsel %vm6768, %v6595, %v6782
      %v6784 = vsel %vm6756, %v6603, %v6599
      %v6785 = vsel %vm6758, %v6607, %v6784
      %v6786 = vsel %vm6760, %v6611, %v6785
      %v6787 = vsel %vm6762, %v6615, %v6786
      %v6788 = vsel %vm6764, %v6619, %v6787
      %v6789 = vsel %vm6766, %v6623, %v6788
      %v6790 = vsel %vm6768, %v6627, %v6789
      %v6791 = vsel %vm6756, %v6635, %v6631
      %v6792 = vsel %vm6758, %v6639, %v6791
      %v6793 = vsel %vm6760, %v6643, %v6792
      %v6794 = vsel %vm6762, %v6647, %v6793
      %v6795 = vsel %vm6764, %v6651, %v6794
      %v6796 = vsel %vm6766, %v6655, %v6795
      %v6797 = vsel %vm6768, %v6659, %v6796
      %v6798 = vsel %vm6756, %v6667, %v6663
      %v6799 = vsel %vm6758, %v6671, %v6798
      %v6800 = vsel %vm6760, %v6675, %v6799
      %v6801 = vsel %vm6762, %v6679, %v6800
      %v6802 = vsel %vm6764, %v6683, %v6801
      %v6803 = vsel %vm6766, %v6687, %v6802
      %v6804 = vsel %vm6768, %v6691, %v6803
      %v6805 = vsel %vm6756, %v6699, %v6695
      %v6806 = vsel %vm6758, %v6703, %v6805
      %v6807 = vsel %vm6760, %v6707, %v6806
      %v6808 = vsel %vm6762, %v6711, %v6807
      %v6809 = vsel %vm6764, %v6715, %v6808
      %v6810 = vsel %vm6766, %v6719, %v6809
      %v6811 = vsel %vm6768, %v6723, %v6810
      %v6812 = vsel %vm6756, %v6731, %v6727
      %v6813 = vsel %vm6758, %v6735, %v6812
      %v6814 = vsel %vm6760, %v6739, %v6813
      %v6815 = vsel %vm6762, %v6743, %v6814
      %v6816 = vsel %vm6764, %v6747, %v6815
      %v6817 = vsel %vm6766, %v6751, %v6816
      %v6818 = vsel %vm6768, %v6755, %v6817
      %6827 = vst.msk [vmem:[%s332] sm:$0xff] %vm1017, %v6769
      %6828 = vst.msk [vmem:[%s332 + $0x8] sm:$0xff] %vm1017, %v6776
      %6829 = vst.msk [vmem:[%s332 + $0x10] sm:$0xff] %vm1017, %v6783
      %6830 = vst.msk [vmem:[%s332 + $0x18] sm:$0xff] %vm1017, %v6790
      %6831 = vst.msk [vmem:[%s332 + $0x20] sm:$0xff] %vm1017, %v6797
      %6832 = vst.msk [vmem:[%s332 + $0x28] sm:$0xff] %vm1017, %v6804
      %6833 = vst.msk [vmem:[%s332 + $0x30] sm:$0xff] %vm1017, %v6811
      %6834 = vst.msk [vmem:[%s332 + $0x38] sm:$0xff] %vm1017, %v6818
      %p6835 = scmp.lt.s32.totalorder %s20, 1
      %s6836 = scalar_select %p6835, %s20, 1
      %s6837 = smul.addr %s6836, 8
      %s6838 = smul.addr %s6837, 8
      %s6839 = scalar_lea.vmem %s9, %s6838
      // Predicated region
      $region57: #{tpu_custom_call.1} parent=55 // pred_check
        %p6840 = pneg %p232
      $region58: #{tpu_custom_call.1} parent=55 // pred_check_branch
        %6842 = sbr.rel (%p6840) target = $region60
      $region59: #{tpu_custom_call.1} parent=55 // pred_region
        _
      $region60: #{tpu_custom_call.1} parent=55 // pred_fallthru
        _
    $region56: #{tpu_custom_call.1} parent=5 // pred_fallthru
      _
    %p6843 = scmp.le.s32.totalorder 2, %s15
    // Predicated region
    $region61: #{tpu_custom_call.1} parent=5 // pred_check
      %p6844 = pneg %p6843
    $region62: #{tpu_custom_call.1} parent=5 // pred_check_branch
      %6846 = sbr.rel (%p6844) target = $region64
    $region63: #{tpu_custom_call.1} parent=5 // pred_region
      %s6847 = ssub.s32 %s15, 2
      // Predicated region
      $region65: #{tpu_custom_call.1} parent=63 // pred_check
        %p6848 = pneg %p238
      $region66: #{tpu_custom_call.1} parent=63 // pred_check_branch
        %6850 = sbr.rel (%p6848) target = $region68
      $region67: #{tpu_custom_call.1} parent=63 // pred_region
        %p6851 = scmp.lt.s32.totalorder %s21, 1
        %s6852 = scalar_select %p6851, %s21, 1
        %s6853 = smul.addr %s6852, 8
        %s6854 = smul.addr %s6853, 8
        %s6855 = scalar_lea.vmem %s9, %s6854
      $region68: #{tpu_custom_call.1} parent=63 // pred_fallthru
        _
    $region64: #{tpu_custom_call.1} parent=5 // pred_fallthru
      _
  $region6: #{tpu_custom_call.1} parent=0 // loop_footer
    %s19 = sadd.s32 1, %s15
  $region7: #{tpu_custom_call.1} parent=0 // loop_footer_branch
    %14 = sbr.rel target = $region3
  $region8: #{tpu_custom_call.1} parent=0 // loop_exit
    _

</llo_original>
